<compile_context>
chip_gen: v7x
topology: tpu7x:2x2x1
jax: 0.10.0
libtpu: 0.0.40
codegen_flags: <defaults>
</compile_context>

<pallas_src>
import functools

import jax
import jax.numpy as jnp
from jax.experimental import pallas as pl
from jax.experimental.pallas import tpu as pltpu

LEAKY_SLOPE = 0.1  # nn.LeakyReLU(0.1) used by classic CSP blocks


# --------------------------------------------------------------------------
# in-kernel helpers
# --------------------------------------------------------------------------
def _leaky(v):
    return jnp.where(v >= 0.0, v, LEAKY_SLOPE * v)


def _mm(w, x):
    """bf16 operands -> MXU, f32 accumulation. Elementwise math stays f32."""
    return jnp.dot(w.astype(jnp.bfloat16), x.astype(jnp.bfloat16),
                   preferred_element_type=jnp.float32)


def _shift_time(x, offset):
    """y[:, t] = x[:, t + offset], zero outside [0, T).  offset is static."""
    if offset == 0:
        return x
    T = x.shape[-1]
    y = pltpu.roll(x, shift=(-offset) % T, axis=1)
    lane = jax.lax.broadcasted_iota(jnp.int32, x.shape, dimension=1)
    valid = lane < (T - offset) if offset > 0 else lane >= (-offset)
    return jnp.where(valid, y, 0.0)


# --------------------------------------------------------------------------
# Pallas kernels
# --------------------------------------------------------------------------
def _csp_branch_kernel(x_ref, w1_ref, b1_ref, w2_ref,
                       wa_ref, ba_ref, wb_ref, bb_ref,
                       w3_ref, bn_s_ref, bn_b_ref, w4_ref, b4_ref,
                       o_ref, *, n_bottlenecks):
    """Entire BottleneckCSP branch for one batch element (C_in, T)->(C_out, T)."""
    x = x_ref[0]                                            # (C_in, T)

    # cv1 (1x1 conv + act)  /  cv2 (1x1 conv, no bias, no act)
    y = _leaky(_mm(w1_ref[...], x) + b1_ref[...])           # (C_, T)
    y2 = _mm(w2_ref[...], x)                                # (C_, T)

    # n Bottlenecks:  y = y + act(conv3(act(1x1(y))))
    for j in range(n_bottlenecks):
        h = _leaky(_mm(wa_ref[j], y) + ba_ref[j])
        hk = jnp.concatenate(
            [_shift_time(h, -1), h, _shift_time(h, 1)], axis=0)   # (3C_, T)
        h = _leaky(_mm(wb_ref[j], hk) + bb_ref[j])                # fused 3-tap conv
        y = y + h

    y1 = _mm(w3_ref[...], y)                                # cv3 (no bias)
    cat = jnp.concatenate([y1, y2], axis=0)                 # (2C_, T)
    cat = _leaky(cat * bn_s_ref[...] + bn_b_ref[...])       # BN folded + act
    out = _leaky(_mm(w4_ref[...], cat) + b4_ref[...])       # cv4
    o_ref[0] = out.astype(o_ref.dtype)


def _layer_fusion_kernel(xi_ref, xa_ref, w_ref, b_ref, oi_ref, oa_ref,
                         *, k_trans, pad, ch_inter):
    """Channel concat + single fused k_trans conv producing both heads."""
    cat = jnp.concatenate([xi_ref[0], xa_ref[0]], axis=0)   # (c_cat, T)
    cols = jnp.concatenate(
        [_shift_time(cat, k - pad) for k in range(k_trans)], axis=0)
    y = _mm(w_ref[...], cols) + b_ref[...]                  # (ci+ca, T)
    oi_ref[0] = y[:ch_inter].astype(oi_ref.dtype)
    oa_ref[0] = y[ch_inter:].astype(oa_ref.dtype)


# --------------------------------------------------------------------------
# pallas_call wrappers
# --------------------------------------------------------------------------
_PARALLEL_B = pltpu.CompilerParams(dimension_semantics=("parallel",))


def _full_spec(arr):
    nd = arr.ndim
    return pl.BlockSpec(arr.shape, lambda b, _nd=nd: (0,) * _nd)  # resident


def csp_bottleneck_forward(params, x_bct):
    B, C_in, T = x_bct.shape
    C_out = params["w4"].shape[0]
    names = ("w1", "b1", "w2", "wa", "ba", "wb", "bb",
             "w3", "bn_scale", "bn_shift", "w4", "b4")
    weights = [params[k] for k in names]
    return pl.pallas_call(
        functools.partial(_csp_branch_kernel, n_bottlenecks=params["n"]),
        out_shape=jax.ShapeDtypeStruct((B, C_out, T), jnp.float32),
        grid=(B,),
        in_specs=[pl.BlockSpec((1, C_in, T), lambda b: (b, 0, 0))]
                 + [_full_spec(w) for w in weights],
        out_specs=pl.BlockSpec((1, C_out, T), lambda b: (b, 0, 0)),
        compiler_params=_PARALLEL_B,
    )(x_bct, *weights)


def layer_fusion_forward(params, x_inter, x_intra):
    B, Ci, T = x_inter.shape
    Ca = x_intra.shape[1]
    w, b = params["w"], params["b"]
    return pl.pallas_call(
        functools.partial(_layer_fusion_kernel, k_trans=params["k_trans"],
                          pad=params["pad"], ch_inter=Ci),
        out_shape=(jax.ShapeDtypeStruct((B, Ci, T), jnp.float32),
                   jax.ShapeDtypeStruct((B, Ca, T), jnp.float32)),
        grid=(B,),
        in_specs=[pl.BlockSpec((1, Ci, T), lambda g: (g, 0, 0)),
                  pl.BlockSpec((1, Ca, T), lambda g: (g, 0, 0)),
                  _full_spec(w), _full_spec(b)],
        out_specs=(pl.BlockSpec((1, Ci, T), lambda g: (g, 0, 0)),
                   pl.BlockSpec((1, Ca, T), lambda g: (g, 0, 0))),
        compiler_params=_PARALLEL_B,
    )(x_inter, x_intra, w, b)


# --------------------------------------------------------------------------
# parameter init (deterministic, in-script)
# --------------------------------------------------------------------------
def init_csp_bottleneck(key, c1, c2, n, e=0.5):
    # hidden width rounded up to the 8-sublane tile for clean TPU layout
    c_ = max(8, ((int(c2 * e) + 7) // 8) * 8)
    k = jax.random.split(key, 8)
    rnd = lambda kk, shape: 0.1 * jax.random.normal(kk, shape, jnp.float32)
    return {
        "n": n,
        "w1": rnd(k[0], (c_, c1)),
        "b1": jnp.zeros((c_, 1), jnp.float32),
        "w2": rnd(k[1], (c_, c1)),
        "wa": rnd(k[2], (n, c_, c_)),
        "ba": jnp.zeros((n, c_, 1), jnp.float32),
        "wb": rnd(k[3], (n, c_, 3 * c_)),   # 3 taps concatenated along input axis
        "bb": jnp.zeros((n, c_, 1), jnp.float32),
        "w3": rnd(k[4], (c_, c_)),
        "bn_scale": 1.0 + 0.1 * jax.random.normal(k[5], (2 * c_, 1), jnp.float32),
        "bn_shift": 0.1 * jax.random.normal(k[6], (2 * c_, 1), jnp.float32),
        "w4": rnd(k[7], (c2, 2 * c_)),
        "b4": jnp.zeros((c2, 1), jnp.float32),
    }


def init_layer_fusion(key, ch_inter, ch_intra, k_trans, pad):
    c_cat = ch_inter + ch_intra
    return {
        # fused [W_inter ; W_intra] along output rows; taps concatenated along
        # the input axis in the same order the kernel builds them.
        "w": 0.1 * jax.random.normal(key, (c_cat, k_trans * c_cat), jnp.float32),
        "b": jnp.zeros((c_cat, 1), jnp.float32),
        "k_trans": k_trans,
        "pad": pad,
    }


# --------------------------------------------------------------------------
# module classes
# --------------------------------------------------------------------------
class Cfg:
    """Minimal stand-in for the yacs cfg used by the PyTorch module."""
    class ENCODER:
        C_INTER = 16
        C_INTRA = 8

    class SEPARATION:
        X = [2, 2, 2]
        K_TRANS = 3
        N = 3

    class PARAMETERS:
        PADDING = 1  # (K_TRANS - 1) // 2 -> 'same' length


class CSPSeparationBlockPallas:
    def __init__(self, cfg, i, key):
        ch_inter, ch_intra = cfg.ENCODER.C_INTER, cfg.ENCODER.C_INTRA
        x, k_trans = cfg.SEPARATION.X[i], cfg.SEPARATION.K_TRANS
        k1, k2, k3 = jax.random.split(key, 3)
        self.inter_block = init_csp_bottleneck(k1, ch_inter, ch_inter, x)
        self.intra_block = init_csp_bottleneck(k2, ch_intra, ch_intra, x)
        self.fuse = init_layer_fusion(k3, ch_inter, ch_intra, k_trans,
                                      cfg.PARAMETERS.PADDING)

    def __call__(self, x):
        x_inter, x_intra = x
        x_inter = csp_bottleneck_forward(self.inter_block, x_inter)
        x_intra = csp_bottleneck_forward(self.intra_block, x_intra)
        return layer_fusion_forward(self.fuse, x_inter, x_intra)


class CSPSeparationPartPallas:
    def __init__(self, cfg, key):
        n = cfg.SEPARATION.N
        keys = jax.random.split(key, n)
        self.blocks = [CSPSeparationBlockPallas(cfg, i, keys[i])
                       for i in range(n)]

    def __call__(self, x):
        for blk in self.blocks:
            x = blk(x)
        return x


# --------------------------------------------------------------------------
if __name__ == "__main__":
    cfg = Cfg()
    B, T = 2, 128
    key = jax.random.PRNGKey(0)
    kp, kx1, kx2 = jax.random.split(key, 3)

    part = CSPSeparationPartPallas(cfg, kp)

    # PyTorch Conv1d layout NCW: (B, C, T)
    x_inter = jax.random.normal(kx1, (B, cfg.ENCODER.C_INTER, T), jnp.float32)
    x_intra = jax.random.normal(kx2, (B, cfg.ENCODER.C_INTRA, T), jnp.float32)

    @jax.jit
    def forward(xi, xa):
        yi, ya = part([xi, xa])
        return yi, ya

    y_inter, y_intra = jax.block_until_ready(forward(x_inter, x_intra))

    assert y_inter.shape == (B, cfg.ENCODER.C_INTER, T)
    assert y_intra.shape == (B, cfg.ENCODER.C_INTRA, T)
    assert bool(jnp.isfinite(y_inter).all())
    assert bool(jnp.isfinite(y_intra).all())
    print("KERNEL_OK")
</pallas_src>

<mosaic_0001>
module attributes {stable_mosaic.version = 11 : i64} {
  func.func @_csp_branch_kernel(%arg0: i32, %arg1: memref<1x8x128xf32, #tpu.memory_space<vmem>>, %arg2: memref<8x8xf32, #tpu.memory_space<vmem>>, %arg3: memref<8x1xf32, #tpu.memory_space<vmem>>, %arg4: memref<8x8xf32, #tpu.memory_space<vmem>>, %arg5: memref<2x8x8xf32, #tpu.memory_space<vmem>>, %arg6: memref<2x8x1xf32, #tpu.memory_space<vmem>>, %arg7: memref<2x8x24xf32, #tpu.memory_space<vmem>>, %arg8: memref<2x8x1xf32, #tpu.memory_space<vmem>>, %arg9: memref<8x8xf32, #tpu.memory_space<vmem>>, %arg10: memref<16x1xf32, #tpu.memory_space<vmem>>, %arg11: memref<16x1xf32, #tpu.memory_space<vmem>>, %arg12: memref<8x16xf32, #tpu.memory_space<vmem>>, %arg13: memref<8x1xf32, #tpu.memory_space<vmem>>, %arg14: memref<1x8x128xf32, #tpu.memory_space<vmem>>) attributes {dimension_semantics = [#tpu.dimension_semantics<parallel>], iteration_bounds = array<i64: 2>, scalar_prefetch = 0 : i64, scratch_operands = 0 : i64, tpu.core_type = #tpu.core_type<tc>, window_params = [{transform_indices = @transform_0, window_bounds = array<i64: 1, 8, 128>}, {pipeline_mode = #tpu.pipeline_mode<synchronous>, transform_indices = @transform_1, window_bounds = array<i64: 8, 8>}, {pipeline_mode = #tpu.pipeline_mode<synchronous>, transform_indices = @transform_2, window_bounds = array<i64: 8, 1>}, {pipeline_mode = #tpu.pipeline_mode<synchronous>, transform_indices = @transform_3, window_bounds = array<i64: 8, 8>}, {pipeline_mode = #tpu.pipeline_mode<synchronous>, transform_indices = @transform_4, window_bounds = array<i64: 2, 8, 8>}, {pipeline_mode = #tpu.pipeline_mode<synchronous>, transform_indices = @transform_5, window_bounds = array<i64: 2, 8, 1>}, {pipeline_mode = #tpu.pipeline_mode<synchronous>, transform_indices = @transform_6, window_bounds = array<i64: 2, 8, 24>}, {pipeline_mode = #tpu.pipeline_mode<synchronous>, transform_indices = @transform_7, window_bounds = array<i64: 2, 8, 1>}, {pipeline_mode = #tpu.pipeline_mode<synchronous>, transform_indices = @transform_8, window_bounds = array<i64: 8, 8>}, {pipeline_mode = #tpu.pipeline_mode<synchronous>, transform_indices = @transform_9, window_bounds = array<i64: 16, 1>}, {pipeline_mode = #tpu.pipeline_mode<synchronous>, transform_indices = @transform_10, window_bounds = array<i64: 16, 1>}, {pipeline_mode = #tpu.pipeline_mode<synchronous>, transform_indices = @transform_11, window_bounds = array<i64: 8, 16>}, {pipeline_mode = #tpu.pipeline_mode<synchronous>, transform_indices = @transform_12, window_bounds = array<i64: 8, 1>}, {transform_indices = @transform_13, window_bounds = array<i64: 1, 8, 128>}]} {
    %c0 = arith.constant 0 : index
    %c0_0 = arith.constant 0 : index
    %c0_1 = arith.constant 0 : index
    %0 = vector.load %arg1[%c0, %c0_0, %c0_1] : memref<1x8x128xf32, #tpu.memory_space<vmem>>, vector<1x8x128xf32>
    %1 = vector.shape_cast %0 : vector<1x8x128xf32> to vector<8x128xf32>
    %c0_2 = arith.constant 0 : index
    %c0_3 = arith.constant 0 : index
    %2 = vector.load %arg2[%c0_2, %c0_3] : memref<8x8xf32, #tpu.memory_space<vmem>>, vector<8x8xf32>
    %3 = arith.truncf %2 : vector<8x8xf32> to vector<8x8xbf16>
    %4 = arith.truncf %1 : vector<8x128xf32> to vector<8x128xbf16>
    %cst = arith.constant dense<0.000000e+00> : vector<8x128xf32>
    %5 = tpu.matmul %3, %4, %cst {dimension_numbers = #tpu.dot_dimension_numbers<[1], [0], [0], [1], [0, 0, 1, 1], [], []>} : vector<8x8xbf16>, vector<8x128xbf16>, vector<8x128xf32> -> vector<8x128xf32>
    %c0_4 = arith.constant 0 : index
    %c0_5 = arith.constant 0 : index
    %6 = vector.load %arg3[%c0_4, %c0_5] : memref<8x1xf32, #tpu.memory_space<vmem>>, vector<8x1xf32>
    %7 = vector.broadcast %6 : vector<8x1xf32> to vector<8x128xf32>
    %8 = arith.addf %5, %7 : vector<8x128xf32>
    %cst_6 = arith.constant 0.000000e+00 : f32
    %9 = vector.broadcast %cst_6 : f32 to vector<8x128xf32>
    %10 = arith.cmpf oge, %8, %9 : vector<8x128xf32>
    %cst_7 = arith.constant 1.000000e-01 : f32
    %11 = vector.broadcast %cst_7 : f32 to vector<8x128xf32>
    %12 = arith.mulf %11, %8 : vector<8x128xf32>
    %13 = arith.select %10, %8, %12 : vector<8x128xi1>, vector<8x128xf32>
    %c0_8 = arith.constant 0 : index
    %c0_9 = arith.constant 0 : index
    %14 = vector.load %arg4[%c0_8, %c0_9] : memref<8x8xf32, #tpu.memory_space<vmem>>, vector<8x8xf32>
    %15 = arith.truncf %14 : vector<8x8xf32> to vector<8x8xbf16>
    %16 = arith.truncf %1 : vector<8x128xf32> to vector<8x128xbf16>
    %cst_10 = arith.constant dense<0.000000e+00> : vector<8x128xf32>
    %17 = tpu.matmul %15, %16, %cst_10 {dimension_numbers = #tpu.dot_dimension_numbers<[1], [0], [0], [1], [0, 0, 1, 1], [], []>} : vector<8x8xbf16>, vector<8x128xbf16>, vector<8x128xf32> -> vector<8x128xf32>
    %c0_11 = arith.constant 0 : index
    %c0_12 = arith.constant 0 : index
    %c0_13 = arith.constant 0 : index
    %18 = vector.load %arg5[%c0_11, %c0_12, %c0_13] : memref<2x8x8xf32, #tpu.memory_space<vmem>>, vector<1x8x8xf32>
    %19 = vector.shape_cast %18 : vector<1x8x8xf32> to vector<8x8xf32>
    %20 = arith.truncf %19 : vector<8x8xf32> to vector<8x8xbf16>
    %21 = arith.truncf %13 : vector<8x128xf32> to vector<8x128xbf16>
    %cst_14 = arith.constant dense<0.000000e+00> : vector<8x128xf32>
    %22 = tpu.matmul %20, %21, %cst_14 {dimension_numbers = #tpu.dot_dimension_numbers<[1], [0], [0], [1], [0, 0, 1, 1], [], []>} : vector<8x8xbf16>, vector<8x128xbf16>, vector<8x128xf32> -> vector<8x128xf32>
    %c0_15 = arith.constant 0 : index
    %c0_16 = arith.constant 0 : index
    %c0_17 = arith.constant 0 : index
    %23 = vector.load %arg6[%c0_15, %c0_16, %c0_17] : memref<2x8x1xf32, #tpu.memory_space<vmem>>, vector<1x8x1xf32>
    %24 = vector.shape_cast %23 : vector<1x8x1xf32> to vector<8x1xf32>
    %25 = vector.broadcast %24 : vector<8x1xf32> to vector<8x128xf32>
    %26 = arith.addf %22, %25 : vector<8x128xf32>
    %cst_18 = arith.constant 0.000000e+00 : f32
    %27 = vector.broadcast %cst_18 : f32 to vector<8x128xf32>
    %28 = arith.cmpf oge, %26, %27 : vector<8x128xf32>
    %cst_19 = arith.constant 1.000000e-01 : f32
    %29 = vector.broadcast %cst_19 : f32 to vector<8x128xf32>
    %30 = arith.mulf %29, %26 : vector<8x128xf32>
    %31 = arith.select %28, %26, %30 : vector<8x128xi1>, vector<8x128xf32>
    %c1_i32 = arith.constant 1 : i32
    %32 = tpu.dynamic_rotate %31 by %c1_i32 dim 1 : vector<8x128xf32>, i32 -> vector<8x128xf32>
    %33 = tpu.iota {dimensions = array<i32: 1>} : vector<8x128xi32>
    %c1_i32_20 = arith.constant 1 : i32
    %34 = vector.broadcast %c1_i32_20 : i32 to vector<8x128xi32>
    %35 = arith.cmpi sge, %33, %34 : vector<8x128xi32>
    %cst_21 = arith.constant 0.000000e+00 : f32
    %36 = vector.broadcast %cst_21 : f32 to vector<8x128xf32>
    %37 = arith.select %35, %32, %36 : vector<8x128xi1>, vector<8x128xf32>
    %c127_i32 = arith.constant 127 : i32
    %38 = tpu.dynamic_rotate %31 by %c127_i32 dim 1 : vector<8x128xf32>, i32 -> vector<8x128xf32>
    %39 = tpu.iota {dimensions = array<i32: 1>} : vector<8x128xi32>
    %c127_i32_22 = arith.constant 127 : i32
    %40 = vector.broadcast %c127_i32_22 : i32 to vector<8x128xi32>
    %41 = arith.cmpi slt, %39, %40 : vector<8x128xi32>
    %cst_23 = arith.constant 0.000000e+00 : f32
    %42 = vector.broadcast %cst_23 : f32 to vector<8x128xf32>
    %43 = arith.select %41, %38, %42 : vector<8x128xi1>, vector<8x128xf32>
    %44 = tpu.concatenate %37, %31, %43 in 0 : vector<8x128xf32>, vector<8x128xf32>, vector<8x128xf32> -> vector<24x128xf32>
    %c0_24 = arith.constant 0 : index
    %c0_25 = arith.constant 0 : index
    %c0_26 = arith.constant 0 : index
    %45 = vector.load %arg7[%c0_24, %c0_25, %c0_26] : memref<2x8x24xf32, #tpu.memory_space<vmem>>, vector<1x8x24xf32>
    %46 = vector.shape_cast %45 : vector<1x8x24xf32> to vector<8x24xf32>
    %47 = arith.truncf %46 : vector<8x24xf32> to vector<8x24xbf16>
    %48 = arith.truncf %44 : vector<24x128xf32> to vector<24x128xbf16>
    %cst_27 = arith.constant dense<0.000000e+00> : vector<8x128xf32>
    %49 = tpu.matmul %47, %48, %cst_27 {dimension_numbers = #tpu.dot_dimension_numbers<[1], [0], [0], [1], [0, 0, 1, 1], [], []>} : vector<8x24xbf16>, vector<24x128xbf16>, vector<8x128xf32> -> vector<8x128xf32>
    %c0_28 = arith.constant 0 : index
    %c0_29 = arith.constant 0 : index
    %c0_30 = arith.constant 0 : index
    %50 = vector.load %arg8[%c0_28, %c0_29, %c0_30] : memref<2x8x1xf32, #tpu.memory_space<vmem>>, vector<1x8x1xf32>
    %51 = vector.shape_cast %50 : vector<1x8x1xf32> to vector<8x1xf32>
    %52 = vector.broadcast %51 : vector<8x1xf32> to vector<8x128xf32>
    %53 = arith.addf %49, %52 : vector<8x128xf32>
    %cst_31 = arith.constant 0.000000e+00 : f32
    %54 = vector.broadcast %cst_31 : f32 to vector<8x128xf32>
    %55 = arith.cmpf oge, %53, %54 : vector<8x128xf32>
    %cst_32 = arith.constant 1.000000e-01 : f32
    %56 = vector.broadcast %cst_32 : f32 to vector<8x128xf32>
    %57 = arith.mulf %56, %53 : vector<8x128xf32>
    %58 = arith.select %55, %53, %57 : vector<8x128xi1>, vector<8x128xf32>
    %59 = arith.addf %13, %58 : vector<8x128xf32>
    %c1 = arith.constant 1 : index
    %c0_33 = arith.constant 0 : index
    %c0_34 = arith.constant 0 : index
    %60 = vector.load %arg5[%c1, %c0_33, %c0_34] : memref<2x8x8xf32, #tpu.memory_space<vmem>>, vector<1x8x8xf32>
    %61 = vector.shape_cast %60 : vector<1x8x8xf32> to vector<8x8xf32>
    %62 = arith.truncf %61 : vector<8x8xf32> to vector<8x8xbf16>
    %63 = arith.truncf %59 : vector<8x128xf32> to vector<8x128xbf16>
    %cst_35 = arith.constant dense<0.000000e+00> : vector<8x128xf32>
    %64 = tpu.matmul %62, %63, %cst_35 {dimension_numbers = #tpu.dot_dimension_numbers<[1], [0], [0], [1], [0, 0, 1, 1], [], []>} : vector<8x8xbf16>, vector<8x128xbf16>, vector<8x128xf32> -> vector<8x128xf32>
    %c1_36 = arith.constant 1 : index
    %c0_37 = arith.constant 0 : index
    %c0_38 = arith.constant 0 : index
    %65 = vector.load %arg6[%c1_36, %c0_37, %c0_38] : memref<2x8x1xf32, #tpu.memory_space<vmem>>, vector<1x8x1xf32>
    %66 = vector.shape_cast %65 : vector<1x8x1xf32> to vector<8x1xf32>
    %67 = vector.broadcast %66 : vector<8x1xf32> to vector<8x128xf32>
    %68 = arith.addf %64, %67 : vector<8x128xf32>
    %cst_39 = arith.constant 0.000000e+00 : f32
    %69 = vector.broadcast %cst_39 : f32 to vector<8x128xf32>
    %70 = arith.cmpf oge, %68, %69 : vector<8x128xf32>
    %cst_40 = arith.constant 1.000000e-01 : f32
    %71 = vector.broadcast %cst_40 : f32 to vector<8x128xf32>
    %72 = arith.mulf %71, %68 : vector<8x128xf32>
    %73 = arith.select %70, %68, %72 : vector<8x128xi1>, vector<8x128xf32>
    %c1_i32_41 = arith.constant 1 : i32
    %74 = tpu.dynamic_rotate %73 by %c1_i32_41 dim 1 : vector<8x128xf32>, i32 -> vector<8x128xf32>
    %75 = tpu.iota {dimensions = array<i32: 1>} : vector<8x128xi32>
    %c1_i32_42 = arith.constant 1 : i32
    %76 = vector.broadcast %c1_i32_42 : i32 to vector<8x128xi32>
    %77 = arith.cmpi sge, %75, %76 : vector<8x128xi32>
    %cst_43 = arith.constant 0.000000e+00 : f32
    %78 = vector.broadcast %cst_43 : f32 to vector<8x128xf32>
    %79 = arith.select %77, %74, %78 : vector<8x128xi1>, vector<8x128xf32>
    %c127_i32_44 = arith.constant 127 : i32
    %80 = tpu.dynamic_rotate %73 by %c127_i32_44 dim 1 : vector<8x128xf32>, i32 -> vector<8x128xf32>
    %81 = tpu.iota {dimensions = array<i32: 1>} : vector<8x128xi32>
    %c127_i32_45 = arith.constant 127 : i32
    %82 = vector.broadcast %c127_i32_45 : i32 to vector<8x128xi32>
    %83 = arith.cmpi slt, %81, %82 : vector<8x128xi32>
    %cst_46 = arith.constant 0.000000e+00 : f32
    %84 = vector.broadcast %cst_46 : f32 to vector<8x128xf32>
    %85 = arith.select %83, %80, %84 : vector<8x128xi1>, vector<8x128xf32>
    %86 = tpu.concatenate %79, %73, %85 in 0 : vector<8x128xf32>, vector<8x128xf32>, vector<8x128xf32> -> vector<24x128xf32>
    %c1_47 = arith.constant 1 : index
    %c0_48 = arith.constant 0 : index
    %c0_49 = arith.constant 0 : index
    %87 = vector.load %arg7[%c1_47, %c0_48, %c0_49] : memref<2x8x24xf32, #tpu.memory_space<vmem>>, vector<1x8x24xf32>
    %88 = vector.shape_cast %87 : vector<1x8x24xf32> to vector<8x24xf32>
    %89 = arith.truncf %88 : vector<8x24xf32> to vector<8x24xbf16>
    %90 = arith.truncf %86 : vector<24x128xf32> to vector<24x128xbf16>
    %cst_50 = arith.constant dense<0.000000e+00> : vector<8x128xf32>
    %91 = tpu.matmul %89, %90, %cst_50 {dimension_numbers = #tpu.dot_dimension_numbers<[1], [0], [0], [1], [0, 0, 1, 1], [], []>} : vector<8x24xbf16>, vector<24x128xbf16>, vector<8x128xf32> -> vector<8x128xf32>
    %c1_51 = arith.constant 1 : index
    %c0_52 = arith.constant 0 : index
    %c0_53 = arith.constant 0 : index
    %92 = vector.load %arg8[%c1_51, %c0_52, %c0_53] : memref<2x8x1xf32, #tpu.memory_space<vmem>>, vector<1x8x1xf32>
    %93 = vector.shape_cast %92 : vector<1x8x1xf32> to vector<8x1xf32>
    %94 = vector.broadcast %93 : vector<8x1xf32> to vector<8x128xf32>
    %95 = arith.addf %91, %94 : vector<8x128xf32>
    %cst_54 = arith.constant 0.000000e+00 : f32
    %96 = vector.broadcast %cst_54 : f32 to vector<8x128xf32>
    %97 = arith.cmpf oge, %95, %96 : vector<8x128xf32>
    %cst_55 = arith.constant 1.000000e-01 : f32
    %98 = vector.broadcast %cst_55 : f32 to vector<8x128xf32>
    %99 = arith.mulf %98, %95 : vector<8x128xf32>
    %100 = arith.select %97, %95, %99 : vector<8x128xi1>, vector<8x128xf32>
    %101 = arith.addf %59, %100 : vector<8x128xf32>
    %c0_56 = arith.constant 0 : index
    %c0_57 = arith.constant 0 : index
    %102 = vector.load %arg9[%c0_56, %c0_57] : memref<8x8xf32, #tpu.memory_space<vmem>>, vector<8x8xf32>
    %103 = arith.truncf %102 : vector<8x8xf32> to vector<8x8xbf16>
    %104 = arith.truncf %101 : vector<8x128xf32> to vector<8x128xbf16>
    %cst_58 = arith.constant dense<0.000000e+00> : vector<8x128xf32>
    %105 = tpu.matmul %103, %104, %cst_58 {dimension_numbers = #tpu.dot_dimension_numbers<[1], [0], [0], [1], [0, 0, 1, 1], [], []>} : vector<8x8xbf16>, vector<8x128xbf16>, vector<8x128xf32> -> vector<8x128xf32>
    %106 = tpu.concatenate %105, %17 in 0 : vector<8x128xf32>, vector<8x128xf32> -> vector<16x128xf32>
    %c0_59 = arith.constant 0 : index
    %c0_60 = arith.constant 0 : index
    %107 = vector.load %arg10[%c0_59, %c0_60] : memref<16x1xf32, #tpu.memory_space<vmem>>, vector<16x1xf32>
    %108 = vector.broadcast %107 : vector<16x1xf32> to vector<16x128xf32>
    %109 = arith.mulf %106, %108 : vector<16x128xf32>
    %c0_61 = arith.constant 0 : index
    %c0_62 = arith.constant 0 : index
    %110 = vector.load %arg11[%c0_61, %c0_62] : memref<16x1xf32, #tpu.memory_space<vmem>>, vector<16x1xf32>
    %111 = vector.broadcast %110 : vector<16x1xf32> to vector<16x128xf32>
    %112 = arith.addf %109, %111 : vector<16x128xf32>
    %cst_63 = arith.constant 0.000000e+00 : f32
    %113 = vector.broadcast %cst_63 : f32 to vector<16x128xf32>
    %114 = arith.cmpf oge, %112, %113 : vector<16x128xf32>
    %cst_64 = arith.constant 1.000000e-01 : f32
    %115 = vector.broadcast %cst_64 : f32 to vector<16x128xf32>
    %116 = arith.mulf %115, %112 : vector<16x128xf32>
    %117 = arith.select %114, %112, %116 : vector<16x128xi1>, vector<16x128xf32>
    %c0_65 = arith.constant 0 : index
    %c0_66 = arith.constant 0 : index
    %118 = vector.load %arg12[%c0_65, %c0_66] : memref<8x16xf32, #tpu.memory_space<vmem>>, vector<8x16xf32>
    %119 = arith.truncf %118 : vector<8x16xf32> to vector<8x16xbf16>
    %120 = arith.truncf %117 : vector<16x128xf32> to vector<16x128xbf16>
    %cst_67 = arith.constant dense<0.000000e+00> : vector<8x128xf32>
    %121 = tpu.matmul %119, %120, %cst_67 {dimension_numbers = #tpu.dot_dimension_numbers<[1], [0], [0], [1], [0, 0, 1, 1], [], []>} : vector<8x16xbf16>, vector<16x128xbf16>, vector<8x128xf32> -> vector<8x128xf32>
    %c0_68 = arith.constant 0 : index
    %c0_69 = arith.constant 0 : index
    %122 = vector.load %arg13[%c0_68, %c0_69] : memref<8x1xf32, #tpu.memory_space<vmem>>, vector<8x1xf32>
    %123 = vector.broadcast %122 : vector<8x1xf32> to vector<8x128xf32>
    %124 = arith.addf %121, %123 : vector<8x128xf32>
    %cst_70 = arith.constant 0.000000e+00 : f32
    %125 = vector.broadcast %cst_70 : f32 to vector<8x128xf32>
    %126 = arith.cmpf oge, %124, %125 : vector<8x128xf32>
    %cst_71 = arith.constant 1.000000e-01 : f32
    %127 = vector.broadcast %cst_71 : f32 to vector<8x128xf32>
    %128 = arith.mulf %127, %124 : vector<8x128xf32>
    %129 = arith.select %126, %124, %128 : vector<8x128xi1>, vector<8x128xf32>
    %c0_72 = arith.constant 0 : index
    %c0_73 = arith.constant 0 : index
    %c0_74 = arith.constant 0 : index
    %130 = vector.load %arg14[%c0_72, %c0_73, %c0_74] : memref<1x8x128xf32, #tpu.memory_space<vmem>>, vector<1x8x128xf32>
    %131 = vector.shape_cast %130 : vector<1x8x128xf32> to vector<8x128xf32>
    %132 = vector.shape_cast %129 : vector<8x128xf32> to vector<1x8x128xf32>
    tpu.vector_store %arg14[%c0_72, %c0_73, %c0_74], %132 {strides = array<i32>} : memref<1x8x128xf32, #tpu.memory_space<vmem>>, vector<1x8x128xf32>,
    return
  }
  func.func @transform_0(%arg0: i32) -> (i32, i32, i32) {
    %c0_i32 = arith.constant 0 : i32
    %c0_i32_0 = arith.constant 0 : i32
    %c0_i32_1 = arith.constant 0 : i32
    return %arg0, %c0_i32, %c0_i32_0 : i32, i32, i32
  }
  func.func @transform_1(%arg0: i32) -> (i32, i32) {
    %c0_i32 = arith.constant 0 : i32
    %c0_i32_0 = arith.constant 0 : i32
    %c0_i32_1 = arith.constant 0 : i32
    return %c0_i32, %c0_i32_0 : i32, i32
  }
  func.func @transform_2(%arg0: i32) -> (i32, i32) {
    %c0_i32 = arith.constant 0 : i32
    %c0_i32_0 = arith.constant 0 : i32
    %c0_i32_1 = arith.constant 0 : i32
    return %c0_i32, %c0_i32_0 : i32, i32
  }
  func.func @transform_3(%arg0: i32) -> (i32, i32) {
    %c0_i32 = arith.constant 0 : i32
    %c0_i32_0 = arith.constant 0 : i32
    %c0_i32_1 = arith.constant 0 : i32
    return %c0_i32, %c0_i32_0 : i32, i32
  }
  func.func @transform_4(%arg0: i32) -> (i32, i32, i32) {
    %c0_i32 = arith.constant 0 : i32
    %c0_i32_0 = arith.constant 0 : i32
    %c0_i32_1 = arith.constant 0 : i32
    %c0_i32_2 = arith.constant 0 : i32
    return %c0_i32, %c0_i32_0, %c0_i32_1 : i32, i32, i32
  }
  func.func @transform_5(%arg0: i32) -> (i32, i32, i32) {
    %c0_i32 = arith.constant 0 : i32
    %c0_i32_0 = arith.constant 0 : i32
    %c0_i32_1 = arith.constant 0 : i32
    %c0_i32_2 = arith.constant 0 : i32
    return %c0_i32, %c0_i32_0, %c0_i32_1 : i32, i32, i32
  }
  func.func @transform_6(%arg0: i32) -> (i32, i32, i32) {
    %c0_i32 = arith.constant 0 : i32
    %c0_i32_0 = arith.constant 0 : i32
    %c0_i32_1 = arith.constant 0 : i32
    %c0_i32_2 = arith.constant 0 : i32
    return %c0_i32, %c0_i32_0, %c0_i32_1 : i32, i32, i32
  }
  func.func @transform_7(%arg0: i32) -> (i32, i32, i32) {
    %c0_i32 = arith.constant 0 : i32
    %c0_i32_0 = arith.constant 0 : i32
    %c0_i32_1 = arith.constant 0 : i32
    %c0_i32_2 = arith.constant 0 : i32
    return %c0_i32, %c0_i32_0, %c0_i32_1 : i32, i32, i32
  }
  func.func @transform_8(%arg0: i32) -> (i32, i32) {
    %c0_i32 = arith.constant 0 : i32
    %c0_i32_0 = arith.constant 0 : i32
    %c0_i32_1 = arith.constant 0 : i32
    return %c0_i32, %c0_i32_0 : i32, i32
  }
  func.func @transform_9(%arg0: i32) -> (i32, i32) {
    %c0_i32 = arith.constant 0 : i32
    %c0_i32_0 = arith.constant 0 : i32
    %c0_i32_1 = arith.constant 0 : i32
    return %c0_i32, %c0_i32_0 : i32, i32
  }
  func.func @transform_10(%arg0: i32) -> (i32, i32) {
    %c0_i32 = arith.constant 0 : i32
    %c0_i32_0 = arith.constant 0 : i32
    %c0_i32_1 = arith.constant 0 : i32
    return %c0_i32, %c0_i32_0 : i32, i32
  }
  func.func @transform_11(%arg0: i32) -> (i32, i32) {
    %c0_i32 = arith.constant 0 : i32
    %c0_i32_0 = arith.constant 0 : i32
    %c0_i32_1 = arith.constant 0 : i32
    return %c0_i32, %c0_i32_0 : i32, i32
  }
  func.func @transform_12(%arg0: i32) -> (i32, i32) {
    %c0_i32 = arith.constant 0 : i32
    %c0_i32_0 = arith.constant 0 : i32
    %c0_i32_1 = arith.constant 0 : i32
    return %c0_i32, %c0_i32_0 : i32, i32
  }
  func.func @transform_13(%arg0: i32) -> (i32, i32, i32) {
    %c0_i32 = arith.constant 0 : i32
    %c0_i32_0 = arith.constant 0 : i32
    %c0_i32_1 = arith.constant 0 : i32
    return %arg0, %c0_i32, %c0_i32_0 : i32, i32, i32
  }
}

module attributes {stable_mosaic.version = 11 : i64} {
  func.func @_csp_branch_kernel(%arg0: i32, %arg1: memref<1x16x128xf32, #tpu.memory_space<vmem>>, %arg2: memref<8x16xf32, #tpu.memory_space<vmem>>, %arg3: memref<8x1xf32, #tpu.memory_space<vmem>>, %arg4: memref<8x16xf32, #tpu.memory_space<vmem>>, %arg5: memref<2x8x8xf32, #tpu.memory_space<vmem>>, %arg6: memref<2x8x1xf32, #tpu.memory_space<vmem>>, %arg7: memref<2x8x24xf32, #tpu.memory_space<vmem>>, %arg8: memref<2x8x1xf32, #tpu.memory_space<vmem>>, %arg9: memref<8x8xf32, #tpu.memory_space<vmem>>, %arg10: memref<16x1xf32, #tpu.memory_space<vmem>>, %arg11: memref<16x1xf32, #tpu.memory_space<vmem>>, %arg12: memref<16x16xf32, #tpu.memory_space<vmem>>, %arg13: memref<16x1xf32, #tpu.memory_space<vmem>>, %arg14: memref<1x16x128xf32, #tpu.memory_space<vmem>>) attributes {dimension_semantics = [#tpu.dimension_semantics<parallel>], iteration_bounds = array<i64: 2>, scalar_prefetch = 0 : i64, scratch_operands = 0 : i64, tpu.core_type = #tpu.core_type<tc>, window_params = [{transform_indices = @transform_0, window_bounds = array<i64: 1, 16, 128>}, {pipeline_mode = #tpu.pipeline_mode<synchronous>, transform_indices = @transform_1, window_bounds = array<i64: 8, 16>}, {pipeline_mode = #tpu.pipeline_mode<synchronous>, transform_indices = @transform_2, window_bounds = array<i64: 8, 1>}, {pipeline_mode = #tpu.pipeline_mode<synchronous>, transform_indices = @transform_3, window_bounds = array<i64: 8, 16>}, {pipeline_mode = #tpu.pipeline_mode<synchronous>, transform_indices = @transform_4, window_bounds = array<i64: 2, 8, 8>}, {pipeline_mode = #tpu.pipeline_mode<synchronous>, transform_indices = @transform_5, window_bounds = array<i64: 2, 8, 1>}, {pipeline_mode = #tpu.pipeline_mode<synchronous>, transform_indices = @transform_6, window_bounds = array<i64: 2, 8, 24>}, {pipeline_mode = #tpu.pipeline_mode<synchronous>, transform_indices = @transform_7, window_bounds = array<i64: 2, 8, 1>}, {pipeline_mode = #tpu.pipeline_mode<synchronous>, transform_indices = @transform_8, window_bounds = array<i64: 8, 8>}, {pipeline_mode = #tpu.pipeline_mode<synchronous>, transform_indices = @transform_9, window_bounds = array<i64: 16, 1>}, {pipeline_mode = #tpu.pipeline_mode<synchronous>, transform_indices = @transform_10, window_bounds = array<i64: 16, 1>}, {pipeline_mode = #tpu.pipeline_mode<synchronous>, transform_indices = @transform_11, window_bounds = array<i64: 16, 16>}, {pipeline_mode = #tpu.pipeline_mode<synchronous>, transform_indices = @transform_12, window_bounds = array<i64: 16, 1>}, {transform_indices = @transform_13, window_bounds = array<i64: 1, 16, 128>}]} {
    %c0 = arith.constant 0 : index
    %c0_0 = arith.constant 0 : index
    %c0_1 = arith.constant 0 : index
    %0 = vector.load %arg1[%c0, %c0_0, %c0_1] : memref<1x16x128xf32, #tpu.memory_space<vmem>>, vector<1x16x128xf32>
    %1 = vector.shape_cast %0 : vector<1x16x128xf32> to vector<16x128xf32>
    %c0_2 = arith.constant 0 : index
    %c0_3 = arith.constant 0 : index
    %2 = vector.load %arg2[%c0_2, %c0_3] : memref<8x16xf32, #tpu.memory_space<vmem>>, vector<8x16xf32>
    %3 = arith.truncf %2 : vector<8x16xf32> to vector<8x16xbf16>
    %4 = arith.truncf %1 : vector<16x128xf32> to vector<16x128xbf16>
    %cst = arith.constant dense<0.000000e+00> : vector<8x128xf32>
    %5 = tpu.matmul %3, %4, %cst {dimension_numbers = #tpu.dot_dimension_numbers<[1], [0], [0], [1], [0, 0, 1, 1], [], []>} : vector<8x16xbf16>, vector<16x128xbf16>, vector<8x128xf32> -> vector<8x128xf32>
    %c0_4 = arith.constant 0 : index
    %c0_5 = arith.constant 0 : index
    %6 = vector.load %arg3[%c0_4, %c0_5] : memref<8x1xf32, #tpu.memory_space<vmem>>, vector<8x1xf32>
    %7 = vector.broadcast %6 : vector<8x1xf32> to vector<8x128xf32>
    %8 = arith.addf %5, %7 : vector<8x128xf32>
    %cst_6 = arith.constant 0.000000e+00 : f32
    %9 = vector.broadcast %cst_6 : f32 to vector<8x128xf32>
    %10 = arith.cmpf oge, %8, %9 : vector<8x128xf32>
    %cst_7 = arith.constant 1.000000e-01 : f32
    %11 = vector.broadcast %cst_7 : f32 to vector<8x128xf32>
    %12 = arith.mulf %11, %8 : vector<8x128xf32>
    %13 = arith.select %10, %8, %12 : vector<8x128xi1>, vector<8x128xf32>
    %c0_8 = arith.constant 0 : index
    %c0_9 = arith.constant 0 : index
    %14 = vector.load %arg4[%c0_8, %c0_9] : memref<8x16xf32, #tpu.memory_space<vmem>>, vector<8x16xf32>
    %15 = arith.truncf %14 : vector<8x16xf32> to vector<8x16xbf16>
    %16 = arith.truncf %1 : vector<16x128xf32> to vector<16x128xbf16>
    %cst_10 = arith.constant dense<0.000000e+00> : vector<8x128xf32>
    %17 = tpu.matmul %15, %16, %cst_10 {dimension_numbers = #tpu.dot_dimension_numbers<[1], [0], [0], [1], [0, 0, 1, 1], [], []>} : vector<8x16xbf16>, vector<16x128xbf16>, vector<8x128xf32> -> vector<8x128xf32>
    %c0_11 = arith.constant 0 : index
    %c0_12 = arith.constant 0 : index
    %c0_13 = arith.constant 0 : index
    %18 = vector.load %arg5[%c0_11, %c0_12, %c0_13] : memref<2x8x8xf32, #tpu.memory_space<vmem>>, vector<1x8x8xf32>
    %19 = vector.shape_cast %18 : vector<1x8x8xf32> to vector<8x8xf32>
    %20 = arith.truncf %19 : vector<8x8xf32> to vector<8x8xbf16>
    %21 = arith.truncf %13 : vector<8x128xf32> to vector<8x128xbf16>
    %cst_14 = arith.constant dense<0.000000e+00> : vector<8x128xf32>
    %22 = tpu.matmul %20, %21, %cst_14 {dimension_numbers = #tpu.dot_dimension_numbers<[1], [0], [0], [1], [0, 0, 1, 1], [], []>} : vector<8x8xbf16>, vector<8x128xbf16>, vector<8x128xf32> -> vector<8x128xf32>
    %c0_15 = arith.constant 0 : index
    %c0_16 = arith.constant 0 : index
    %c0_17 = arith.constant 0 : index
    %23 = vector.load %arg6[%c0_15, %c0_16, %c0_17] : memref<2x8x1xf32, #tpu.memory_space<vmem>>, vector<1x8x1xf32>
    %24 = vector.shape_cast %23 : vector<1x8x1xf32> to vector<8x1xf32>
    %25 = vector.broadcast %24 : vector<8x1xf32> to vector<8x128xf32>
    %26 = arith.addf %22, %25 : vector<8x128xf32>
    %cst_18 = arith.constant 0.000000e+00 : f32
    %27 = vector.broadcast %cst_18 : f32 to vector<8x128xf32>
    %28 = arith.cmpf oge, %26, %27 : vector<8x128xf32>
    %cst_19 = arith.constant 1.000000e-01 : f32
    %29 = vector.broadcast %cst_19 : f32 to vector<8x128xf32>
    %30 = arith.mulf %29, %26 : vector<8x128xf32>
    %31 = arith.select %28, %26, %30 : vector<8x128xi1>, vector<8x128xf32>
    %c1_i32 = arith.constant 1 : i32
    %32 = tpu.dynamic_rotate %31 by %c1_i32 dim 1 : vector<8x128xf32>, i32 -> vector<8x128xf32>
    %33 = tpu.iota {dimensions = array<i32: 1>} : vector<8x128xi32>
    %c1_i32_20 = arith.constant 1 : i32
    %34 = vector.broadcast %c1_i32_20 : i32 to vector<8x128xi32>
    %35 = arith.cmpi sge, %33, %34 : vector<8x128xi32>
    %cst_21 = arith.constant 0.000000e+00 : f32
    %36 = vector.broadcast %cst_21 : f32 to vector<8x128xf32>
    %37 = arith.select %35, %32, %36 : vector<8x128xi1>, vector<8x128xf32>
    %c127_i32 = arith.constant 127 : i32
    %38 = tpu.dynamic_rotate %31 by %c127_i32 dim 1 : vector<8x128xf32>, i32 -> vector<8x128xf32>
    %39 = tpu.iota {dimensions = array<i32: 1>} : vector<8x128xi32>
    %c127_i32_22 = arith.constant 127 : i32
    %40 = vector.broadcast %c127_i32_22 : i32 to vector<8x128xi32>
    %41 = arith.cmpi slt, %39, %40 : vector<8x128xi32>
    %cst_23 = arith.constant 0.000000e+00 : f32
    %42 = vector.broadcast %cst_23 : f32 to vector<8x128xf32>
    %43 = arith.select %41, %38, %42 : vector<8x128xi1>, vector<8x128xf32>
    %44 = tpu.concatenate %37, %31, %43 in 0 : vector<8x128xf32>, vector<8x128xf32>, vector<8x128xf32> -> vector<24x128xf32>
    %c0_24 = arith.constant 0 : index
    %c0_25 = arith.constant 0 : index
    %c0_26 = arith.constant 0 : index
    %45 = vector.load %arg7[%c0_24, %c0_25, %c0_26] : memref<2x8x24xf32, #tpu.memory_space<vmem>>, vector<1x8x24xf32>
    %46 = vector.shape_cast %45 : vector<1x8x24xf32> to vector<8x24xf32>
    %47 = arith.truncf %46 : vector<8x24xf32> to vector<8x24xbf16>
    %48 = arith.truncf %44 : vector<24x128xf32> to vector<24x128xbf16>
    %cst_27 = arith.constant dense<0.000000e+00> : vector<8x128xf32>
    %49 = tpu.matmul %47, %48, %cst_27 {dimension_numbers = #tpu.dot_dimension_numbers<[1], [0], [0], [1], [0, 0, 1, 1], [], []>} : vector<8x24xbf16>, vector<24x128xbf16>, vector<8x128xf32> -> vector<8x128xf32>
    %c0_28 = arith.constant 0 : index
    %c0_29 = arith.constant 0 : index
    %c0_30 = arith.constant 0 : index
    %50 = vector.load %arg8[%c0_28, %c0_29, %c0_30] : memref<2x8x1xf32, #tpu.memory_space<vmem>>, vector<1x8x1xf32>
    %51 = vector.shape_cast %50 : vector<1x8x1xf32> to vector<8x1xf32>
    %52 = vector.broadcast %51 : vector<8x1xf32> to vector<8x128xf32>
    %53 = arith.addf %49, %52 : vector<8x128xf32>
    %cst_31 = arith.constant 0.000000e+00 : f32
    %54 = vector.broadcast %cst_31 : f32 to vector<8x128xf32>
    %55 = arith.cmpf oge, %53, %54 : vector<8x128xf32>
    %cst_32 = arith.constant 1.000000e-01 : f32
    %56 = vector.broadcast %cst_32 : f32 to vector<8x128xf32>
    %57 = arith.mulf %56, %53 : vector<8x128xf32>
    %58 = arith.select %55, %53, %57 : vector<8x128xi1>, vector<8x128xf32>
    %59 = arith.addf %13, %58 : vector<8x128xf32>
    %c1 = arith.constant 1 : index
    %c0_33 = arith.constant 0 : index
    %c0_34 = arith.constant 0 : index
    %60 = vector.load %arg5[%c1, %c0_33, %c0_34] : memref<2x8x8xf32, #tpu.memory_space<vmem>>, vector<1x8x8xf32>
    %61 = vector.shape_cast %60 : vector<1x8x8xf32> to vector<8x8xf32>
    %62 = arith.truncf %61 : vector<8x8xf32> to vector<8x8xbf16>
    %63 = arith.truncf %59 : vector<8x128xf32> to vector<8x128xbf16>
    %cst_35 = arith.constant dense<0.000000e+00> : vector<8x128xf32>
    %64 = tpu.matmul %62, %63, %cst_35 {dimension_numbers = #tpu.dot_dimension_numbers<[1], [0], [0], [1], [0, 0, 1, 1], [], []>} : vector<8x8xbf16>, vector<8x128xbf16>, vector<8x128xf32> -> vector<8x128xf32>
    %c1_36 = arith.constant 1 : index
    %c0_37 = arith.constant 0 : index
    %c0_38 = arith.constant 0 : index
    %65 = vector.load %arg6[%c1_36, %c0_37, %c0_38] : memref<2x8x1xf32, #tpu.memory_space<vmem>>, vector<1x8x1xf32>
    %66 = vector.shape_cast %65 : vector<1x8x1xf32> to vector<8x1xf32>
    %67 = vector.broadcast %66 : vector<8x1xf32> to vector<8x128xf32>
    %68 = arith.addf %64, %67 : vector<8x128xf32>
    %cst_39 = arith.constant 0.000000e+00 : f32
    %69 = vector.broadcast %cst_39 : f32 to vector<8x128xf32>
    %70 = arith.cmpf oge, %68, %69 : vector<8x128xf32>
    %cst_40 = arith.constant 1.000000e-01 : f32
    %71 = vector.broadcast %cst_40 : f32 to vector<8x128xf32>
    %72 = arith.mulf %71, %68 : vector<8x128xf32>
    %73 = arith.select %70, %68, %72 : vector<8x128xi1>, vector<8x128xf32>
    %c1_i32_41 = arith.constant 1 : i32
    %74 = tpu.dynamic_rotate %73 by %c1_i32_41 dim 1 : vector<8x128xf32>, i32 -> vector<8x128xf32>
    %75 = tpu.iota {dimensions = array<i32: 1>} : vector<8x128xi32>
    %c1_i32_42 = arith.constant 1 : i32
    %76 = vector.broadcast %c1_i32_42 : i32 to vector<8x128xi32>
    %77 = arith.cmpi sge, %75, %76 : vector<8x128xi32>
    %cst_43 = arith.constant 0.000000e+00 : f32
    %78 = vector.broadcast %cst_43 : f32 to vector<8x128xf32>
    %79 = arith.select %77, %74, %78 : vector<8x128xi1>, vector<8x128xf32>
    %c127_i32_44 = arith.constant 127 : i32
    %80 = tpu.dynamic_rotate %73 by %c127_i32_44 dim 1 : vector<8x128xf32>, i32 -> vector<8x128xf32>
    %81 = tpu.iota {dimensions = array<i32: 1>} : vector<8x128xi32>
    %c127_i32_45 = arith.constant 127 : i32
    %82 = vector.broadcast %c127_i32_45 : i32 to vector<8x128xi32>
    %83 = arith.cmpi slt, %81, %82 : vector<8x128xi32>
    %cst_46 = arith.constant 0.000000e+00 : f32
    %84 = vector.broadcast %cst_46 : f32 to vector<8x128xf32>
    %85 = arith.select %83, %80, %84 : vector<8x128xi1>, vector<8x128xf32>
    %86 = tpu.concatenate %79, %73, %85 in 0 : vector<8x128xf32>, vector<8x128xf32>, vector<8x128xf32> -> vector<24x128xf32>
    %c1_47 = arith.constant 1 : index
    %c0_48 = arith.constant 0 : index
    %c0_49 = arith.constant 0 : index
    %87 = vector.load %arg7[%c1_47, %c0_48, %c0_49] : memref<2x8x24xf32, #tpu.memory_space<vmem>>, vector<1x8x24xf32>
    %88 = vector.shape_cast %87 : vector<1x8x24xf32> to vector<8x24xf32>
    %89 = arith.truncf %88 : vector<8x24xf32> to vector<8x24xbf16>
    %90 = arith.truncf %86 : vector<24x128xf32> to vector<24x128xbf16>
    %cst_50 = arith.constant dense<0.000000e+00> : vector<8x128xf32>
    %91 = tpu.matmul %89, %90, %cst_50 {dimension_numbers = #tpu.dot_dimension_numbers<[1], [0], [0], [1], [0, 0, 1, 1], [], []>} : vector<8x24xbf16>, vector<24x128xbf16>, vector<8x128xf32> -> vector<8x128xf32>
    %c1_51 = arith.constant 1 : index
    %c0_52 = arith.constant 0 : index
    %c0_53 = arith.constant 0 : index
    %92 = vector.load %arg8[%c1_51, %c0_52, %c0_53] : memref<2x8x1xf32, #tpu.memory_space<vmem>>, vector<1x8x1xf32>
    %93 = vector.shape_cast %92 : vector<1x8x1xf32> to vector<8x1xf32>
    %94 = vector.broadcast %93 : vector<8x1xf32> to vector<8x128xf32>
    %95 = arith.addf %91, %94 : vector<8x128xf32>
    %cst_54 = arith.constant 0.000000e+00 : f32
    %96 = vector.broadcast %cst_54 : f32 to vector<8x128xf32>
    %97 = arith.cmpf oge, %95, %96 : vector<8x128xf32>
    %cst_55 = arith.constant 1.000000e-01 : f32
    %98 = vector.broadcast %cst_55 : f32 to vector<8x128xf32>
    %99 = arith.mulf %98, %95 : vector<8x128xf32>
    %100 = arith.select %97, %95, %99 : vector<8x128xi1>, vector<8x128xf32>
    %101 = arith.addf %59, %100 : vector<8x128xf32>
    %c0_56 = arith.constant 0 : index
    %c0_57 = arith.constant 0 : index
    %102 = vector.load %arg9[%c0_56, %c0_57] : memref<8x8xf32, #tpu.memory_space<vmem>>, vector<8x8xf32>
    %103 = arith.truncf %102 : vector<8x8xf32> to vector<8x8xbf16>
    %104 = arith.truncf %101 : vector<8x128xf32> to vector<8x128xbf16>
    %cst_58 = arith.constant dense<0.000000e+00> : vector<8x128xf32>
    %105 = tpu.matmul %103, %104, %cst_58 {dimension_numbers = #tpu.dot_dimension_numbers<[1], [0], [0], [1], [0, 0, 1, 1], [], []>} : vector<8x8xbf16>, vector<8x128xbf16>, vector<8x128xf32> -> vector<8x128xf32>
    %106 = tpu.concatenate %105, %17 in 0 : vector<8x128xf32>, vector<8x128xf32> -> vector<16x128xf32>
    %c0_59 = arith.constant 0 : index
    %c0_60 = arith.constant 0 : index
    %107 = vector.load %arg10[%c0_59, %c0_60] : memref<16x1xf32, #tpu.memory_space<vmem>>, vector<16x1xf32>
    %108 = vector.broadcast %107 : vector<16x1xf32> to vector<16x128xf32>
    %109 = arith.mulf %106, %108 : vector<16x128xf32>
    %c0_61 = arith.constant 0 : index
    %c0_62 = arith.constant 0 : index
    %110 = vector.load %arg11[%c0_61, %c0_62] : memref<16x1xf32, #tpu.memory_space<vmem>>, vector<16x1xf32>
    %111 = vector.broadcast %110 : vector<16x1xf32> to vector<16x128xf32>
    %112 = arith.addf %109, %111 : vector<16x128xf32>
    %cst_63 = arith.constant 0.000000e+00 : f32
    %113 = vector.broadcast %cst_63 : f32 to vector<16x128xf32>
    %114 = arith.cmpf oge, %112, %113 : vector<16x128xf32>
    %cst_64 = arith.constant 1.000000e-01 : f32
    %115 = vector.broadcast %cst_64 : f32 to vector<16x128xf32>
    %116 = arith.mulf %115, %112 : vector<16x128xf32>
    %117 = arith.select %114, %112, %116 : vector<16x128xi1>, vector<16x128xf32>
    %c0_65 = arith.constant 0 : index
    %c0_66 = arith.constant 0 : index
    %118 = vector.load %arg12[%c0_65, %c0_66] : memref<16x16xf32, #tpu.memory_space<vmem>>, vector<16x16xf32>
    %119 = arith.truncf %118 : vector<16x16xf32> to vector<16x16xbf16>
    %120 = arith.truncf %117 : vector<16x128xf32> to vector<16x128xbf16>
    %cst_67 = arith.constant dense<0.000000e+00> : vector<16x128xf32>
    %121 = tpu.matmul %119, %120, %cst_67 {dimension_numbers = #tpu.dot_dimension_numbers<[1], [0], [0], [1], [0, 0, 1, 1], [], []>} : vector<16x16xbf16>, vector<16x128xbf16>, vector<16x128xf32> -> vector<16x128xf32>
    %c0_68 = arith.constant 0 : index
    %c0_69 = arith.constant 0 : index
    %122 = vector.load %arg13[%c0_68, %c0_69] : memref<16x1xf32, #tpu.memory_space<vmem>>, vector<16x1xf32>
    %123 = vector.broadcast %122 : vector<16x1xf32> to vector<16x128xf32>
    %124 = arith.addf %121, %123 : vector<16x128xf32>
    %cst_70 = arith.constant 0.000000e+00 : f32
    %125 = vector.broadcast %cst_70 : f32 to vector<16x128xf32>
    %126 = arith.cmpf oge, %124, %125 : vector<16x128xf32>
    %cst_71 = arith.constant 1.000000e-01 : f32
    %127 = vector.broadcast %cst_71 : f32 to vector<16x128xf32>
    %128 = arith.mulf %127, %124 : vector<16x128xf32>
    %129 = arith.select %126, %124, %128 : vector<16x128xi1>, vector<16x128xf32>
    %c0_72 = arith.constant 0 : index
    %c0_73 = arith.constant 0 : index
    %c0_74 = arith.constant 0 : index
    %130 = vector.load %arg14[%c0_72, %c0_73, %c0_74] : memref<1x16x128xf32, #tpu.memory_space<vmem>>, vector<1x16x128xf32>
    %131 = vector.shape_cast %130 : vector<1x16x128xf32> to vector<16x128xf32>
    %132 = vector.shape_cast %129 : vector<16x128xf32> to vector<1x16x128xf32>
    tpu.vector_store %arg14[%c0_72, %c0_73, %c0_74], %132 {strides = array<i32>} : memref<1x16x128xf32, #tpu.memory_space<vmem>>, vector<1x16x128xf32>,
    return
  }
  func.func @transform_0(%arg0: i32) -> (i32, i32, i32) {
    %c0_i32 = arith.constant 0 : i32
    %c0_i32_0 = arith.constant 0 : i32
    %c0_i32_1 = arith.constant 0 : i32
    return %arg0, %c0_i32, %c0_i32_0 : i32, i32, i32
  }
  func.func @transform_1(%arg0: i32) -> (i32, i32) {
    %c0_i32 = arith.constant 0 : i32
    %c0_i32_0 = arith.constant 0 : i32
    %c0_i32_1 = arith.constant 0 : i32
    return %c0_i32, %c0_i32_0 : i32, i32
  }
  func.func @transform_2(%arg0: i32) -> (i32, i32) {
    %c0_i32 = arith.constant 0 : i32
    %c0_i32_0 = arith.constant 0 : i32
    %c0_i32_1 = arith.constant 0 : i32
    return %c0_i32, %c0_i32_0 : i32, i32
  }
  func.func @transform_3(%arg0: i32) -> (i32, i32) {
    %c0_i32 = arith.constant 0 : i32
    %c0_i32_0 = arith.constant 0 : i32
    %c0_i32_1 = arith.constant 0 : i32
    return %c0_i32, %c0_i32_0 : i32, i32
  }
  func.func @transform_4(%arg0: i32) -> (i32, i32, i32) {
    %c0_i32 = arith.constant 0 : i32
    %c0_i32_0 = arith.constant 0 : i32
    %c0_i32_1 = arith.constant 0 : i32
    %c0_i32_2 = arith.constant 0 : i32
    return %c0_i32, %c0_i32_0, %c0_i32_1 : i32, i32, i32
  }
  func.func @transform_5(%arg0: i32) -> (i32, i32, i32) {
    %c0_i32 = arith.constant 0 : i32
    %c0_i32_0 = arith.constant 0 : i32
    %c0_i32_1 = arith.constant 0 : i32
    %c0_i32_2 = arith.constant 0 : i32
    return %c0_i32, %c0_i32_0, %c0_i32_1 : i32, i32, i32
  }
  func.func @transform_6(%arg0: i32) -> (i32, i32, i32) {
    %c0_i32 = arith.constant 0 : i32
    %c0_i32_0 = arith.constant 0 : i32
    %c0_i32_1 = arith.constant 0 : i32
    %c0_i32_2 = arith.constant 0 : i32
    return %c0_i32, %c0_i32_0, %c0_i32_1 : i32, i32, i32
  }
  func.func @transform_7(%arg0: i32) -> (i32, i32, i32) {
    %c0_i32 = arith.constant 0 : i32
    %c0_i32_0 = arith.constant 0 : i32
    %c0_i32_1 = arith.constant 0 : i32
    %c0_i32_2 = arith.constant 0 : i32
    return %c0_i32, %c0_i32_0, %c0_i32_1 : i32, i32, i32
  }
  func.func @transform_8(%arg0: i32) -> (i32, i32) {
    %c0_i32 = arith.constant 0 : i32
    %c0_i32_0 = arith.constant 0 : i32
    %c0_i32_1 = arith.constant 0 : i32
    return %c0_i32, %c0_i32_0 : i32, i32
  }
  func.func @transform_9(%arg0: i32) -> (i32, i32) {
    %c0_i32 = arith.constant 0 : i32
    %c0_i32_0 = arith.constant 0 : i32
    %c0_i32_1 = arith.constant 0 : i32
    return %c0_i32, %c0_i32_0 : i32, i32
  }
  func.func @transform_10(%arg0: i32) -> (i32, i32) {
    %c0_i32 = arith.constant 0 : i32
    %c0_i32_0 = arith.constant 0 : i32
    %c0_i32_1 = arith.constant 0 : i32
    return %c0_i32, %c0_i32_0 : i32, i32
  }
  func.func @transform_11(%arg0: i32) -> (i32, i32) {
    %c0_i32 = arith.constant 0 : i32
    %c0_i32_0 = arith.constant 0 : i32
    %c0_i32_1 = arith.constant 0 : i32
    return %c0_i32, %c0_i32_0 : i32, i32
  }
  func.func @transform_12(%arg0: i32) -> (i32, i32) {
    %c0_i32 = arith.constant 0 : i32
    %c0_i32_0 = arith.constant 0 : i32
    %c0_i32_1 = arith.constant 0 : i32
    return %c0_i32, %c0_i32_0 : i32, i32
  }
  func.func @transform_13(%arg0: i32) -> (i32, i32, i32) {
    %c0_i32 = arith.constant 0 : i32
    %c0_i32_0 = arith.constant 0 : i32
    %c0_i32_1 = arith.constant 0 : i32
    return %arg0, %c0_i32, %c0_i32_0 : i32, i32, i32
  }
}

module attributes {stable_mosaic.version = 11 : i64} {
  func.func @_layer_fusion_kernel(%arg0: i32, %arg1: memref<1x16x128xf32, #tpu.memory_space<vmem>>, %arg2: memref<1x8x128xf32, #tpu.memory_space<vmem>>, %arg3: memref<24x72xf32, #tpu.memory_space<vmem>>, %arg4: memref<24x1xf32, #tpu.memory_space<vmem>>, %arg5: memref<1x16x128xf32, #tpu.memory_space<vmem>>, %arg6: memref<1x8x128xf32, #tpu.memory_space<vmem>>) attributes {dimension_semantics = [#tpu.dimension_semantics<parallel>], iteration_bounds = array<i64: 2>, scalar_prefetch = 0 : i64, scratch_operands = 0 : i64, tpu.core_type = #tpu.core_type<tc>, window_params = [{transform_indices = @transform_0, window_bounds = array<i64: 1, 16, 128>}, {transform_indices = @transform_1, window_bounds = array<i64: 1, 8, 128>}, {pipeline_mode = #tpu.pipeline_mode<synchronous>, transform_indices = @transform_2, window_bounds = array<i64: 24, 72>}, {pipeline_mode = #tpu.pipeline_mode<synchronous>, transform_indices = @transform_3, window_bounds = array<i64: 24, 1>}, {transform_indices = @transform_4, window_bounds = array<i64: 1, 16, 128>}, {transform_indices = @transform_5, window_bounds = array<i64: 1, 8, 128>}]} {
    %c0 = arith.constant 0 : index
    %c0_0 = arith.constant 0 : index
    %c0_1 = arith.constant 0 : index
    %0 = vector.load %arg1[%c0, %c0_0, %c0_1] : memref<1x16x128xf32, #tpu.memory_space<vmem>>, vector<1x16x128xf32>
    %1 = vector.shape_cast %0 : vector<1x16x128xf32> to vector<16x128xf32>
    %c0_2 = arith.constant 0 : index
    %c0_3 = arith.constant 0 : index
    %c0_4 = arith.constant 0 : index
    %2 = vector.load %arg2[%c0_2, %c0_3, %c0_4] : memref<1x8x128xf32, #tpu.memory_space<vmem>>, vector<1x8x128xf32>
    %3 = vector.shape_cast %2 : vector<1x8x128xf32> to vector<8x128xf32>
    %4 = tpu.concatenate %1, %3 in 0 : vector<16x128xf32>, vector<8x128xf32> -> vector<24x128xf32>
    %c1_i32 = arith.constant 1 : i32
    %5 = tpu.dynamic_rotate %4 by %c1_i32 dim 1 : vector<24x128xf32>, i32 -> vector<24x128xf32>
    %6 = tpu.iota {dimensions = array<i32: 1>} : vector<24x128xi32>
    %c1_i32_5 = arith.constant 1 : i32
    %7 = vector.broadcast %c1_i32_5 : i32 to vector<24x128xi32>
    %8 = arith.cmpi sge, %6, %7 : vector<24x128xi32>
    %cst = arith.constant 0.000000e+00 : f32
    %9 = vector.broadcast %cst : f32 to vector<24x128xf32>
    %10 = arith.select %8, %5, %9 : vector<24x128xi1>, vector<24x128xf32>
    %c127_i32 = arith.constant 127 : i32
    %11 = tpu.dynamic_rotate %4 by %c127_i32 dim 1 : vector<24x128xf32>, i32 -> vector<24x128xf32>
    %12 = tpu.iota {dimensions = array<i32: 1>} : vector<24x128xi32>
    %c127_i32_6 = arith.constant 127 : i32
    %13 = vector.broadcast %c127_i32_6 : i32 to vector<24x128xi32>
    %14 = arith.cmpi slt, %12, %13 : vector<24x128xi32>
    %cst_7 = arith.constant 0.000000e+00 : f32
    %15 = vector.broadcast %cst_7 : f32 to vector<24x128xf32>
    %16 = arith.select %14, %11, %15 : vector<24x128xi1>, vector<24x128xf32>
    %17 = tpu.concatenate %10, %4, %16 in 0 : vector<24x128xf32>, vector<24x128xf32>, vector<24x128xf32> -> vector<72x128xf32>
    %c0_8 = arith.constant 0 : index
    %c0_9 = arith.constant 0 : index
    %18 = vector.load %arg3[%c0_8, %c0_9] : memref<24x72xf32, #tpu.memory_space<vmem>>, vector<24x72xf32>
    %19 = arith.truncf %18 : vector<24x72xf32> to vector<24x72xbf16>
    %20 = arith.truncf %17 : vector<72x128xf32> to vector<72x128xbf16>
    %cst_10 = arith.constant dense<0.000000e+00> : vector<24x128xf32>
    %21 = tpu.matmul %19, %20, %cst_10 {dimension_numbers = #tpu.dot_dimension_numbers<[1], [0], [0], [1], [0, 0, 1, 1], [], []>} : vector<24x72xbf16>, vector<72x128xbf16>, vector<24x128xf32> -> vector<24x128xf32>
    %c0_11 = arith.constant 0 : index
    %c0_12 = arith.constant 0 : index
    %22 = vector.load %arg4[%c0_11, %c0_12] : memref<24x1xf32, #tpu.memory_space<vmem>>, vector<24x1xf32>
    %23 = vector.broadcast %22 : vector<24x1xf32> to vector<24x128xf32>
    %24 = arith.addf %21, %23 : vector<24x128xf32>
    %25 = vector.extract_strided_slice %24 {offsets = [0, 0], sizes = [16, 128], strides = [1, 1]} : vector<24x128xf32> to vector<16x128xf32>
    %c0_13 = arith.constant 0 : index
    %c0_14 = arith.constant 0 : index
    %c0_15 = arith.constant 0 : index
    %26 = vector.load %arg5[%c0_13, %c0_14, %c0_15] : memref<1x16x128xf32, #tpu.memory_space<vmem>>, vector<1x16x128xf32>
    %27 = vector.shape_cast %26 : vector<1x16x128xf32> to vector<16x128xf32>
    %28 = vector.shape_cast %25 : vector<16x128xf32> to vector<1x16x128xf32>
    tpu.vector_store %arg5[%c0_13, %c0_14, %c0_15], %28 {strides = array<i32>} : memref<1x16x128xf32, #tpu.memory_space<vmem>>, vector<1x16x128xf32>,
    %29 = vector.extract_strided_slice %24 {offsets = [16, 0], sizes = [8, 128], strides = [1, 1]} : vector<24x128xf32> to vector<8x128xf32>
    %c0_16 = arith.constant 0 : index
    %c0_17 = arith.constant 0 : index
    %c0_18 = arith.constant 0 : index
    %30 = vector.load %arg6[%c0_16, %c0_17, %c0_18] : memref<1x8x128xf32, #tpu.memory_space<vmem>>, vector<1x8x128xf32>
    %31 = vector.shape_cast %30 : vector<1x8x128xf32> to vector<8x128xf32>
    %32 = vector.shape_cast %29 : vector<8x128xf32> to vector<1x8x128xf32>
    tpu.vector_store %arg6[%c0_16, %c0_17, %c0_18], %32 {strides = array<i32>} : memref<1x8x128xf32, #tpu.memory_space<vmem>>, vector<1x8x128xf32>,
    return
  }
  func.func @transform_0(%arg0: i32) -> (i32, i32, i32) {
    %c0_i32 = arith.constant 0 : i32
    %c0_i32_0 = arith.constant 0 : i32
    %c0_i32_1 = arith.constant 0 : i32
    return %arg0, %c0_i32, %c0_i32_0 : i32, i32, i32
  }
  func.func @transform_1(%arg0: i32) -> (i32, i32, i32) {
    %c0_i32 = arith.constant 0 : i32
    %c0_i32_0 = arith.constant 0 : i32
    %c0_i32_1 = arith.constant 0 : i32
    return %arg0, %c0_i32, %c0_i32_0 : i32, i32, i32
  }
  func.func @transform_2(%arg0: i32) -> (i32, i32) {
    %c0_i32 = arith.constant 0 : i32
    %c0_i32_0 = arith.constant 0 : i32
    %c0_i32_1 = arith.constant 0 : i32
    return %c0_i32, %c0_i32_0 : i32, i32
  }
  func.func @transform_3(%arg0: i32) -> (i32, i32) {
    %c0_i32 = arith.constant 0 : i32
    %c0_i32_0 = arith.constant 0 : i32
    %c0_i32_1 = arith.constant 0 : i32
    return %c0_i32, %c0_i32_0 : i32, i32
  }
  func.func @transform_4(%arg0: i32) -> (i32, i32, i32) {
    %c0_i32 = arith.constant 0 : i32
    %c0_i32_0 = arith.constant 0 : i32
    %c0_i32_1 = arith.constant 0 : i32
    return %arg0, %c0_i32, %c0_i32_0 : i32, i32, i32
  }
  func.func @transform_5(%arg0: i32) -> (i32, i32, i32) {
    %c0_i32 = arith.constant 0 : i32
    %c0_i32_0 = arith.constant 0 : i32
    %c0_i32_1 = arith.constant 0 : i32
    return %arg0, %c0_i32, %c0_i32_0 : i32, i32, i32
  }
}

module attributes {stable_mosaic.version = 11 : i64} {
  func.func @_layer_fusion_kernel(%arg0: i32, %arg1: memref<1x16x128xf32, #tpu.memory_space<vmem>>, %arg2: memref<1x8x128xf32, #tpu.memory_space<vmem>>, %arg3: memref<24x72xf32, #tpu.memory_space<vmem>>, %arg4: memref<24x1xf32, #tpu.memory_space<vmem>>, %arg5: memref<1x16x128xf32, #tpu.memory_space<vmem>>, %arg6: memref<1x8x128xf32, #tpu.memory_space<vmem>>) attributes {dimension_semantics = [#tpu.dimension_semantics<parallel>], iteration_bounds = array<i64: 2>, scalar_prefetch = 0 : i64, scratch_operands = 0 : i64, tpu.core_type = #tpu.core_type<tc>, window_params = [{transform_indices = @transform_0, window_bounds = array<i64: 1, 16, 128>}, {transform_indices = @transform_1, window_bounds = array<i64: 1, 8, 128>}, {pipeline_mode = #tpu.pipeline_mode<synchronous>, transform_indices = @transform_2, window_bounds = array<i64: 24, 72>}, {pipeline_mode = #tpu.pipeline_mode<synchronous>, transform_indices = @transform_3, window_bounds = array<i64: 24, 1>}, {transform_indices = @transform_4, window_bounds = array<i64: 1, 16, 128>}, {transform_indices = @transform_5, window_bounds = array<i64: 1, 8, 128>}]} {
    %c0 = arith.constant 0 : index
    %c0_0 = arith.constant 0 : index
    %c0_1 = arith.constant 0 : index
    %0 = vector.load %arg1[%c0, %c0_0, %c0_1] : memref<1x16x128xf32, #tpu.memory_space<vmem>>, vector<1x16x128xf32>
    %1 = vector.shape_cast %0 : vector<1x16x128xf32> to vector<16x128xf32>
    %c0_2 = arith.constant 0 : index
    %c0_3 = arith.constant 0 : index
    %c0_4 = arith.constant 0 : index
    %2 = vector.load %arg2[%c0_2, %c0_3, %c0_4] : memref<1x8x128xf32, #tpu.memory_space<vmem>>, vector<1x8x128xf32>
    %3 = vector.shape_cast %2 : vector<1x8x128xf32> to vector<8x128xf32>
    %4 = tpu.concatenate %1, %3 in 0 : vector<16x128xf32>, vector<8x128xf32> -> vector<24x128xf32>
    %c1_i32 = arith.constant 1 : i32
    %5 = tpu.dynamic_rotate %4 by %c1_i32 dim 1 : vector<24x128xf32>, i32 -> vector<24x128xf32>
    %6 = tpu.iota {dimensions = array<i32: 1>} : vector<24x128xi32>
    %c1_i32_5 = arith.constant 1 : i32
    %7 = vector.broadcast %c1_i32_5 : i32 to vector<24x128xi32>
    %8 = arith.cmpi sge, %6, %7 : vector<24x128xi32>
    %cst = arith.constant 0.000000e+00 : f32
    %9 = vector.broadcast %cst : f32 to vector<24x128xf32>
    %10 = arith.select %8, %5, %9 : vector<24x128xi1>, vector<24x128xf32>
    %c127_i32 = arith.constant 127 : i32
    %11 = tpu.dynamic_rotate %4 by %c127_i32 dim 1 : vector<24x128xf32>, i32 -> vector<24x128xf32>
    %12 = tpu.iota {dimensions = array<i32: 1>} : vector<24x128xi32>
    %c127_i32_6 = arith.constant 127 : i32
    %13 = vector.broadcast %c127_i32_6 : i32 to vector<24x128xi32>
    %14 = arith.cmpi slt, %12, %13 : vector<24x128xi32>
    %cst_7 = arith.constant 0.000000e+00 : f32
    %15 = vector.broadcast %cst_7 : f32 to vector<24x128xf32>
    %16 = arith.select %14, %11, %15 : vector<24x128xi1>, vector<24x128xf32>
    %17 = tpu.concatenate %10, %4, %16 in 0 : vector<24x128xf32>, vector<24x128xf32>, vector<24x128xf32> -> vector<72x128xf32>
    %c0_8 = arith.constant 0 : index
    %c0_9 = arith.constant 0 : index
    %18 = vector.load %arg3[%c0_8, %c0_9] : memref<24x72xf32, #tpu.memory_space<vmem>>, vector<24x72xf32>
    %19 = arith.truncf %18 : vector<24x72xf32> to vector<24x72xbf16>
    %20 = arith.truncf %17 : vector<72x128xf32> to vector<72x128xbf16>
    %cst_10 = arith.constant dense<0.000000e+00> : vector<24x128xf32>
    %21 = tpu.matmul %19, %20, %cst_10 {dimension_numbers = #tpu.dot_dimension_numbers<[1], [0], [0], [1], [0, 0, 1, 1], [], []>} : vector<24x72xbf16>, vector<72x128xbf16>, vector<24x128xf32> -> vector<24x128xf32>
    %c0_11 = arith.constant 0 : index
    %c0_12 = arith.constant 0 : index
    %22 = vector.load %arg4[%c0_11, %c0_12] : memref<24x1xf32, #tpu.memory_space<vmem>>, vector<24x1xf32>
    %23 = vector.broadcast %22 : vector<24x1xf32> to vector<24x128xf32>
    %24 = arith.addf %21, %23 : vector<24x128xf32>
    %25 = vector.extract_strided_slice %24 {offsets = [0, 0], sizes = [16, 128], strides = [1, 1]} : vector<24x128xf32> to vector<16x128xf32>
    %c0_13 = arith.constant 0 : index
    %c0_14 = arith.constant 0 : index
    %c0_15 = arith.constant 0 : index
    %26 = vector.load %arg5[%c0_13, %c0_14, %c0_15] : memref<1x16x128xf32, #tpu.memory_space<vmem>>, vector<1x16x128xf32>
    %27 = vector.shape_cast %26 : vector<1x16x128xf32> to vector<16x128xf32>
    %28 = vector.shape_cast %25 : vector<16x128xf32> to vector<1x16x128xf32>
    tpu.vector_store %arg5[%c0_13, %c0_14, %c0_15], %28 {strides = array<i32>} : memref<1x16x128xf32, #tpu.memory_space<vmem>>, vector<1x16x128xf32>,
    %29 = vector.extract_strided_slice %24 {offsets = [16, 0], sizes = [8, 128], strides = [1, 1]} : vector<24x128xf32> to vector<8x128xf32>
    %c0_16 = arith.constant 0 : index
    %c0_17 = arith.constant 0 : index
    %c0_18 = arith.constant 0 : index
    %30 = vector.load %arg6[%c0_16, %c0_17, %c0_18] : memref<1x8x128xf32, #tpu.memory_space<vmem>>, vector<1x8x128xf32>
    %31 = vector.shape_cast %30 : vector<1x8x128xf32> to vector<8x128xf32>
    %32 = vector.shape_cast %29 : vector<8x128xf32> to vector<1x8x128xf32>
    tpu.vector_store %arg6[%c0_16, %c0_17, %c0_18], %32 {strides = array<i32>} : memref<1x8x128xf32, #tpu.memory_space<vmem>>, vector<1x8x128xf32>,
    return
  }
  func.func @transform_0(%arg0: i32) -> (i32, i32, i32) {
    %c0_i32 = arith.constant 0 : i32
    %c0_i32_0 = arith.constant 0 : i32
    %c0_i32_1 = arith.constant 0 : i32
    return %arg0, %c0_i32, %c0_i32_0 : i32, i32, i32
  }
  func.func @transform_1(%arg0: i32) -> (i32, i32, i32) {
    %c0_i32 = arith.constant 0 : i32
    %c0_i32_0 = arith.constant 0 : i32
    %c0_i32_1 = arith.constant 0 : i32
    return %arg0, %c0_i32, %c0_i32_0 : i32, i32, i32
  }
  func.func @transform_2(%arg0: i32) -> (i32, i32) {
    %c0_i32 = arith.constant 0 : i32
    %c0_i32_0 = arith.constant 0 : i32
    %c0_i32_1 = arith.constant 0 : i32
    return %c0_i32, %c0_i32_0 : i32, i32
  }
  func.func @transform_3(%arg0: i32) -> (i32, i32) {
    %c0_i32 = arith.constant 0 : i32
    %c0_i32_0 = arith.constant 0 : i32
    %c0_i32_1 = arith.constant 0 : i32
    return %c0_i32, %c0_i32_0 : i32, i32
  }
  func.func @transform_4(%arg0: i32) -> (i32, i32, i32) {
    %c0_i32 = arith.constant 0 : i32
    %c0_i32_0 = arith.constant 0 : i32
    %c0_i32_1 = arith.constant 0 : i32
    return %arg0, %c0_i32, %c0_i32_0 : i32, i32, i32
  }
  func.func @transform_5(%arg0: i32) -> (i32, i32, i32) {
    %c0_i32 = arith.constant 0 : i32
    %c0_i32_0 = arith.constant 0 : i32
    %c0_i32_1 = arith.constant 0 : i32
    return %arg0, %c0_i32, %c0_i32_0 : i32, i32, i32
  }
}

</mosaic_0001>

<llo_original>
// kernel: forward.11
$region0: #{forward.11}
  #allocation0 [shape = 'u32[]', space=smem, size = 0x4, offset = 0x4, fixed_abs, tag = 'smem constant byte address 0x4 - core index']
  #allocation1 [shape = 'u32[144,128]{1,0:T(1,128)}', space=vmem, size = 0x12000, scoped, tag = 'internal scratch']
  %s0 = inlined_call_operand.vmem [shape: f32[2,16,128], index: 0, kind: input, shape index: {}]
  %s1 = inlined_call_operand.vmem [shape: f32[2,8,128], index: 1, kind: input, shape index: {}]
  %s2 = inlined_call_operand.vmem [shape: f32[24,72], index: 2, kind: input, shape index: {}]
  %s3 = inlined_call_operand.vmem [shape: f32[24,1], index: 3, kind: input, shape index: {}]
  %s4 = inlined_call_operand.vmem [shape: f32[2,16,128], index: 4, kind: output, shape index: {0}]
  %s5 = inlined_call_operand.vmem [shape: f32[2,8,128], index: 5, kind: output, shape index: {1}]
  %6 = xla_tuple %s4, %s5
  %s7 = sld [smem:[#allocation0]]
  $region57: #{forward.11} parent=0
    _
  %s9 = ssub.s32 1, %s7
  %s10 = scalar_select 0, %s9, %s7
  loop: start=0, step=1, limit=4
  $region2: #{forward.11} parent=0 // loop_pre_header
    _
  $region3: #{forward.11} parent=0 // loop_header
    %s12 = sphi 0, %s16
    %p13 = scmp.ge.s32.totalorder %s12, 4
    %s22 = sphi 0, %s24
    %s25 = sphi 0, %s22
    %s26 = sphi 0, %s25
    %s42 = sphi 0, %s26
    %s48 = sphi 0, %s50
    %s51 = sphi 0, %s48
    %s52 = sphi 0, %s51
    %s68 = sphi 0, %s52
    %s72 = sphi 0, %s72
    %s74 = sphi 0, %s72
    %s75 = sphi 0, %s74
    %s89 = sphi 0, %s75
    %s93 = sphi 0, %s93
    %s95 = sphi 0, %s93
    %s96 = sphi 0, %s95
    %s110 = sphi 0, %s96
    %s116 = sphi 0, %s118
    %s119 = sphi 0, %s116
    %s120 = sphi 0, %s119
    %s136 = sphi 0, %s120
    %s142 = sphi 0, %s144
    %s145 = sphi 0, %s142
    %s146 = sphi 0, %s145
    %s162 = sphi 0, %s146
  $region4: #{forward.11} parent=0 // loop_header_branch
    %15 = sbr.rel (%p13) target = $region8
  $region5: #{forward.11} parent=0 // loop_body
    %s17 = ssub.s32 %s12, 1
    %s18 = ssub.s32 %s12, 2
    %s19 = sadd.s32 %s12, 1
    %s20 = ssub.s32 %s12, %s19
    %p21 = scmp.eq.s32.totalorder %s20, 0
    %s23 = sadd.s32 %s22, 1
    %s24 = scalar_select %p21, %s22, %s23
    %p27 = pneg %p21
    %p28 = scmp.eq.s32.totalorder %s12, 1
    %p29 = por %p27, %p28
    %p30 = scmp.ne.s32.totalorder %s22, %s25
    %p31 = scmp.eq.s32.totalorder %s12, 0
    %p32 = por %p30, %p31
    %p33 = scmp.ne.s32.totalorder %s22, %s25
    %p34 = scmp.eq.s32.totalorder %s17, 1
    %p35 = por %p33, %p34
    %p36 = scmp.ne.s32.totalorder %s25, %s26
    %p37 = scmp.eq.s32.totalorder %s17, 0
    %p38 = por %p36, %p37
    %p39 = scmp.ne.s32.totalorder %s25, %s26
    %p40 = scmp.eq.s32.totalorder %s18, 1
    %p41 = por %p39, %p40
    %p43 = scmp.ne.s32.totalorder %s26, %s42
    %p44 = scmp.eq.s32.totalorder %s18, 0
    %p45 = por %p43, %p44
    %s46 = ssub.s32 %s12, %s19
    %p47 = scmp.eq.s32.totalorder %s46, 0
    %s49 = sadd.s32 %s48, 1
    %s50 = scalar_select %p47, %s48, %s49
    %p53 = pneg %p47
    %p54 = scmp.eq.s32.totalorder %s12, 1
    %p55 = por %p53, %p54
    %p56 = scmp.ne.s32.totalorder %s48, %s51
    %p57 = scmp.eq.s32.totalorder %s12, 0
    %p58 = por %p56, %p57
    %p59 = scmp.ne.s32.totalorder %s48, %s51
    %p60 = scmp.eq.s32.totalorder %s17, 1
    %p61 = por %p59, %p60
    %p62 = scmp.ne.s32.totalorder %s51, %s52
    %p63 = scmp.eq.s32.totalorder %s17, 0
    %p64 = por %p62, %p63
    %p65 = scmp.ne.s32.totalorder %s51, %s52
    %p66 = scmp.eq.s32.totalorder %s18, 1
    %p67 = por %p65, %p66
    %p69 = scmp.ne.s32.totalorder %s52, %s68
    %p70 = scmp.eq.s32.totalorder %s18, 0
    %p71 = por %p69, %p70
    %s73 = sadd.s32 %s72, 1
    %p76 = scmp.eq.s32.totalorder %s12, 1
    %p77 = scmp.ne.s32.totalorder %s72, %s74
    %p78 = scmp.eq.s32.totalorder %s12, 0
    %p79 = por %p77, %p78
    %p80 = scmp.ne.s32.totalorder %s72, %s74
    %p81 = scmp.eq.s32.totalorder %s17, 1
    %p82 = por %p80, %p81
    %p83 = scmp.ne.s32.totalorder %s74, %s75
    %p84 = scmp.eq.s32.totalorder %s17, 0
    %p85 = por %p83, %p84
    %p86 = scmp.ne.s32.totalorder %s74, %s75
    %p87 = scmp.eq.s32.totalorder %s18, 1
    %p88 = por %p86, %p87
    %p90 = scmp.ne.s32.totalorder %s75, %s89
    %p91 = scmp.eq.s32.totalorder %s18, 0
    %p92 = por %p90, %p91
    %s94 = sadd.s32 %s93, 1
    %p97 = scmp.eq.s32.totalorder %s12, 1
    %p98 = scmp.ne.s32.totalorder %s93, %s95
    %p99 = scmp.eq.s32.totalorder %s12, 0
    %p100 = por %p98, %p99
    %p101 = scmp.ne.s32.totalorder %s93, %s95
    %p102 = scmp.eq.s32.totalorder %s17, 1
    %p103 = por %p101, %p102
    %p104 = scmp.ne.s32.totalorder %s95, %s96
    %p105 = scmp.eq.s32.totalorder %s17, 0
    %p106 = por %p104, %p105
    %p107 = scmp.ne.s32.totalorder %s95, %s96
    %p108 = scmp.eq.s32.totalorder %s18, 1
    %p109 = por %p107, %p108
    %p111 = scmp.ne.s32.totalorder %s96, %s110
    %p112 = scmp.eq.s32.totalorder %s18, 0
    %p113 = por %p111, %p112
    %s114 = ssub.s32 %s12, %s19
    %p115 = scmp.eq.s32.totalorder %s114, 0
    %s117 = sadd.s32 %s116, 1
    %s118 = scalar_select %p115, %s116, %s117
    %p121 = pneg %p115
    %p122 = scmp.eq.s32.totalorder %s12, 1
    %p123 = por %p121, %p122
    %p124 = scmp.ne.s32.totalorder %s116, %s119
    %p125 = scmp.eq.s32.totalorder %s12, 0
    %p126 = por %p124, %p125
    %p127 = scmp.ne.s32.totalorder %s116, %s119
    %p128 = scmp.eq.s32.totalorder %s17, 1
    %p129 = por %p127, %p128
    %p130 = scmp.ne.s32.totalorder %s119, %s120
    %p131 = scmp.eq.s32.totalorder %s17, 0
    %p132 = por %p130, %p131
    %p133 = scmp.ne.s32.totalorder %s119, %s120
    %p134 = scmp.eq.s32.totalorder %s18, 1
    %p135 = por %p133, %p134
    %p137 = scmp.ne.s32.totalorder %s120, %s136
    %p138 = scmp.eq.s32.totalorder %s18, 0
    %p139 = por %p137, %p138
    %s140 = ssub.s32 %s12, %s19
    %p141 = scmp.eq.s32.totalorder %s140, 0
    %s143 = sadd.s32 %s142, 1
    %s144 = scalar_select %p141, %s142, %s143
    %p147 = pneg %p141
    %p148 = scmp.eq.s32.totalorder %s12, 1
    %p149 = por %p147, %p148
    %p150 = scmp.ne.s32.totalorder %s142, %s145
    %p151 = scmp.eq.s32.totalorder %s12, 0
    %p152 = por %p150, %p151
    %p153 = scmp.ne.s32.totalorder %s142, %s145
    %p154 = scmp.eq.s32.totalorder %s17, 1
    %p155 = por %p153, %p154
    %p156 = scmp.ne.s32.totalorder %s145, %s146
    %p157 = scmp.eq.s32.totalorder %s17, 0
    %p158 = por %p156, %p157
    %p159 = scmp.ne.s32.totalorder %s145, %s146
    %p160 = scmp.eq.s32.totalorder %s18, 1
    %p161 = por %p159, %p160
    %p163 = scmp.ne.s32.totalorder %s146, %s162
    %p164 = scmp.eq.s32.totalorder %s18, 0
    %p165 = por %p163, %p164
    %p166 = scmp.le.s32.totalorder 1, %s12
    %p167 = scmp.lt.s32.totalorder %s12, 3
    %p168 = pnand %p166, %p167
    %p169 = pneg %p168
    // Predicated region
    $region9: #{forward.11} parent=5 // pred_check
      _
    $region10: #{forward.11} parent=5 // pred_check_branch
      %171 = sbr.rel (%p168) target = $region12
    $region11: #{forward.11} parent=5 // pred_region
      %s172 = ssub.s32 %s12, 1
      // Predicated region
      $region13: #{forward.11} parent=11 // pred_check
        %p173 = pneg %p85
      $region14: #{forward.11} parent=11 // pred_check_branch
        %175 = sbr.rel (%p173) target = $region16
      $region15: #{forward.11} parent=11 // pred_region
        _
      $region16: #{forward.11} parent=11 // pred_fallthru
        _
      // Predicated region
      $region17: #{forward.11} parent=11 // pred_check
        %p176 = pneg %p106
      $region18: #{forward.11} parent=11 // pred_check_branch
        %178 = sbr.rel (%p176) target = $region20
      $region19: #{forward.11} parent=11 // pred_region
        _
      $region20: #{forward.11} parent=11 // pred_fallthru
        _
    $region12: #{forward.11} parent=5 // pred_fallthru
      _
    %p179 = scmp.lt.s32.totalorder %s12, 2
    // Predicated region
    $region21: #{forward.11} parent=5 // pred_check
      %p180 = pneg %p179
    $region22: #{forward.11} parent=5 // pred_check_branch
      %182 = sbr.rel (%p180) target = $region24
    $region23: #{forward.11} parent=5 // pred_region
      // Predicated region
      $region25: #{forward.11} parent=23 // pred_check
        %p183 = pneg %p32
      $region26: #{forward.11} parent=23 // pred_check_branch
        %185 = sbr.rel (%p183) target = $region28
      $region27: #{forward.11} parent=23 // pred_region
        %p186 = scmp.lt.s32.totalorder %s12, 1
        %s187 = scalar_select %p186, %s12, 1
        %s188 = smul.addr %s187, 2
        %s189 = smul.addr %s188, 8
        %s190 = scalar_lea.vmem %s0, %s189
      $region28: #{forward.11} parent=23 // pred_fallthru
        _
      // Predicated region
      $region29: #{forward.11} parent=23 // pred_check
        %p191 = pneg %p58
      $region30: #{forward.11} parent=23 // pred_check_branch
        %193 = sbr.rel (%p191) target = $region32
      $region31: #{forward.11} parent=23 // pred_region
        %p194 = scmp.lt.s32.totalorder %s12, 1
        %s195 = scalar_select %p194, %s12, 1
        %s196 = smul.addr %s195, 8
        %s197 = scalar_lea.vmem %s1, %s196
      $region32: #{forward.11} parent=23 // pred_fallthru
        _
    $region24: #{forward.11} parent=5 // pred_fallthru
      _
    %p198 = scmp.le.s32.totalorder 1, %s12
    %p199 = scmp.lt.s32.totalorder %s12, 3
    %p200 = pnand %p198, %p199
    %p201 = pneg %p200
    // Predicated region
    $region33: #{forward.11} parent=5 // pred_check
      _
    $region34: #{forward.11} parent=5 // pred_check_branch
      %203 = sbr.rel (%p200) target = $region36
    $region35: #{forward.11} parent=5 // pred_region
      %s204 = ssub.s32 %s12, 1
      %p205 = scmp.lt.s32.totalorder %s17, 1
      %s206 = scalar_select %p205, %s17, 1
      %s207 = smul.addr %s206, 2
      %s208 = smul.addr %s207, 8
      %s209 = scalar_lea.vmem %s0, %s208
      %p210 = pneg %p38
      %p211 = pneg %p35
      %p212 = scmp.lt.s32.totalorder %s17, 1
      %s213 = scalar_select %p212, %s17, 1
      %s214 = smul.addr %s213, 8
      %s215 = scalar_lea.vmem %s1, %s214
      %p216 = pneg %p64
      %p217 = pneg %p61
      %p218 = pneg %p85
      %p219 = pneg %p82
      %p220 = pneg %p106
      %p221 = pneg %p103
      %p222 = pneg %p132
      %p223 = pneg %p129
      %p224 = scmp.lt.s32.totalorder %s17, 1
      %s225 = scalar_select %p224, %s17, 1
      %s226 = smul.addr %s225, 2
      %s227 = smul.addr %s226, 8
      %s228 = scalar_lea.vmem %s4, %s227
      %p229 = pneg %p158
      %p230 = pneg %p155
      %p231 = scmp.lt.s32.totalorder %s17, 1
      %s232 = scalar_select %p231, %s17, 1
      %s233 = smul.addr %s232, 8
      %s234 = scalar_lea.vmem %s5, %s233
      %p235 = scmp.lt.s32.totalorder %s17, 1
      %s236 = scalar_select %p235, %s17, 1
      %s237 = smul.addr %s236, 2
      %s238 = smul.addr %s237, 8
      %s239 = scalar_lea.vmem %s0, %s238
      %p240 = scmp.lt.s32.totalorder %s17, 1
      %s241 = scalar_select %p240, %s17, 1
      %s242 = smul.addr %s241, 8
      %s243 = scalar_lea.vmem %s1, %s242
      %p244 = scmp.lt.s32.totalorder %s17, 1
      %s245 = scalar_select %p244, %s17, 1
      %s246 = smul.addr %s245, 2
      %s247 = smul.addr %s246, 8
      %s248 = scalar_lea.vmem %s4, %s247
      %p249 = scmp.lt.s32.totalorder %s17, 1
      %s250 = scalar_select %p249, %s17, 1
      %s251 = smul.addr %s250, 8
      %s252 = scalar_lea.vmem %s5, %s251
      %v254 = vld [vmem:[%s239] sm:$0xff]
      %v255 = vld [vmem:[%s239 + $0x8] sm:$0xff]
      %v256 = vld [vmem:[%s243] sm:$0xff]
      %257 = vrot.lane.b32.xlu0 %v254, 1
      %v258 = vpop.permute.xlu0 %257
      %259 = vrot.lane.b32.xlu0 %v255, 1
      %v260 = vpop.permute.xlu0 %259
      %261 = vrot.lane.b32.xlu0 %v256, 1
      %v262 = vpop.permute.xlu0 %261
      %v263 = vlaneseq
      %v264 = vand.u32 %v263, 127
      %vm265 = vcmp.ge.s32.totalorder %v264, 1
      %v266 = vsel %vm265, %v258, 0.0
      %v267 = vsel %vm265, %v260, 0.0
      %v268 = vsel %vm265, %v262, 0.0
      %269 = vrot.lane.b32.xlu0 %v254, 127
      %v270 = vpop.permute.xlu0 %269
      %271 = vrot.lane.b32.xlu0 %v255, 127
      %v272 = vpop.permute.xlu0 %271
      %273 = vrot.lane.b32.xlu0 %v256, 127
      %v274 = vpop.permute.xlu0 %273
      %vm275 = vcmp.lt.s32.totalorder %v264, 127
      %v276 = vsel %vm275, %v270, 0.0
      %v277 = vsel %vm275, %v272, 0.0
      %v278 = vsel %vm275, %v274, 0.0
      %v279 = vld [vmem:[%s2] sm:$0xff]
      %v280 = vld [vmem:[%s2 + $0x8] sm:$0xff]
      %v281 = vld [vmem:[%s2 + $0x10] sm:$0xff]
      %v282 = vpack.c.bf16 %v280, %v279
      %v283 = vpack.c.bf16 %v281, %v281
      %v284 = vpack.c.bf16 %v267, %v266
      %v285 = vpack.c.bf16 %v254, %v268
      %v286 = vpack.c.bf16 %v256, %v255
      %v287 = vpack.c.bf16 %v277, %v276
      %v288 = vpack.c.bf16 %v278, %v278
      %v289 = vld [vmem:[%s3] sm:$0xff]
      %v290 = vld [vmem:[%s3 + $0x8] sm:$0xff]
      %v291 = vld [vmem:[%s3 + $0x10] sm:$0xff]
      %293 = vset.pattern.permute.xlu0 0
      %294 = vperm.xlu0 %293, %v289
      %v295 = vpop.permute.xlu0 %294
      %298 = vset.pattern.permute.xlu0 0
      %299 = vperm.xlu0 %298, %v290
      %v300 = vpop.permute.xlu0 %299
      %303 = vset.pattern.permute.xlu0 0
      %304 = vperm.xlu0 %303, %v291
      %v305 = vpop.permute.xlu0 %304
      %vm307 = vcmask 588800
      %v309 = vsel %vm307, %v282, 0
      %v312 = vsel %vm307, %v283, 0
      %vm314 = vcmask 1043456
      %v316 = vsel %vm314, %v288, 0
      %318 = vmatprep.subr.bf16.mxu0 0
      %319 = vmatpush1.bf16.msra.mxu0 %v284
      %320 = vmatprep.subr.bf16.mxu0 0
      %321 = vmatpush1.bf16.msra.mxu0 %v285
      %322 = vmatprep.subr.bf16.mxu0 0
      %323 = vmatpush1.bf16.msra.mxu0 %v286
      %324 = vmatprep.subr.bf16.mxu0 0
      %325 = vmatpush1.bf16.msra.mxu0 %v287
      %326 = vmatprep.subr.bf16.mxu0 0
      %327 = vmatpush1.bf16.msra.mxu0 %v316
      %328 = vmatprep.subr.bf16.mxu0 0
      %329 = vmatpush1.bf16.msra.mxu0 0
      %330 = vmatprep.subr.bf16.mxu0 0
      %331 = vmatpush1.bf16.msra.mxu0 0
      %332 = vmatprep.subr.bf16.mxu0 0
      %333 = vmatpush1.bf16.msra.mxu0 0
      %334 = vmatprep.subr.bf16.mxu0 0
      %335 = vmatpush1.bf16.msra.mxu0 0
      %336 = vmatprep.subr.bf16.mxu0 0
      %337 = vmatpush1.bf16.msra.mxu0 0
      %338 = vmatprep.subr.bf16.mxu0 0
      %339 = vmatpush1.bf16.msra.mxu0 0
      %340 = vmatprep.subr.bf16.mxu0 0
      %341 = vmatpush1.bf16.msra.mxu0 0
      %342 = vmatprep.subr.bf16.mxu0 0
      %343 = vmatpush1.bf16.msra.mxu0 0
      %344 = vmatprep.subr.bf16.mxu0 0
      %345 = vmatpush1.bf16.msra.mxu0 0
      %346 = vmatprep.subr.bf16.mxu0 0
      %347 = vmatpush1.bf16.msra.mxu0 0
      %348 = vmatprep.subr.bf16.mxu0 0
      %349 = vmatpush1.bf16.msra.mxu0 0
      %350 = vmatprep.mubr.bf16.mxu0 0
      %351 = vmatmul.mubr.bf16.gmra.mrb[0].mxu0 %v309
      %v352 = vpop.f32.mrb[0].mxu0
      %v353 = vadd.f32 %v295, %v352
      %v354 = vpop.f32.mrb[0].mxu0
      %v355 = vpop.f32.mrb[0].mxu0
      %v356 = vadd.f32 %v300, %v355
      %v357 = vpop.f32.mrb[0].mxu0
      %358 = vmatprep.mubr.bf16.mxu0 0
      %359 = vmatmul.mubr.bf16.gmra.mrb[0].mxu0 %v312
      %v360 = vpop.f32.mrb[0].mxu0
      %v361 = vadd.f32 %v305, %v360
      %v362 = vpop.f32.mrb[0].mxu0
      %v363 = vpop.f32.mrb[0].mxu0
      %v364 = vpop.f32.mrb[0].mxu0
      %365 = vdwg.mxu0
      %366 = vst [vmem:[%s248] sm:$0xff] %v353
      %367 = vst [vmem:[%s248 + $0x8] sm:$0xff] %v356
      %368 = vst [vmem:[%s252] sm:$0xff] %v361
      %p369 = scmp.lt.s32.totalorder %s17, 1
      %s370 = scalar_select %p369, %s17, 1
      %s371 = smul.addr %s370, 2
      %s372 = smul.addr %s371, 8
      %s373 = scalar_lea.vmem %s4, %s372
      %p374 = scmp.lt.s32.totalorder %s17, 1
      %s375 = scalar_select %p374, %s17, 1
      %s376 = smul.addr %s375, 8
      %s377 = scalar_lea.vmem %s5, %s376
      // Predicated region
      $region37: #{forward.11} parent=35 // pred_check
        %p378 = pneg %p129
      $region38: #{forward.11} parent=35 // pred_check_branch
        %380 = sbr.rel (%p378) target = $region40
      $region39: #{forward.11} parent=35 // pred_region
        _
      $region40: #{forward.11} parent=35 // pred_fallthru
        _
      // Predicated region
      $region41: #{forward.11} parent=35 // pred_check
        %p381 = pneg %p155
      $region42: #{forward.11} parent=35 // pred_check_branch
        %383 = sbr.rel (%p381) target = $region44
      $region43: #{forward.11} parent=35 // pred_region
        _
      $region44: #{forward.11} parent=35 // pred_fallthru
        _
    $region36: #{forward.11} parent=5 // pred_fallthru
      _
    %p384 = scmp.le.s32.totalorder 2, %s12
    // Predicated region
    $region45: #{forward.11} parent=5 // pred_check
      %p385 = pneg %p384
    $region46: #{forward.11} parent=5 // pred_check_branch
      %387 = sbr.rel (%p385) target = $region48
    $region47: #{forward.11} parent=5 // pred_region
      %s388 = ssub.s32 %s12, 2
      // Predicated region
      $region49: #{forward.11} parent=47 // pred_check
        %p389 = pneg %p135
      $region50: #{forward.11} parent=47 // pred_check_branch
        %391 = sbr.rel (%p389) target = $region52
      $region51: #{forward.11} parent=47 // pred_region
        %p392 = scmp.lt.s32.totalorder %s18, 1
        %s393 = scalar_select %p392, %s18, 1
        %s394 = smul.addr %s393, 2
        %s395 = smul.addr %s394, 8
        %s396 = scalar_lea.vmem %s4, %s395
      $region52: #{forward.11} parent=47 // pred_fallthru
        _
      // Predicated region
      $region53: #{forward.11} parent=47 // pred_check
        %p397 = pneg %p161
      $region54: #{forward.11} parent=47 // pred_check_branch
        %399 = sbr.rel (%p397) target = $region56
      $region55: #{forward.11} parent=47 // pred_region
        %p400 = scmp.lt.s32.totalorder %s18, 1
        %s401 = scalar_select %p400, %s18, 1
        %s402 = smul.addr %s401, 8
        %s403 = scalar_lea.vmem %s5, %s402
      $region56: #{forward.11} parent=47 // pred_fallthru
        _
    $region48: #{forward.11} parent=5 // pred_fallthru
      _
  $region6: #{forward.11} parent=0 // loop_footer
    %s16 = sadd.s32 1, %s12
  $region7: #{forward.11} parent=0 // loop_footer_branch
    %11 = sbr.rel target = $region3
  $region8: #{forward.11} parent=0 // loop_exit
    _

// kernel: forward.17
$region0: #{forward.17}
  #allocation0 [shape = 'u32[]', space=smem, size = 0x4, offset = 0x4, fixed_abs, tag = 'smem constant byte address 0x4 - core index']
  #allocation1 [shape = 'u32[144,128]{1,0:T(1,128)}', space=vmem, size = 0x12000, scoped, tag = 'internal scratch']
  %s0 = inlined_call_operand.vmem [shape: f32[2,16,128], index: 0, kind: input, shape index: {}]
  %s1 = inlined_call_operand.vmem [shape: f32[2,8,128], index: 1, kind: input, shape index: {}]
  %s2 = inlined_call_operand.vmem [shape: f32[24,72], index: 2, kind: input, shape index: {}]
  %s3 = inlined_call_operand.vmem [shape: f32[24,1], index: 3, kind: input, shape index: {}]
  %s4 = inlined_call_operand.hbm [shape: f32[2,16,128], index: 4, kind: output, shape index: {0}]
  %s5 = inlined_call_operand.hbm [shape: f32[2,8,128], index: 5, kind: output, shape index: {1}]
  %6 = xla_tuple %s4, %s5
  %s7 = sld [smem:[#allocation0]]
  $region57: #{forward.17} parent=0
    _
  %s9 = ssub.s32 1, %s7
  %s10 = scalar_select 0, %s9, %s7
  $region1: #{forward.17} parent=0
    #allocation2 [shape = 'u8[16384]{0}', space=vmem, size = 0x4000, scoped, tag = 'output window, operand 0']
    #allocation3 [shape = 's32[2]{0}', space=sflag, size = 0x8, scoped, tag = 'scoped memory for forward.17']
    #allocation4 [shape = 'u8[8192]{0}', space=vmem, size = 0x2000, scoped, tag = 'output window, operand 1']
    #allocation5 [shape = 's32[2]{0}', space=sflag, size = 0x8, scoped, tag = 'scoped memory for forward.17']
    %11 = vsyncpa [#allocation3], 0
    %s12 = scalar_lea.sflag [#allocation3], 1
    %13 = vsyncpa %s12, 0
    %14 = vsyncpa [#allocation5], 0
    %s15 = scalar_lea.sflag [#allocation5], 1
    %16 = vsyncpa %s15, 0
    loop: start=0, step=1, limit=4
    $region2: #{forward.17} parent=1 // loop_pre_header
      _
    $region3: #{forward.17} parent=1 // loop_header
      %s18 = sphi 0, %s22
      %p19 = scmp.ge.s32.totalorder %s18, 4
      %s28 = sphi 0, %s30
      %s31 = sphi 0, %s28
      %s32 = sphi 0, %s31
      %s48 = sphi 0, %s32
      %s54 = sphi 0, %s56
      %s57 = sphi 0, %s54
      %s58 = sphi 0, %s57
      %s74 = sphi 0, %s58
      %s78 = sphi 0, %s78
      %s80 = sphi 0, %s78
      %s81 = sphi 0, %s80
      %s95 = sphi 0, %s81
      %s99 = sphi 0, %s99
      %s101 = sphi 0, %s99
      %s102 = sphi 0, %s101
      %s116 = sphi 0, %s102
      %s122 = sphi 0, %s124
      %s125 = sphi 0, %s122
      %s126 = sphi 0, %s125
      %s142 = sphi 0, %s126
      %s148 = sphi 0, %s150
      %s151 = sphi 0, %s148
      %s152 = sphi 0, %s151
      %s168 = sphi 0, %s152
    $region4: #{forward.17} parent=1 // loop_header_branch
      %21 = sbr.rel (%p19) target = $region8
    $region5: #{forward.17} parent=1 // loop_body
      %s23 = ssub.s32 %s18, 1
      %s24 = ssub.s32 %s18, 2
      %s25 = sadd.s32 %s18, 1
      %s26 = ssub.s32 %s18, %s25
      %p27 = scmp.eq.s32.totalorder %s26, 0
      %s29 = sadd.s32 %s28, 1
      %s30 = scalar_select %p27, %s28, %s29
      %p33 = pneg %p27
      %p34 = scmp.eq.s32.totalorder %s18, 1
      %p35 = por %p33, %p34
      %p36 = scmp.ne.s32.totalorder %s28, %s31
      %p37 = scmp.eq.s32.totalorder %s18, 0
      %p38 = por %p36, %p37
      %p39 = scmp.ne.s32.totalorder %s28, %s31
      %p40 = scmp.eq.s32.totalorder %s23, 1
      %p41 = por %p39, %p40
      %p42 = scmp.ne.s32.totalorder %s31, %s32
      %p43 = scmp.eq.s32.totalorder %s23, 0
      %p44 = por %p42, %p43
      %p45 = scmp.ne.s32.totalorder %s31, %s32
      %p46 = scmp.eq.s32.totalorder %s24, 1
      %p47 = por %p45, %p46
      %p49 = scmp.ne.s32.totalorder %s32, %s48
      %p50 = scmp.eq.s32.totalorder %s24, 0
      %p51 = por %p49, %p50
      %s52 = ssub.s32 %s18, %s25
      %p53 = scmp.eq.s32.totalorder %s52, 0
      %s55 = sadd.s32 %s54, 1
      %s56 = scalar_select %p53, %s54, %s55
      %p59 = pneg %p53
      %p60 = scmp.eq.s32.totalorder %s18, 1
      %p61 = por %p59, %p60
      %p62 = scmp.ne.s32.totalorder %s54, %s57
      %p63 = scmp.eq.s32.totalorder %s18, 0
      %p64 = por %p62, %p63
      %p65 = scmp.ne.s32.totalorder %s54, %s57
      %p66 = scmp.eq.s32.totalorder %s23, 1
      %p67 = por %p65, %p66
      %p68 = scmp.ne.s32.totalorder %s57, %s58
      %p69 = scmp.eq.s32.totalorder %s23, 0
      %p70 = por %p68, %p69
      %p71 = scmp.ne.s32.totalorder %s57, %s58
      %p72 = scmp.eq.s32.totalorder %s24, 1
      %p73 = por %p71, %p72
      %p75 = scmp.ne.s32.totalorder %s58, %s74
      %p76 = scmp.eq.s32.totalorder %s24, 0
      %p77 = por %p75, %p76
      %s79 = sadd.s32 %s78, 1
      %p82 = scmp.eq.s32.totalorder %s18, 1
      %p83 = scmp.ne.s32.totalorder %s78, %s80
      %p84 = scmp.eq.s32.totalorder %s18, 0
      %p85 = por %p83, %p84
      %p86 = scmp.ne.s32.totalorder %s78, %s80
      %p87 = scmp.eq.s32.totalorder %s23, 1
      %p88 = por %p86, %p87
      %p89 = scmp.ne.s32.totalorder %s80, %s81
      %p90 = scmp.eq.s32.totalorder %s23, 0
      %p91 = por %p89, %p90
      %p92 = scmp.ne.s32.totalorder %s80, %s81
      %p93 = scmp.eq.s32.totalorder %s24, 1
      %p94 = por %p92, %p93
      %p96 = scmp.ne.s32.totalorder %s81, %s95
      %p97 = scmp.eq.s32.totalorder %s24, 0
      %p98 = por %p96, %p97
      %s100 = sadd.s32 %s99, 1
      %p103 = scmp.eq.s32.totalorder %s18, 1
      %p104 = scmp.ne.s32.totalorder %s99, %s101
      %p105 = scmp.eq.s32.totalorder %s18, 0
      %p106 = por %p104, %p105
      %p107 = scmp.ne.s32.totalorder %s99, %s101
      %p108 = scmp.eq.s32.totalorder %s23, 1
      %p109 = por %p107, %p108
      %p110 = scmp.ne.s32.totalorder %s101, %s102
      %p111 = scmp.eq.s32.totalorder %s23, 0
      %p112 = por %p110, %p111
      %p113 = scmp.ne.s32.totalorder %s101, %s102
      %p114 = scmp.eq.s32.totalorder %s24, 1
      %p115 = por %p113, %p114
      %p117 = scmp.ne.s32.totalorder %s102, %s116
      %p118 = scmp.eq.s32.totalorder %s24, 0
      %p119 = por %p117, %p118
      %s120 = ssub.s32 %s18, %s25
      %p121 = scmp.eq.s32.totalorder %s120, 0
      %s123 = sadd.s32 %s122, 1
      %s124 = scalar_select %p121, %s122, %s123
      %p127 = pneg %p121
      %p128 = scmp.eq.s32.totalorder %s18, 1
      %p129 = por %p127, %p128
      %p130 = scmp.ne.s32.totalorder %s122, %s125
      %p131 = scmp.eq.s32.totalorder %s18, 0
      %p132 = por %p130, %p131
      %p133 = scmp.ne.s32.totalorder %s122, %s125
      %p134 = scmp.eq.s32.totalorder %s23, 1
      %p135 = por %p133, %p134
      %p136 = scmp.ne.s32.totalorder %s125, %s126
      %p137 = scmp.eq.s32.totalorder %s23, 0
      %p138 = por %p136, %p137
      %p139 = scmp.ne.s32.totalorder %s125, %s126
      %p140 = scmp.eq.s32.totalorder %s24, 1
      %p141 = por %p139, %p140
      %p143 = scmp.ne.s32.totalorder %s126, %s142
      %p144 = scmp.eq.s32.totalorder %s24, 0
      %p145 = por %p143, %p144
      %s146 = ssub.s32 %s18, %s25
      %p147 = scmp.eq.s32.totalorder %s146, 0
      %s149 = sadd.s32 %s148, 1
      %s150 = scalar_select %p147, %s148, %s149
      %p153 = pneg %p147
      %p154 = scmp.eq.s32.totalorder %s18, 1
      %p155 = por %p153, %p154
      %p156 = scmp.ne.s32.totalorder %s148, %s151
      %p157 = scmp.eq.s32.totalorder %s18, 0
      %p158 = por %p156, %p157
      %p159 = scmp.ne.s32.totalorder %s148, %s151
      %p160 = scmp.eq.s32.totalorder %s23, 1
      %p161 = por %p159, %p160
      %p162 = scmp.ne.s32.totalorder %s151, %s152
      %p163 = scmp.eq.s32.totalorder %s23, 0
      %p164 = por %p162, %p163
      %p165 = scmp.ne.s32.totalorder %s151, %s152
      %p166 = scmp.eq.s32.totalorder %s24, 1
      %p167 = por %p165, %p166
      %p169 = scmp.ne.s32.totalorder %s152, %s168
      %p170 = scmp.eq.s32.totalorder %s24, 0
      %p171 = por %p169, %p170
      %p172 = scmp.le.s32.totalorder 1, %s18
      %p173 = scmp.lt.s32.totalorder %s18, 3
      %p174 = pnand %p172, %p173
      %p175 = pneg %p174
      // Predicated region
      $region9: #{forward.17} parent=5 // pred_check
        _
      $region10: #{forward.17} parent=5 // pred_check_branch
        %177 = sbr.rel (%p174) target = $region12
      $region11: #{forward.17} parent=5 // pred_region
        %s178 = ssub.s32 %s18, 1
        // Predicated region
        $region13: #{forward.17} parent=11 // pred_check
          %p179 = pneg %p91
        $region14: #{forward.17} parent=11 // pred_check_branch
          %181 = sbr.rel (%p179) target = $region16
        $region15: #{forward.17} parent=11 // pred_region
          _
        $region16: #{forward.17} parent=11 // pred_fallthru
          _
        // Predicated region
        $region17: #{forward.17} parent=11 // pred_check
          %p182 = pneg %p112
        $region18: #{forward.17} parent=11 // pred_check_branch
          %184 = sbr.rel (%p182) target = $region20
        $region19: #{forward.17} parent=11 // pred_region
          _
        $region20: #{forward.17} parent=11 // pred_fallthru
          _
      $region12: #{forward.17} parent=5 // pred_fallthru
        _
      %p185 = scmp.lt.s32.totalorder %s18, 2
      // Predicated region
      $region21: #{forward.17} parent=5 // pred_check
        %p186 = pneg %p185
      $region22: #{forward.17} parent=5 // pred_check_branch
        %188 = sbr.rel (%p186) target = $region24
      $region23: #{forward.17} parent=5 // pred_region
        // Predicated region
        $region25: #{forward.17} parent=23 // pred_check
          %p189 = pneg %p38
        $region26: #{forward.17} parent=23 // pred_check_branch
          %191 = sbr.rel (%p189) target = $region28
        $region27: #{forward.17} parent=23 // pred_region
          %p192 = scmp.lt.s32.totalorder %s18, 1
          %s193 = scalar_select %p192, %s18, 1
          %s194 = smul.addr %s193, 2
          %s195 = smul.addr %s194, 8
          %s196 = scalar_lea.vmem %s0, %s195
        $region28: #{forward.17} parent=23 // pred_fallthru
          _
        // Predicated region
        $region29: #{forward.17} parent=23 // pred_check
          %p197 = pneg %p64
        $region30: #{forward.17} parent=23 // pred_check_branch
          %199 = sbr.rel (%p197) target = $region32
        $region31: #{forward.17} parent=23 // pred_region
          %p200 = scmp.lt.s32.totalorder %s18, 1
          %s201 = scalar_select %p200, %s18, 1
          %s202 = smul.addr %s201, 8
          %s203 = scalar_lea.vmem %s1, %s202
        $region32: #{forward.17} parent=23 // pred_fallthru
          _
      $region24: #{forward.17} parent=5 // pred_fallthru
        _
      %p204 = scmp.le.s32.totalorder 1, %s18
      %p205 = scmp.lt.s32.totalorder %s18, 3
      %p206 = pnand %p204, %p205
      %p207 = pneg %p206
      // Predicated region
      $region33: #{forward.17} parent=5 // pred_check
        _
      $region34: #{forward.17} parent=5 // pred_check_branch
        %209 = sbr.rel (%p206) target = $region36
      $region35: #{forward.17} parent=5 // pred_region
        %s210 = ssub.s32 %s18, 1
        %p211 = scmp.lt.s32.totalorder %s23, 1
        %s212 = scalar_select %p211, %s23, 1
        %s213 = smul.addr %s212, 2
        %s214 = smul.addr %s213, 8
        %s215 = scalar_lea.vmem %s0, %s214
        %p216 = pneg %p44
        %p217 = pneg %p41
        %p218 = scmp.lt.s32.totalorder %s23, 1
        %s219 = scalar_select %p218, %s23, 1
        %s220 = smul.addr %s219, 8
        %s221 = scalar_lea.vmem %s1, %s220
        %p222 = pneg %p70
        %p223 = pneg %p67
        %p224 = pneg %p91
        %p225 = pneg %p88
        %p226 = pneg %p112
        %p227 = pneg %p109
        %p228 = pneg %p138
        %p229 = pneg %p135
        %s230 = sand.u32 %s125, 1
        %s231 = scalar_lea.sflag [#allocation3], %s230
        %s232 = sand.u32 %s125, 1
        %s233 = smul.addr %s232, 16
        %s234 = scalar_lea.vmem [#allocation2], %s233
        %p235 = pneg %p164
        %p236 = pneg %p161
        %s237 = sand.u32 %s151, 1
        %s238 = scalar_lea.sflag [#allocation5], %s237
        %s239 = sand.u32 %s151, 1
        %s240 = smul.addr %s239, 8
        %s241 = scalar_lea.vmem [#allocation4], %s240
        %p242 = scmp.lt.s32.totalorder %s23, 1
        %s243 = scalar_select %p242, %s23, 1
        %s244 = smul.addr %s243, 2
        %s245 = smul.addr %s244, 8
        %s246 = scalar_lea.vmem %s0, %s245
        %p247 = scmp.lt.s32.totalorder %s23, 1
        %s248 = scalar_select %p247, %s23, 1
        %s249 = smul.addr %s248, 8
        %s250 = scalar_lea.vmem %s1, %s249
        %v252 = vld [vmem:[%s246] sm:$0xff]
        %v253 = vld [vmem:[%s246 + $0x8] sm:$0xff]
        %v254 = vld [vmem:[%s250] sm:$0xff]
        %255 = vrot.lane.b32.xlu0 %v252, 1
        %v256 = vpop.permute.xlu0 %255
        %257 = vrot.lane.b32.xlu0 %v253, 1
        %v258 = vpop.permute.xlu0 %257
        %259 = vrot.lane.b32.xlu0 %v254, 1
        %v260 = vpop.permute.xlu0 %259
        %v261 = vlaneseq
        %v262 = vand.u32 %v261, 127
        %vm263 = vcmp.ge.s32.totalorder %v262, 1
        %v264 = vsel %vm263, %v256, 0.0
        %v265 = vsel %vm263, %v258, 0.0
        %v266 = vsel %vm263, %v260, 0.0
        %267 = vrot.lane.b32.xlu0 %v252, 127
        %v268 = vpop.permute.xlu0 %267
        %269 = vrot.lane.b32.xlu0 %v253, 127
        %v270 = vpop.permute.xlu0 %269
        %271 = vrot.lane.b32.xlu0 %v254, 127
        %v272 = vpop.permute.xlu0 %271
        %vm273 = vcmp.lt.s32.totalorder %v262, 127
        %v274 = vsel %vm273, %v268, 0.0
        %v275 = vsel %vm273, %v270, 0.0
        %v276 = vsel %vm273, %v272, 0.0
        %v277 = vld [vmem:[%s2] sm:$0xff]
        %v278 = vld [vmem:[%s2 + $0x8] sm:$0xff]
        %v279 = vld [vmem:[%s2 + $0x10] sm:$0xff]
        %v280 = vpack.c.bf16 %v278, %v277
        %v281 = vpack.c.bf16 %v279, %v279
        %v282 = vpack.c.bf16 %v265, %v264
        %v283 = vpack.c.bf16 %v252, %v266
        %v284 = vpack.c.bf16 %v254, %v253
        %v285 = vpack.c.bf16 %v275, %v274
        %v286 = vpack.c.bf16 %v276, %v276
        %v287 = vld [vmem:[%s3] sm:$0xff]
        %v288 = vld [vmem:[%s3 + $0x8] sm:$0xff]
        %v289 = vld [vmem:[%s3 + $0x10] sm:$0xff]
        %291 = vset.pattern.permute.xlu0 0
        %292 = vperm.xlu0 %291, %v287
        %v293 = vpop.permute.xlu0 %292
        %296 = vset.pattern.permute.xlu0 0
        %297 = vperm.xlu0 %296, %v288
        %v298 = vpop.permute.xlu0 %297
        %301 = vset.pattern.permute.xlu0 0
        %302 = vperm.xlu0 %301, %v289
        %v303 = vpop.permute.xlu0 %302
        %vm305 = vcmask 588800
        %v307 = vsel %vm305, %v280, 0
        %v310 = vsel %vm305, %v281, 0
        %vm312 = vcmask 1043456
        %v314 = vsel %vm312, %v286, 0
        %316 = vmatprep.subr.bf16.mxu0 0
        %317 = vmatpush1.bf16.msra.mxu0 %v282
        %318 = vmatprep.subr.bf16.mxu0 0
        %319 = vmatpush1.bf16.msra.mxu0 %v283
        %320 = vmatprep.subr.bf16.mxu0 0
        %321 = vmatpush1.bf16.msra.mxu0 %v284
        %322 = vmatprep.subr.bf16.mxu0 0
        %323 = vmatpush1.bf16.msra.mxu0 %v285
        %324 = vmatprep.subr.bf16.mxu0 0
        %325 = vmatpush1.bf16.msra.mxu0 %v314
        %326 = vmatprep.subr.bf16.mxu0 0
        %327 = vmatpush1.bf16.msra.mxu0 0
        %328 = vmatprep.subr.bf16.mxu0 0
        %329 = vmatpush1.bf16.msra.mxu0 0
        %330 = vmatprep.subr.bf16.mxu0 0
        %331 = vmatpush1.bf16.msra.mxu0 0
        %332 = vmatprep.subr.bf16.mxu0 0
        %333 = vmatpush1.bf16.msra.mxu0 0
        %334 = vmatprep.subr.bf16.mxu0 0
        %335 = vmatpush1.bf16.msra.mxu0 0
        %336 = vmatprep.subr.bf16.mxu0 0
        %337 = vmatpush1.bf16.msra.mxu0 0
        %338 = vmatprep.subr.bf16.mxu0 0
        %339 = vmatpush1.bf16.msra.mxu0 0
        %340 = vmatprep.subr.bf16.mxu0 0
        %341 = vmatpush1.bf16.msra.mxu0 0
        %342 = vmatprep.subr.bf16.mxu0 0
        %343 = vmatpush1.bf16.msra.mxu0 0
        %344 = vmatprep.subr.bf16.mxu0 0
        %345 = vmatpush1.bf16.msra.mxu0 0
        %346 = vmatprep.subr.bf16.mxu0 0
        %347 = vmatpush1.bf16.msra.mxu0 0
        %348 = vmatprep.mubr.bf16.mxu0 0
        %349 = vmatmul.mubr.bf16.gmra.mrb[0].mxu0 %v307
        %v350 = vpop.f32.mrb[0].mxu0
        %v351 = vadd.f32 %v293, %v350
        %v352 = vpop.f32.mrb[0].mxu0
        %v353 = vpop.f32.mrb[0].mxu0
        %v354 = vadd.f32 %v298, %v353
        %v355 = vpop.f32.mrb[0].mxu0
        %356 = vmatprep.mubr.bf16.mxu0 0
        %357 = vmatmul.mubr.bf16.gmra.mrb[0].mxu0 %v310
        %v358 = vpop.f32.mrb[0].mxu0
        %v359 = vadd.f32 %v303, %v358
        %v360 = vpop.f32.mrb[0].mxu0
        %v361 = vpop.f32.mrb[0].mxu0
        %v362 = vpop.f32.mrb[0].mxu0
        %363 = vdwg.mxu0
        %364 = vst [vmem:[%s234] sm:$0xff] %v351
        %365 = vst [vmem:[%s234 + $0x8] sm:$0xff] %v354
        %366 = vst [vmem:[%s241] sm:$0xff] %v359
        %s367 = sand.u32 %s125, 1
        %s368 = scalar_lea.sflag [#allocation3], %s367
        %s369 = sand.u32 %s125, 1
        %s370 = smul.addr %s369, 16
        %s371 = scalar_lea.vmem [#allocation2], %s370
        %s372 = sand.u32 %s151, 1
        %s373 = scalar_lea.sflag [#allocation5], %s372
        %s374 = sand.u32 %s151, 1
        %s375 = smul.addr %s374, 8
        %s376 = scalar_lea.vmem [#allocation4], %s375
        // Predicated region
        $region37: #{forward.17} parent=35 // pred_check
          %p377 = pneg %p135
        $region38: #{forward.17} parent=35 // pred_check_branch
          %379 = sbr.rel (%p377) target = $region40
        $region39: #{forward.17} parent=35 // pred_region
          %s381 = ssub.s32 256, 256
          %382 = vsyncadd %s368, %s381
          %s383 = smul.addr %s23, 2
          %s384 = smul.addr %s383, 128
          %s385 = scalar_lea.hbm %s4, %s384
          %s386 = sshll.u32 %s371, 4
          %s387 = int_to_ptr.vmem [resolvable:$true] %s386
          %392 = dma.vmem_to_hbm [thread:$0]  %s387, 256, %s385, %s368, 128, 128, 8
        $region40: #{forward.17} parent=35 // pred_fallthru
          _
        // Predicated region
        $region41: #{forward.17} parent=35 // pred_check
          %p393 = pneg %p161
        $region42: #{forward.17} parent=35 // pred_check_branch
          %395 = sbr.rel (%p393) target = $region44
        $region43: #{forward.17} parent=35 // pred_region
          %s397 = ssub.s32 128, 128
          %398 = vsyncadd %s373, %s397
          %s399 = smul.addr %s23, 128
          %s400 = scalar_lea.hbm %s5, %s399
          %s402 = sshll.u32 %s376, 4
          %s403 = int_to_ptr.vmem [resolvable:$true] %s402
          %405 = dma.vmem_to_hbm [thread:$0]  %s403, 128, %s400, %s373
        $region44: #{forward.17} parent=35 // pred_fallthru
          _
      $region36: #{forward.17} parent=5 // pred_fallthru
        _
      %p406 = scmp.le.s32.totalorder 2, %s18
      // Predicated region
      $region45: #{forward.17} parent=5 // pred_check
        %p407 = pneg %p406
      $region46: #{forward.17} parent=5 // pred_check_branch
        %409 = sbr.rel (%p407) target = $region48
      $region47: #{forward.17} parent=5 // pred_region
        %s410 = ssub.s32 %s18, 2
        // Predicated region
        $region49: #{forward.17} parent=47 // pred_check
          %p411 = pneg %p141
        $region50: #{forward.17} parent=47 // pred_check_branch
          %413 = sbr.rel (%p411) target = $region52
        $region51: #{forward.17} parent=47 // pred_region
          %s414 = sand.u32 %s126, 1
          %s415 = scalar_lea.sflag [#allocation3], %s414
          %s416 = sand.u32 %s126, 1
          %s417 = smul.addr %s416, 16
          %s418 = scalar_lea.vmem [#allocation2], %s417
          %419 = dma.done %s415, 256
        $region52: #{forward.17} parent=47 // pred_fallthru
          _
        // Predicated region
        $region53: #{forward.17} parent=47 // pred_check
          %p420 = pneg %p167
        $region54: #{forward.17} parent=47 // pred_check_branch
          %422 = sbr.rel (%p420) target = $region56
        $region55: #{forward.17} parent=47 // pred_region
          %s423 = sand.u32 %s152, 1
          %s424 = scalar_lea.sflag [#allocation5], %s423
          %s425 = sand.u32 %s152, 1
          %s426 = smul.addr %s425, 8
          %s427 = scalar_lea.vmem [#allocation4], %s426
          %428 = dma.done %s424, 128
        $region56: #{forward.17} parent=47 // pred_fallthru
          _
      $region48: #{forward.17} parent=5 // pred_fallthru
        _
    $region6: #{forward.17} parent=1 // loop_footer
      %s22 = sadd.s32 1, %s18
    $region7: #{forward.17} parent=1 // loop_footer_branch
      %17 = sbr.rel target = $region3
    $region8: #{forward.17} parent=1 // loop_exit
      _
    %429 = vsyncpa [#allocation3], 1
    %s430 = scalar_lea.sflag [#allocation3], 1
    %431 = vsyncpa %s430, 1
    %432 = vsyncpa [#allocation5], 1
    %s433 = scalar_lea.sflag [#allocation5], 1
    %434 = vsyncpa %s433, 1

// kernel: forward.10
$region0: #{forward.10}
  #allocation0 [shape = 'u32[]', space=smem, size = 0x4, offset = 0x4, fixed_abs, tag = 'smem constant byte address 0x4 - core index']
  #allocation1 [shape = 'u32[144,128]{1,0:T(1,128)}', space=vmem, size = 0x12000, scoped, tag = 'internal scratch']
  %s0 = inlined_call_operand.vmem [shape: f32[2,8,128], index: 0, kind: input, shape index: {}]
  %s1 = inlined_call_operand.vmem [shape: f32[8,8], index: 1, kind: input, shape index: {}]
  %s2 = inlined_call_operand.vmem [shape: f32[8,1], index: 2, kind: input, shape index: {}, may-alias: {2,12}]
  %s3 = inlined_call_operand.vmem [shape: f32[8,8], index: 3, kind: input, shape index: {}]
  %s4 = inlined_call_operand.vmem [shape: f32[2,8,8], index: 4, kind: input, shape index: {}]
  %s5 = inlined_call_operand.vmem [shape: f32[2,8,1], index: 5, kind: input, shape index: {}, may-alias: {5,7}]
  %s6 = inlined_call_operand.vmem [shape: f32[2,8,24], index: 6, kind: input, shape index: {}]
  %s7 = inlined_call_operand.vmem [shape: f32[2,8,1], index: 7, kind: input, shape index: {}, may-alias: {5,7}]
  %s8 = inlined_call_operand.vmem [shape: f32[8,8], index: 8, kind: input, shape index: {}]
  %s9 = inlined_call_operand.vmem [shape: f32[16,1], index: 9, kind: input, shape index: {}]
  %s10 = inlined_call_operand.vmem [shape: f32[16,1], index: 10, kind: input, shape index: {}]
  %s11 = inlined_call_operand.vmem [shape: f32[8,16], index: 11, kind: input, shape index: {}]
  %s12 = inlined_call_operand.vmem [shape: f32[8,1], index: 12, kind: input, shape index: {}, may-alias: {2,12}]
  %s13 = inlined_call_operand.vmem [shape: f32[2,8,128], index: 13, kind: output, shape index: {}]
  %s14 = sld [smem:[#allocation0]]
  $region85: #{forward.10} parent=0
    _
  %s16 = ssub.s32 1, %s14
  %s17 = scalar_select 0, %s16, %s14
  loop: start=0, step=1, limit=4
  $region2: #{forward.10} parent=0 // loop_pre_header
    _
  $region3: #{forward.10} parent=0 // loop_header
    %s19 = sphi 0, %s23
    %p20 = scmp.ge.s32.totalorder %s19, 4
    %s29 = sphi 0, %s31
    %s32 = sphi 0, %s29
    %s33 = sphi 0, %s32
    %s49 = sphi 0, %s33
    %s53 = sphi 0, %s53
    %s55 = sphi 0, %s53
    %s56 = sphi 0, %s55
    %s70 = sphi 0, %s56
    %s74 = sphi 0, %s74
    %s76 = sphi 0, %s74
    %s77 = sphi 0, %s76
    %s91 = sphi 0, %s77
    %s95 = sphi 0, %s95
    %s97 = sphi 0, %s95
    %s98 = sphi 0, %s97
    %s112 = sphi 0, %s98
    %s116 = sphi 0, %s116
    %s118 = sphi 0, %s116
    %s119 = sphi 0, %s118
    %s133 = sphi 0, %s119
    %s137 = sphi 0, %s137
    %s139 = sphi 0, %s137
    %s140 = sphi 0, %s139
    %s154 = sphi 0, %s140
    %s158 = sphi 0, %s158
    %s160 = sphi 0, %s158
    %s161 = sphi 0, %s160
    %s175 = sphi 0, %s161
    %s179 = sphi 0, %s179
    %s181 = sphi 0, %s179
    %s182 = sphi 0, %s181
    %s196 = sphi 0, %s182
    %s200 = sphi 0, %s200
    %s202 = sphi 0, %s200
    %s203 = sphi 0, %s202
    %s217 = sphi 0, %s203
    %s221 = sphi 0, %s221
    %s223 = sphi 0, %s221
    %s224 = sphi 0, %s223
    %s238 = sphi 0, %s224
    %s242 = sphi 0, %s242
    %s244 = sphi 0, %s242
    %s245 = sphi 0, %s244
    %s259 = sphi 0, %s245
    %s263 = sphi 0, %s263
    %s265 = sphi 0, %s263
    %s266 = sphi 0, %s265
    %s280 = sphi 0, %s266
    %s284 = sphi 0, %s284
    %s286 = sphi 0, %s284
    %s287 = sphi 0, %s286
    %s301 = sphi 0, %s287
    %s307 = sphi 0, %s309
    %s310 = sphi 0, %s307
    %s311 = sphi 0, %s310
    %s327 = sphi 0, %s311
  $region4: #{forward.10} parent=0 // loop_header_branch
    %22 = sbr.rel (%p20) target = $region8
  $region5: #{forward.10} parent=0 // loop_body
    %s24 = ssub.s32 %s19, 1
    %s25 = ssub.s32 %s19, 2
    %s26 = sadd.s32 %s19, 1
    %s27 = ssub.s32 %s19, %s26
    %p28 = scmp.eq.s32.totalorder %s27, 0
    %s30 = sadd.s32 %s29, 1
    %s31 = scalar_select %p28, %s29, %s30
    %p34 = pneg %p28
    %p35 = scmp.eq.s32.totalorder %s19, 1
    %p36 = por %p34, %p35
    %p37 = scmp.ne.s32.totalorder %s29, %s32
    %p38 = scmp.eq.s32.totalorder %s19, 0
    %p39 = por %p37, %p38
    %p40 = scmp.ne.s32.totalorder %s29, %s32
    %p41 = scmp.eq.s32.totalorder %s24, 1
    %p42 = por %p40, %p41
    %p43 = scmp.ne.s32.totalorder %s32, %s33
    %p44 = scmp.eq.s32.totalorder %s24, 0
    %p45 = por %p43, %p44
    %p46 = scmp.ne.s32.totalorder %s32, %s33
    %p47 = scmp.eq.s32.totalorder %s25, 1
    %p48 = por %p46, %p47
    %p50 = scmp.ne.s32.totalorder %s33, %s49
    %p51 = scmp.eq.s32.totalorder %s25, 0
    %p52 = por %p50, %p51
    %s54 = sadd.s32 %s53, 1
    %p57 = scmp.eq.s32.totalorder %s19, 1
    %p58 = scmp.ne.s32.totalorder %s53, %s55
    %p59 = scmp.eq.s32.totalorder %s19, 0
    %p60 = por %p58, %p59
    %p61 = scmp.ne.s32.totalorder %s53, %s55
    %p62 = scmp.eq.s32.totalorder %s24, 1
    %p63 = por %p61, %p62
    %p64 = scmp.ne.s32.totalorder %s55, %s56
    %p65 = scmp.eq.s32.totalorder %s24, 0
    %p66 = por %p64, %p65
    %p67 = scmp.ne.s32.totalorder %s55, %s56
    %p68 = scmp.eq.s32.totalorder %s25, 1
    %p69 = por %p67, %p68
    %p71 = scmp.ne.s32.totalorder %s56, %s70
    %p72 = scmp.eq.s32.totalorder %s25, 0
    %p73 = por %p71, %p72
    %s75 = sadd.s32 %s74, 1
    %p78 = scmp.eq.s32.totalorder %s19, 1
    %p79 = scmp.ne.s32.totalorder %s74, %s76
    %p80 = scmp.eq.s32.totalorder %s19, 0
    %p81 = por %p79, %p80
    %p82 = scmp.ne.s32.totalorder %s74, %s76
    %p83 = scmp.eq.s32.totalorder %s24, 1
    %p84 = por %p82, %p83
    %p85 = scmp.ne.s32.totalorder %s76, %s77
    %p86 = scmp.eq.s32.totalorder %s24, 0
    %p87 = por %p85, %p86
    %p88 = scmp.ne.s32.totalorder %s76, %s77
    %p89 = scmp.eq.s32.totalorder %s25, 1
    %p90 = por %p88, %p89
    %p92 = scmp.ne.s32.totalorder %s77, %s91
    %p93 = scmp.eq.s32.totalorder %s25, 0
    %p94 = por %p92, %p93
    %s96 = sadd.s32 %s95, 1
    %p99 = scmp.eq.s32.totalorder %s19, 1
    %p100 = scmp.ne.s32.totalorder %s95, %s97
    %p101 = scmp.eq.s32.totalorder %s19, 0
    %p102 = por %p100, %p101
    %p103 = scmp.ne.s32.totalorder %s95, %s97
    %p104 = scmp.eq.s32.totalorder %s24, 1
    %p105 = por %p103, %p104
    %p106 = scmp.ne.s32.totalorder %s97, %s98
    %p107 = scmp.eq.s32.totalorder %s24, 0
    %p108 = por %p106, %p107
    %p109 = scmp.ne.s32.totalorder %s97, %s98
    %p110 = scmp.eq.s32.totalorder %s25, 1
    %p111 = por %p109, %p110
    %p113 = scmp.ne.s32.totalorder %s98, %s112
    %p114 = scmp.eq.s32.totalorder %s25, 0
    %p115 = por %p113, %p114
    %s117 = sadd.s32 %s116, 1
    %p120 = scmp.eq.s32.totalorder %s19, 1
    %p121 = scmp.ne.s32.totalorder %s116, %s118
    %p122 = scmp.eq.s32.totalorder %s19, 0
    %p123 = por %p121, %p122
    %p124 = scmp.ne.s32.totalorder %s116, %s118
    %p125 = scmp.eq.s32.totalorder %s24, 1
    %p126 = por %p124, %p125
    %p127 = scmp.ne.s32.totalorder %s118, %s119
    %p128 = scmp.eq.s32.totalorder %s24, 0
    %p129 = por %p127, %p128
    %p130 = scmp.ne.s32.totalorder %s118, %s119
    %p131 = scmp.eq.s32.totalorder %s25, 1
    %p132 = por %p130, %p131
    %p134 = scmp.ne.s32.totalorder %s119, %s133
    %p135 = scmp.eq.s32.totalorder %s25, 0
    %p136 = por %p134, %p135
    %s138 = sadd.s32 %s137, 1
    %p141 = scmp.eq.s32.totalorder %s19, 1
    %p142 = scmp.ne.s32.totalorder %s137, %s139
    %p143 = scmp.eq.s32.totalorder %s19, 0
    %p144 = por %p142, %p143
    %p145 = scmp.ne.s32.totalorder %s137, %s139
    %p146 = scmp.eq.s32.totalorder %s24, 1
    %p147 = por %p145, %p146
    %p148 = scmp.ne.s32.totalorder %s139, %s140
    %p149 = scmp.eq.s32.totalorder %s24, 0
    %p150 = por %p148, %p149
    %p151 = scmp.ne.s32.totalorder %s139, %s140
    %p152 = scmp.eq.s32.totalorder %s25, 1
    %p153 = por %p151, %p152
    %p155 = scmp.ne.s32.totalorder %s140, %s154
    %p156 = scmp.eq.s32.totalorder %s25, 0
    %p157 = por %p155, %p156
    %s159 = sadd.s32 %s158, 1
    %p162 = scmp.eq.s32.totalorder %s19, 1
    %p163 = scmp.ne.s32.totalorder %s158, %s160
    %p164 = scmp.eq.s32.totalorder %s19, 0
    %p165 = por %p163, %p164
    %p166 = scmp.ne.s32.totalorder %s158, %s160
    %p167 = scmp.eq.s32.totalorder %s24, 1
    %p168 = por %p166, %p167
    %p169 = scmp.ne.s32.totalorder %s160, %s161
    %p170 = scmp.eq.s32.totalorder %s24, 0
    %p171 = por %p169, %p170
    %p172 = scmp.ne.s32.totalorder %s160, %s161
    %p173 = scmp.eq.s32.totalorder %s25, 1
    %p174 = por %p172, %p173
    %p176 = scmp.ne.s32.totalorder %s161, %s175
    %p177 = scmp.eq.s32.totalorder %s25, 0
    %p178 = por %p176, %p177
    %s180 = sadd.s32 %s179, 1
    %p183 = scmp.eq.s32.totalorder %s19, 1
    %p184 = scmp.ne.s32.totalorder %s179, %s181
    %p185 = scmp.eq.s32.totalorder %s19, 0
    %p186 = por %p184, %p185
    %p187 = scmp.ne.s32.totalorder %s179, %s181
    %p188 = scmp.eq.s32.totalorder %s24, 1
    %p189 = por %p187, %p188
    %p190 = scmp.ne.s32.totalorder %s181, %s182
    %p191 = scmp.eq.s32.totalorder %s24, 0
    %p192 = por %p190, %p191
    %p193 = scmp.ne.s32.totalorder %s181, %s182
    %p194 = scmp.eq.s32.totalorder %s25, 1
    %p195 = por %p193, %p194
    %p197 = scmp.ne.s32.totalorder %s182, %s196
    %p198 = scmp.eq.s32.totalorder %s25, 0
    %p199 = por %p197, %p198
    %s201 = sadd.s32 %s200, 1
    %p204 = scmp.eq.s32.totalorder %s19, 1
    %p205 = scmp.ne.s32.totalorder %s200, %s202
    %p206 = scmp.eq.s32.totalorder %s19, 0
    %p207 = por %p205, %p206
    %p208 = scmp.ne.s32.totalorder %s200, %s202
    %p209 = scmp.eq.s32.totalorder %s24, 1
    %p210 = por %p208, %p209
    %p211 = scmp.ne.s32.totalorder %s202, %s203
    %p212 = scmp.eq.s32.totalorder %s24, 0
    %p213 = por %p211, %p212
    %p214 = scmp.ne.s32.totalorder %s202, %s203
    %p215 = scmp.eq.s32.totalorder %s25, 1
    %p216 = por %p214, %p215
    %p218 = scmp.ne.s32.totalorder %s203, %s217
    %p219 = scmp.eq.s32.totalorder %s25, 0
    %p220 = por %p218, %p219
    %s222 = sadd.s32 %s221, 1
    %p225 = scmp.eq.s32.totalorder %s19, 1
    %p226 = scmp.ne.s32.totalorder %s221, %s223
    %p227 = scmp.eq.s32.totalorder %s19, 0
    %p228 = por %p226, %p227
    %p229 = scmp.ne.s32.totalorder %s221, %s223
    %p230 = scmp.eq.s32.totalorder %s24, 1
    %p231 = por %p229, %p230
    %p232 = scmp.ne.s32.totalorder %s223, %s224
    %p233 = scmp.eq.s32.totalorder %s24, 0
    %p234 = por %p232, %p233
    %p235 = scmp.ne.s32.totalorder %s223, %s224
    %p236 = scmp.eq.s32.totalorder %s25, 1
    %p237 = por %p235, %p236
    %p239 = scmp.ne.s32.totalorder %s224, %s238
    %p240 = scmp.eq.s32.totalorder %s25, 0
    %p241 = por %p239, %p240
    %s243 = sadd.s32 %s242, 1
    %p246 = scmp.eq.s32.totalorder %s19, 1
    %p247 = scmp.ne.s32.totalorder %s242, %s244
    %p248 = scmp.eq.s32.totalorder %s19, 0
    %p249 = por %p247, %p248
    %p250 = scmp.ne.s32.totalorder %s242, %s244
    %p251 = scmp.eq.s32.totalorder %s24, 1
    %p252 = por %p250, %p251
    %p253 = scmp.ne.s32.totalorder %s244, %s245
    %p254 = scmp.eq.s32.totalorder %s24, 0
    %p255 = por %p253, %p254
    %p256 = scmp.ne.s32.totalorder %s244, %s245
    %p257 = scmp.eq.s32.totalorder %s25, 1
    %p258 = por %p256, %p257
    %p260 = scmp.ne.s32.totalorder %s245, %s259
    %p261 = scmp.eq.s32.totalorder %s25, 0
    %p262 = por %p260, %p261
    %s264 = sadd.s32 %s263, 1
    %p267 = scmp.eq.s32.totalorder %s19, 1
    %p268 = scmp.ne.s32.totalorder %s263, %s265
    %p269 = scmp.eq.s32.totalorder %s19, 0
    %p270 = por %p268, %p269
    %p271 = scmp.ne.s32.totalorder %s263, %s265
    %p272 = scmp.eq.s32.totalorder %s24, 1
    %p273 = por %p271, %p272
    %p274 = scmp.ne.s32.totalorder %s265, %s266
    %p275 = scmp.eq.s32.totalorder %s24, 0
    %p276 = por %p274, %p275
    %p277 = scmp.ne.s32.totalorder %s265, %s266
    %p278 = scmp.eq.s32.totalorder %s25, 1
    %p279 = por %p277, %p278
    %p281 = scmp.ne.s32.totalorder %s266, %s280
    %p282 = scmp.eq.s32.totalorder %s25, 0
    %p283 = por %p281, %p282
    %s285 = sadd.s32 %s284, 1
    %p288 = scmp.eq.s32.totalorder %s19, 1
    %p289 = scmp.ne.s32.totalorder %s284, %s286
    %p290 = scmp.eq.s32.totalorder %s19, 0
    %p291 = por %p289, %p290
    %p292 = scmp.ne.s32.totalorder %s284, %s286
    %p293 = scmp.eq.s32.totalorder %s24, 1
    %p294 = por %p292, %p293
    %p295 = scmp.ne.s32.totalorder %s286, %s287
    %p296 = scmp.eq.s32.totalorder %s24, 0
    %p297 = por %p295, %p296
    %p298 = scmp.ne.s32.totalorder %s286, %s287
    %p299 = scmp.eq.s32.totalorder %s25, 1
    %p300 = por %p298, %p299
    %p302 = scmp.ne.s32.totalorder %s287, %s301
    %p303 = scmp.eq.s32.totalorder %s25, 0
    %p304 = por %p302, %p303
    %s305 = ssub.s32 %s19, %s26
    %p306 = scmp.eq.s32.totalorder %s305, 0
    %s308 = sadd.s32 %s307, 1
    %s309 = scalar_select %p306, %s307, %s308
    %p312 = pneg %p306
    %p313 = scmp.eq.s32.totalorder %s19, 1
    %p314 = por %p312, %p313
    %p315 = scmp.ne.s32.totalorder %s307, %s310
    %p316 = scmp.eq.s32.totalorder %s19, 0
    %p317 = por %p315, %p316
    %p318 = scmp.ne.s32.totalorder %s307, %s310
    %p319 = scmp.eq.s32.totalorder %s24, 1
    %p320 = por %p318, %p319
    %p321 = scmp.ne.s32.totalorder %s310, %s311
    %p322 = scmp.eq.s32.totalorder %s24, 0
    %p323 = por %p321, %p322
    %p324 = scmp.ne.s32.totalorder %s310, %s311
    %p325 = scmp.eq.s32.totalorder %s25, 1
    %p326 = por %p324, %p325
    %p328 = scmp.ne.s32.totalorder %s311, %s327
    %p329 = scmp.eq.s32.totalorder %s25, 0
    %p330 = por %p328, %p329
    %p331 = scmp.le.s32.totalorder 1, %s19
    %p332 = scmp.lt.s32.totalorder %s19, 3
    %p333 = pnand %p331, %p332
    %p334 = pneg %p333
    // Predicated region
    $region9: #{forward.10} parent=5 // pred_check
      _
    $region10: #{forward.10} parent=5 // pred_check_branch
      %336 = sbr.rel (%p333) target = $region12
    $region11: #{forward.10} parent=5 // pred_region
      %s337 = ssub.s32 %s19, 1
      // Predicated region
      $region13: #{forward.10} parent=11 // pred_check
        %p338 = pneg %p66
      $region14: #{forward.10} parent=11 // pred_check_branch
        %340 = sbr.rel (%p338) target = $region16
      $region15: #{forward.10} parent=11 // pred_region
        _
      $region16: #{forward.10} parent=11 // pred_fallthru
        _
      // Predicated region
      $region17: #{forward.10} parent=11 // pred_check
        %p341 = pneg %p87
      $region18: #{forward.10} parent=11 // pred_check_branch
        %343 = sbr.rel (%p341) target = $region20
      $region19: #{forward.10} parent=11 // pred_region
        _
      $region20: #{forward.10} parent=11 // pred_fallthru
        _
      // Predicated region
      $region21: #{forward.10} parent=11 // pred_check
        %p344 = pneg %p108
      $region22: #{forward.10} parent=11 // pred_check_branch
        %346 = sbr.rel (%p344) target = $region24
      $region23: #{forward.10} parent=11 // pred_region
        _
      $region24: #{forward.10} parent=11 // pred_fallthru
        _
      // Predicated region
      $region25: #{forward.10} parent=11 // pred_check
        %p347 = pneg %p129
      $region26: #{forward.10} parent=11 // pred_check_branch
        %349 = sbr.rel (%p347) target = $region28
      $region27: #{forward.10} parent=11 // pred_region
        _
      $region28: #{forward.10} parent=11 // pred_fallthru
        _
      // Predicated region
      $region29: #{forward.10} parent=11 // pred_check
        %p350 = pneg %p150
      $region30: #{forward.10} parent=11 // pred_check_branch
        %352 = sbr.rel (%p350) target = $region32
      $region31: #{forward.10} parent=11 // pred_region
        _
      $region32: #{forward.10} parent=11 // pred_fallthru
        _
      // Predicated region
      $region33: #{forward.10} parent=11 // pred_check
        %p353 = pneg %p171
      $region34: #{forward.10} parent=11 // pred_check_branch
        %355 = sbr.rel (%p353) target = $region36
      $region35: #{forward.10} parent=11 // pred_region
        _
      $region36: #{forward.10} parent=11 // pred_fallthru
        _
      // Predicated region
      $region37: #{forward.10} parent=11 // pred_check
        %p356 = pneg %p192
      $region38: #{forward.10} parent=11 // pred_check_branch
        %358 = sbr.rel (%p356) target = $region40
      $region39: #{forward.10} parent=11 // pred_region
        _
      $region40: #{forward.10} parent=11 // pred_fallthru
        _
      // Predicated region
      $region41: #{forward.10} parent=11 // pred_check
        %p359 = pneg %p213
      $region42: #{forward.10} parent=11 // pred_check_branch
        %361 = sbr.rel (%p359) target = $region44
      $region43: #{forward.10} parent=11 // pred_region
        _
      $region44: #{forward.10} parent=11 // pred_fallthru
        _
      // Predicated region
      $region45: #{forward.10} parent=11 // pred_check
        %p362 = pneg %p234
      $region46: #{forward.10} parent=11 // pred_check_branch
        %364 = sbr.rel (%p362) target = $region48
      $region47: #{forward.10} parent=11 // pred_region
        _
      $region48: #{forward.10} parent=11 // pred_fallthru
        _
      // Predicated region
      $region49: #{forward.10} parent=11 // pred_check
        %p365 = pneg %p255
      $region50: #{forward.10} parent=11 // pred_check_branch
        %367 = sbr.rel (%p365) target = $region52
      $region51: #{forward.10} parent=11 // pred_region
        _
      $region52: #{forward.10} parent=11 // pred_fallthru
        _
      // Predicated region
      $region53: #{forward.10} parent=11 // pred_check
        %p368 = pneg %p276
      $region54: #{forward.10} parent=11 // pred_check_branch
        %370 = sbr.rel (%p368) target = $region56
      $region55: #{forward.10} parent=11 // pred_region
        _
      $region56: #{forward.10} parent=11 // pred_fallthru
        _
      // Predicated region
      $region57: #{forward.10} parent=11 // pred_check
        %p371 = pneg %p297
      $region58: #{forward.10} parent=11 // pred_check_branch
        %373 = sbr.rel (%p371) target = $region60
      $region59: #{forward.10} parent=11 // pred_region
        _
      $region60: #{forward.10} parent=11 // pred_fallthru
        _
    $region12: #{forward.10} parent=5 // pred_fallthru
      _
    %p374 = scmp.lt.s32.totalorder %s19, 2
    // Predicated region
    $region61: #{forward.10} parent=5 // pred_check
      %p375 = pneg %p374
    $region62: #{forward.10} parent=5 // pred_check_branch
      %377 = sbr.rel (%p375) target = $region64
    $region63: #{forward.10} parent=5 // pred_region
      // Predicated region
      $region65: #{forward.10} parent=63 // pred_check
        %p378 = pneg %p39
      $region66: #{forward.10} parent=63 // pred_check_branch
        %380 = sbr.rel (%p378) target = $region68
      $region67: #{forward.10} parent=63 // pred_region
        %p381 = scmp.lt.s32.totalorder %s19, 1
        %s382 = scalar_select %p381, %s19, 1
        %s383 = smul.addr %s382, 8
        %s384 = scalar_lea.vmem %s0, %s383
      $region68: #{forward.10} parent=63 // pred_fallthru
        _
    $region64: #{forward.10} parent=5 // pred_fallthru
      _
    %p385 = scmp.le.s32.totalorder 1, %s19
    %p386 = scmp.lt.s32.totalorder %s19, 3
    %p387 = pnand %p385, %p386
    %p388 = pneg %p387
    // Predicated region
    $region69: #{forward.10} parent=5 // pred_check
      _
    $region70: #{forward.10} parent=5 // pred_check_branch
      %390 = sbr.rel (%p387) target = $region72
    $region71: #{forward.10} parent=5 // pred_region
      %s391 = ssub.s32 %s19, 1
      %p392 = scmp.lt.s32.totalorder %s24, 1
      %s393 = scalar_select %p392, %s24, 1
      %s394 = smul.addr %s393, 8
      %s395 = scalar_lea.vmem %s0, %s394
      %p396 = pneg %p45
      %p397 = pneg %p42
      %p398 = pneg %p66
      %p399 = pneg %p63
      %p400 = pneg %p87
      %p401 = pneg %p84
      %p402 = pneg %p108
      %p403 = pneg %p105
      %p404 = pneg %p129
      %p405 = pneg %p126
      %p406 = pneg %p150
      %p407 = pneg %p147
      %p408 = pneg %p171
      %p409 = pneg %p168
      %p410 = pneg %p192
      %p411 = pneg %p189
      %p412 = pneg %p213
      %p413 = pneg %p210
      %p414 = pneg %p234
      %p415 = pneg %p231
      %p416 = pneg %p255
      %p417 = pneg %p252
      %p418 = pneg %p276
      %p419 = pneg %p273
      %p420 = pneg %p297
      %p421 = pneg %p294
      %p422 = pneg %p323
      %p423 = pneg %p320
      %p424 = scmp.lt.s32.totalorder %s24, 1
      %s425 = scalar_select %p424, %s24, 1
      %s426 = smul.addr %s425, 8
      %s427 = scalar_lea.vmem %s13, %s426
      %p428 = scmp.lt.s32.totalorder %s24, 1
      %s429 = scalar_select %p428, %s24, 1
      %s430 = smul.addr %s429, 8
      %s431 = scalar_lea.vmem %s0, %s430
      %p432 = scmp.lt.s32.totalorder %s24, 1
      %s433 = scalar_select %p432, %s24, 1
      %s434 = smul.addr %s433, 8
      %s435 = scalar_lea.vmem %s13, %s434
      %v437 = vld [vmem:[%s431] sm:$0xff]
      %v438 = vld [vmem:[%s1] sm:$0xff]
      %v439 = vpack.c.bf16 %v438, %v438
      %v440 = vpack.c.bf16 %v437, %v437
      %v441 = vld [vmem:[%s2] sm:$0xff]
      %443 = vset.pattern.permute.xlu0 0
      %444 = vperm.xlu0 %443, %v441
      %v445 = vpop.permute.xlu0 %444
      %vm447 = vcmask 64512
      %v449 = vsel %vm447, %v439, 0
      %vm451 = vcmask 1043456
      %v453 = vsel %vm451, %v440, 0
      %455 = vmatprep.subr.bf16.mxu0 0
      %456 = vmatpush1.bf16.msra.mxu0 %v453
      %457 = vmatprep.subr.bf16.mxu0 0
      %458 = vmatpush1.bf16.msra.mxu0 0
      %459 = vmatprep.subr.bf16.mxu0 0
      %460 = vmatpush1.bf16.msra.mxu0 0
      %461 = vmatprep.subr.bf16.mxu0 0
      %462 = vmatpush1.bf16.msra.mxu0 0
      %463 = vmatprep.subr.bf16.mxu0 0
      %464 = vmatpush1.bf16.msra.mxu0 0
      %465 = vmatprep.subr.bf16.mxu0 0
      %466 = vmatpush1.bf16.msra.mxu0 0
      %467 = vmatprep.subr.bf16.mxu0 0
      %468 = vmatpush1.bf16.msra.mxu0 0
      %469 = vmatprep.subr.bf16.mxu0 0
      %470 = vmatpush1.bf16.msra.mxu0 0
      %471 = vmatprep.subr.bf16.mxu0 0
      %472 = vmatpush1.bf16.msra.mxu0 0
      %473 = vmatprep.subr.bf16.mxu0 0
      %474 = vmatpush1.bf16.msra.mxu0 0
      %475 = vmatprep.subr.bf16.mxu0 0
      %476 = vmatpush1.bf16.msra.mxu0 0
      %477 = vmatprep.subr.bf16.mxu0 0
      %478 = vmatpush1.bf16.msra.mxu0 0
      %479 = vmatprep.subr.bf16.mxu0 0
      %480 = vmatpush1.bf16.msra.mxu0 0
      %481 = vmatprep.subr.bf16.mxu0 0
      %482 = vmatpush1.bf16.msra.mxu0 0
      %483 = vmatprep.subr.bf16.mxu0 0
      %484 = vmatpush1.bf16.msra.mxu0 0
      %485 = vmatprep.subr.bf16.mxu0 0
      %486 = vmatpush1.bf16.msra.mxu0 0
      %487 = vmatprep.mubr.bf16.mxu0 0
      %488 = vmatmul.mubr.bf16.gmra.mrb[0].mxu0 %v449
      %v489 = vpop.f32.mrb[0].mxu0
      %v490 = vadd.f32 %v445, %v489
      %v491 = vpop.f32.mrb[0].mxu0
      %v492 = vpop.f32.mrb[0].mxu0
      %v493 = vpop.f32.mrb[0].mxu0
      %494 = vdwg.mxu0
      %vm495 = vcmp.ge.f32.partialorder %v490, 0.0
      %v496 = vmul.f32 %v490, 0.1
      %v497 = vsel %vm495, %v490, %v496
      %v498 = vld [vmem:[%s3] sm:$0xff]
      %v499 = vpack.c.bf16 %v498, %v498
      %v501 = vsel %vm447, %v499, 0
      %503 = vmatprep.subr.bf16.mxu0 0
      %504 = vmatpush1.bf16.msra.mxu0 %v453
      %505 = vmatprep.subr.bf16.mxu0 0
      %506 = vmatpush1.bf16.msra.mxu0 0
      %507 = vmatprep.subr.bf16.mxu0 0
      %508 = vmatpush1.bf16.msra.mxu0 0
      %509 = vmatprep.subr.bf16.mxu0 0
      %510 = vmatpush1.bf16.msra.mxu0 0
      %511 = vmatprep.subr.bf16.mxu0 0
      %512 = vmatpush1.bf16.msra.mxu0 0
      %513 = vmatprep.subr.bf16.mxu0 0
      %514 = vmatpush1.bf16.msra.mxu0 0
      %515 = vmatprep.subr.bf16.mxu0 0
      %516 = vmatpush1.bf16.msra.mxu0 0
      %517 = vmatprep.subr.bf16.mxu0 0
      %518 = vmatpush1.bf16.msra.mxu0 0
      %519 = vmatprep.subr.bf16.mxu0 0
      %520 = vmatpush1.bf16.msra.mxu0 0
      %521 = vmatprep.subr.bf16.mxu0 0
      %522 = vmatpush1.bf16.msra.mxu0 0
      %523 = vmatprep.subr.bf16.mxu0 0
      %524 = vmatpush1.bf16.msra.mxu0 0
      %525 = vmatprep.subr.bf16.mxu0 0
      %526 = vmatpush1.bf16.msra.mxu0 0
      %527 = vmatprep.subr.bf16.mxu0 0
      %528 = vmatpush1.bf16.msra.mxu0 0
      %529 = vmatprep.subr.bf16.mxu0 0
      %530 = vmatpush1.bf16.msra.mxu0 0
      %531 = vmatprep.subr.bf16.mxu0 0
      %532 = vmatpush1.bf16.msra.mxu0 0
      %533 = vmatprep.subr.bf16.mxu0 0
      %534 = vmatpush1.bf16.msra.mxu0 0
      %535 = vmatprep.mubr.bf16.mxu0 0
      %536 = vmatmul.mubr.bf16.gmra.mrb[0].mxu0 %v501
      %v537 = vpop.f32.mrb[0].mxu0
      %v538 = vadd.f32 0.0, %v537
      %v539 = vpop.f32.mrb[0].mxu0
      %v540 = vpop.f32.mrb[0].mxu0
      %v541 = vpop.f32.mrb[0].mxu0
      %542 = vdwg.mxu0
      %v543 = vld [vmem:[%s4] sm:$0xff]
      %v544 = vpack.c.bf16 %v543, %v543
      %v545 = vpack.c.bf16 %v497, %v497
      %v546 = vld [vmem:[%s5] sm:$0xff]
      %548 = vset.pattern.permute.xlu0 0
      %549 = vperm.xlu0 %548, %v546
      %v550 = vpop.permute.xlu0 %549
      %v553 = vsel %vm447, %v544, 0
      %v556 = vsel %vm451, %v545, 0
      %558 = vmatprep.subr.bf16.mxu0 0
      %559 = vmatpush1.bf16.msra.mxu0 %v556
      %560 = vmatprep.subr.bf16.mxu0 0
      %561 = vmatpush1.bf16.msra.mxu0 0
      %562 = vmatprep.subr.bf16.mxu0 0
      %563 = vmatpush1.bf16.msra.mxu0 0
      %564 = vmatprep.subr.bf16.mxu0 0
      %565 = vmatpush1.bf16.msra.mxu0 0
      %566 = vmatprep.subr.bf16.mxu0 0
      %567 = vmatpush1.bf16.msra.mxu0 0
      %568 = vmatprep.subr.bf16.mxu0 0
      %569 = vmatpush1.bf16.msra.mxu0 0
      %570 = vmatprep.subr.bf16.mxu0 0
      %571 = vmatpush1.bf16.msra.mxu0 0
      %572 = vmatprep.subr.bf16.mxu0 0
      %573 = vmatpush1.bf16.msra.mxu0 0
      %574 = vmatprep.subr.bf16.mxu0 0
      %575 = vmatpush1.bf16.msra.mxu0 0
      %576 = vmatprep.subr.bf16.mxu0 0
      %577 = vmatpush1.bf16.msra.mxu0 0
      %578 = vmatprep.subr.bf16.mxu0 0
      %579 = vmatpush1.bf16.msra.mxu0 0
      %580 = vmatprep.subr.bf16.mxu0 0
      %581 = vmatpush1.bf16.msra.mxu0 0
      %582 = vmatprep.subr.bf16.mxu0 0
      %583 = vmatpush1.bf16.msra.mxu0 0
      %584 = vmatprep.subr.bf16.mxu0 0
      %585 = vmatpush1.bf16.msra.mxu0 0
      %586 = vmatprep.subr.bf16.mxu0 0
      %587 = vmatpush1.bf16.msra.mxu0 0
      %588 = vmatprep.subr.bf16.mxu0 0
      %589 = vmatpush1.bf16.msra.mxu0 0
      %590 = vmatprep.mubr.bf16.mxu0 0
      %591 = vmatmul.mubr.bf16.gmra.mrb[0].mxu0 %v553
      %v592 = vpop.f32.mrb[0].mxu0
      %v593 = vadd.f32 %v550, %v592
      %v594 = vpop.f32.mrb[0].mxu0
      %v595 = vpop.f32.mrb[0].mxu0
      %v596 = vpop.f32.mrb[0].mxu0
      %597 = vdwg.mxu0
      %vm598 = vcmp.ge.f32.partialorder %v593, 0.0
      %v599 = vmul.f32 %v593, 0.1
      %v600 = vsel %vm598, %v593, %v599
      %601 = vrot.lane.b32.xlu0 %v600, 1
      %v602 = vpop.permute.xlu0 %601
      %v603 = vlaneseq
      %v604 = vand.u32 %v603, 127
      %vm605 = vcmp.ge.s32.totalorder %v604, 1
      %v606 = vsel %vm605, %v602, 0.0
      %607 = vrot.lane.b32.xlu0 %v600, 127
      %v608 = vpop.permute.xlu0 %607
      %vm609 = vcmp.lt.s32.totalorder %v604, 127
      %v610 = vsel %vm609, %v608, 0.0
      %v611 = vld [vmem:[%s6] sm:$0xff]
      %v612 = vpack.c.bf16 %v611, %v611
      %v613 = vpack.c.bf16 %v600, %v606
      %v614 = vpack.c.bf16 %v610, %v610
      %v615 = vld [vmem:[%s7] sm:$0xff]
      %617 = vset.pattern.permute.xlu0 0
      %618 = vperm.xlu0 %617, %v615
      %v619 = vpop.permute.xlu0 %618
      %vm621 = vcmask 195584
      %v623 = vsel %vm621, %v612, 0
      %v626 = vsel %vm451, %v614, 0
      %628 = vmatprep.subr.bf16.mxu0 0
      %629 = vmatpush1.bf16.msra.mxu0 %v613
      %630 = vmatprep.subr.bf16.mxu0 0
      %631 = vmatpush1.bf16.msra.mxu0 %v626
      %632 = vmatprep.subr.bf16.mxu0 0
      %633 = vmatpush1.bf16.msra.mxu0 0
      %634 = vmatprep.subr.bf16.mxu0 0
      %635 = vmatpush1.bf16.msra.mxu0 0
      %636 = vmatprep.subr.bf16.mxu0 0
      %637 = vmatpush1.bf16.msra.mxu0 0
      %638 = vmatprep.subr.bf16.mxu0 0
      %639 = vmatpush1.bf16.msra.mxu0 0
      %640 = vmatprep.subr.bf16.mxu0 0
      %641 = vmatpush1.bf16.msra.mxu0 0
      %642 = vmatprep.subr.bf16.mxu0 0
      %643 = vmatpush1.bf16.msra.mxu0 0
      %644 = vmatprep.subr.bf16.mxu0 0
      %645 = vmatpush1.bf16.msra.mxu0 0
      %646 = vmatprep.subr.bf16.mxu0 0
      %647 = vmatpush1.bf16.msra.mxu0 0
      %648 = vmatprep.subr.bf16.mxu0 0
      %649 = vmatpush1.bf16.msra.mxu0 0
      %650 = vmatprep.subr.bf16.mxu0 0
      %651 = vmatpush1.bf16.msra.mxu0 0
      %652 = vmatprep.subr.bf16.mxu0 0
      %653 = vmatpush1.bf16.msra.mxu0 0
      %654 = vmatprep.subr.bf16.mxu0 0
      %655 = vmatpush1.bf16.msra.mxu0 0
      %656 = vmatprep.subr.bf16.mxu0 0
      %657 = vmatpush1.bf16.msra.mxu0 0
      %658 = vmatprep.subr.bf16.mxu0 0
      %659 = vmatpush1.bf16.msra.mxu0 0
      %660 = vmatprep.mubr.bf16.mxu0 0
      %661 = vmatmul.mubr.bf16.gmra.mrb[0].mxu0 %v623
      %v662 = vpop.f32.mrb[0].mxu0
      %v663 = vadd.f32 %v619, %v662
      %v664 = vpop.f32.mrb[0].mxu0
      %v665 = vpop.f32.mrb[0].mxu0
      %v666 = vpop.f32.mrb[0].mxu0
      %667 = vdwg.mxu0
      %vm668 = vcmp.ge.f32.partialorder %v663, 0.0
      %v669 = vmul.f32 %v663, 0.1
      %v670 = vsel %vm668, %v663, %v669
      %v671 = vadd.f32 %v497, %v670
      %s672 = scalar_lea.vmem %s4, 8
      %v673 = vld [vmem:[%s672] sm:$0xff]
      %v674 = vpack.c.bf16 %v673, %v673
      %v675 = vpack.c.bf16 %v671, %v671
      %s676 = scalar_lea.vmem %s5, 8
      %v677 = vld [vmem:[%s676] sm:$0xff]
      %679 = vset.pattern.permute.xlu0 0
      %680 = vperm.xlu0 %679, %v677
      %v681 = vpop.permute.xlu0 %680
      %v684 = vsel %vm447, %v674, 0
      %v687 = vsel %vm451, %v675, 0
      %689 = vmatprep.subr.bf16.mxu0 0
      %690 = vmatpush1.bf16.msra.mxu0 %v687
      %691 = vmatprep.subr.bf16.mxu0 0
      %692 = vmatpush1.bf16.msra.mxu0 0
      %693 = vmatprep.subr.bf16.mxu0 0
      %694 = vmatpush1.bf16.msra.mxu0 0
      %695 = vmatprep.subr.bf16.mxu0 0
      %696 = vmatpush1.bf16.msra.mxu0 0
      %697 = vmatprep.subr.bf16.mxu0 0
      %698 = vmatpush1.bf16.msra.mxu0 0
      %699 = vmatprep.subr.bf16.mxu0 0
      %700 = vmatpush1.bf16.msra.mxu0 0
      %701 = vmatprep.subr.bf16.mxu0 0
      %702 = vmatpush1.bf16.msra.mxu0 0
      %703 = vmatprep.subr.bf16.mxu0 0
      %704 = vmatpush1.bf16.msra.mxu0 0
      %705 = vmatprep.subr.bf16.mxu0 0
      %706 = vmatpush1.bf16.msra.mxu0 0
      %707 = vmatprep.subr.bf16.mxu0 0
      %708 = vmatpush1.bf16.msra.mxu0 0
      %709 = vmatprep.subr.bf16.mxu0 0
      %710 = vmatpush1.bf16.msra.mxu0 0
      %711 = vmatprep.subr.bf16.mxu0 0
      %712 = vmatpush1.bf16.msra.mxu0 0
      %713 = vmatprep.subr.bf16.mxu0 0
      %714 = vmatpush1.bf16.msra.mxu0 0
      %715 = vmatprep.subr.bf16.mxu0 0
      %716 = vmatpush1.bf16.msra.mxu0 0
      %717 = vmatprep.subr.bf16.mxu0 0
      %718 = vmatpush1.bf16.msra.mxu0 0
      %719 = vmatprep.subr.bf16.mxu0 0
      %720 = vmatpush1.bf16.msra.mxu0 0
      %721 = vmatprep.mubr.bf16.mxu0 0
      %722 = vmatmul.mubr.bf16.gmra.mrb[0].mxu0 %v684
      %v723 = vpop.f32.mrb[0].mxu0
      %v724 = vadd.f32 %v681, %v723
      %v725 = vpop.f32.mrb[0].mxu0
      %v726 = vpop.f32.mrb[0].mxu0
      %v727 = vpop.f32.mrb[0].mxu0
      %728 = vdwg.mxu0
      %vm729 = vcmp.ge.f32.partialorder %v724, 0.0
      %v730 = vmul.f32 %v724, 0.1
      %v731 = vsel %vm729, %v724, %v730
      %732 = vrot.lane.b32.xlu0 %v731, 1
      %v733 = vpop.permute.xlu0 %732
      %v734 = vsel %vm605, %v733, 0.0
      %735 = vrot.lane.b32.xlu0 %v731, 127
      %v736 = vpop.permute.xlu0 %735
      %v737 = vsel %vm609, %v736, 0.0
      %s738 = scalar_lea.vmem %s6, 8
      %v739 = vld [vmem:[%s738] sm:$0xff]
      %v740 = vpack.c.bf16 %v739, %v739
      %v741 = vpack.c.bf16 %v731, %v734
      %v742 = vpack.c.bf16 %v737, %v737
      %s743 = scalar_lea.vmem %s7, 8
      %v744 = vld [vmem:[%s743] sm:$0xff]
      %746 = vset.pattern.permute.xlu0 0
      %747 = vperm.xlu0 %746, %v744
      %v748 = vpop.permute.xlu0 %747
      %v751 = vsel %vm621, %v740, 0
      %v754 = vsel %vm451, %v742, 0
      %756 = vmatprep.subr.bf16.mxu0 0
      %757 = vmatpush1.bf16.msra.mxu0 %v741
      %758 = vmatprep.subr.bf16.mxu0 0
      %759 = vmatpush1.bf16.msra.mxu0 %v754
      %760 = vmatprep.subr.bf16.mxu0 0
      %761 = vmatpush1.bf16.msra.mxu0 0
      %762 = vmatprep.subr.bf16.mxu0 0
      %763 = vmatpush1.bf16.msra.mxu0 0
      %764 = vmatprep.subr.bf16.mxu0 0
      %765 = vmatpush1.bf16.msra.mxu0 0
      %766 = vmatprep.subr.bf16.mxu0 0
      %767 = vmatpush1.bf16.msra.mxu0 0
      %768 = vmatprep.subr.bf16.mxu0 0
      %769 = vmatpush1.bf16.msra.mxu0 0
      %770 = vmatprep.subr.bf16.mxu0 0
      %771 = vmatpush1.bf16.msra.mxu0 0
      %772 = vmatprep.subr.bf16.mxu0 0
      %773 = vmatpush1.bf16.msra.mxu0 0
      %774 = vmatprep.subr.bf16.mxu0 0
      %775 = vmatpush1.bf16.msra.mxu0 0
      %776 = vmatprep.subr.bf16.mxu0 0
      %777 = vmatpush1.bf16.msra.mxu0 0
      %778 = vmatprep.subr.bf16.mxu0 0
      %779 = vmatpush1.bf16.msra.mxu0 0
      %780 = vmatprep.subr.bf16.mxu0 0
      %781 = vmatpush1.bf16.msra.mxu0 0
      %782 = vmatprep.subr.bf16.mxu0 0
      %783 = vmatpush1.bf16.msra.mxu0 0
      %784 = vmatprep.subr.bf16.mxu0 0
      %785 = vmatpush1.bf16.msra.mxu0 0
      %786 = vmatprep.subr.bf16.mxu0 0
      %787 = vmatpush1.bf16.msra.mxu0 0
      %788 = vmatprep.mubr.bf16.mxu0 0
      %789 = vmatmul.mubr.bf16.gmra.mrb[0].mxu0 %v751
      %v790 = vpop.f32.mrb[0].mxu0
      %v791 = vadd.f32 %v748, %v790
      %v792 = vpop.f32.mrb[0].mxu0
      %v793 = vpop.f32.mrb[0].mxu0
      %v794 = vpop.f32.mrb[0].mxu0
      %795 = vdwg.mxu0
      %vm796 = vcmp.ge.f32.partialorder %v791, 0.0
      %v797 = vmul.f32 %v791, 0.1
      %v798 = vsel %vm796, %v791, %v797
      %v799 = vadd.f32 %v671, %v798
      %v800 = vld [vmem:[%s8] sm:$0xff]
      %v801 = vpack.c.bf16 %v800, %v800
      %v802 = vpack.c.bf16 %v799, %v799
      %v804 = vsel %vm447, %v801, 0
      %v807 = vsel %vm451, %v802, 0
      %809 = vmatprep.subr.bf16.mxu0 0
      %810 = vmatpush1.bf16.msra.mxu0 %v807
      %811 = vmatprep.subr.bf16.mxu0 0
      %812 = vmatpush1.bf16.msra.mxu0 0
      %813 = vmatprep.subr.bf16.mxu0 0
      %814 = vmatpush1.bf16.msra.mxu0 0
      %815 = vmatprep.subr.bf16.mxu0 0
      %816 = vmatpush1.bf16.msra.mxu0 0
      %817 = vmatprep.subr.bf16.mxu0 0
      %818 = vmatpush1.bf16.msra.mxu0 0
      %819 = vmatprep.subr.bf16.mxu0 0
      %820 = vmatpush1.bf16.msra.mxu0 0
      %821 = vmatprep.subr.bf16.mxu0 0
      %822 = vmatpush1.bf16.msra.mxu0 0
      %823 = vmatprep.subr.bf16.mxu0 0
      %824 = vmatpush1.bf16.msra.mxu0 0
      %825 = vmatprep.subr.bf16.mxu0 0
      %826 = vmatpush1.bf16.msra.mxu0 0
      %827 = vmatprep.subr.bf16.mxu0 0
      %828 = vmatpush1.bf16.msra.mxu0 0
      %829 = vmatprep.subr.bf16.mxu0 0
      %830 = vmatpush1.bf16.msra.mxu0 0
      %831 = vmatprep.subr.bf16.mxu0 0
      %832 = vmatpush1.bf16.msra.mxu0 0
      %833 = vmatprep.subr.bf16.mxu0 0
      %834 = vmatpush1.bf16.msra.mxu0 0
      %835 = vmatprep.subr.bf16.mxu0 0
      %836 = vmatpush1.bf16.msra.mxu0 0
      %837 = vmatprep.subr.bf16.mxu0 0
      %838 = vmatpush1.bf16.msra.mxu0 0
      %839 = vmatprep.subr.bf16.mxu0 0
      %840 = vmatpush1.bf16.msra.mxu0 0
      %841 = vmatprep.mubr.bf16.mxu0 0
      %842 = vmatmul.mubr.bf16.gmra.mrb[0].mxu0 %v804
      %v843 = vpop.f32.mrb[0].mxu0
      %v844 = vadd.f32 0.0, %v843
      %v845 = vpop.f32.mrb[0].mxu0
      %v846 = vpop.f32.mrb[0].mxu0
      %v847 = vpop.f32.mrb[0].mxu0
      %848 = vdwg.mxu0
      %v849 = vld [vmem:[%s9] sm:$0xff]
      %v850 = vld [vmem:[%s9 + $0x8] sm:$0xff]
      %852 = vset.pattern.permute.xlu0 0
      %853 = vperm.xlu0 %852, %v849
      %v854 = vpop.permute.xlu0 %853
      %857 = vset.pattern.permute.xlu0 0
      %858 = vperm.xlu0 %857, %v850
      %v859 = vpop.permute.xlu0 %858
      %v861 = vmul.f32 %v844, %v854
      %v862 = vmul.f32 %v538, %v859
      %v863 = vld [vmem:[%s10] sm:$0xff]
      %v864 = vld [vmem:[%s10 + $0x8] sm:$0xff]
      %866 = vset.pattern.permute.xlu0 0
      %867 = vperm.xlu0 %866, %v863
      %v868 = vpop.permute.xlu0 %867
      %871 = vset.pattern.permute.xlu0 0
      %872 = vperm.xlu0 %871, %v864
      %v873 = vpop.permute.xlu0 %872
      %v875 = vadd.f32 %v861, %v868
      %v876 = vadd.f32 %v862, %v873
      %vm877 = vcmp.ge.f32.partialorder %v875, 0.0
      %vm878 = vcmp.ge.f32.partialorder %v876, 0.0
      %v879 = vmul.f32 %v875, 0.1
      %v880 = vmul.f32 %v876, 0.1
      %v881 = vsel %vm877, %v875, %v879
      %v882 = vsel %vm878, %v876, %v880
      %v883 = vld [vmem:[%s11] sm:$0xff]
      %v884 = vpack.c.bf16 %v883, %v883
      %v885 = vpack.c.bf16 %v882, %v881
      %v886 = vld [vmem:[%s12] sm:$0xff]
      %888 = vset.pattern.permute.xlu0 0
      %889 = vperm.xlu0 %888, %v886
      %v890 = vpop.permute.xlu0 %889
      %vm892 = vcmask 130048
      %v894 = vsel %vm892, %v884, 0
      %896 = vmatprep.subr.bf16.mxu0 0
      %897 = vmatpush1.bf16.msra.mxu0 %v885
      %898 = vmatprep.subr.bf16.mxu0 0
      %899 = vmatpush1.bf16.msra.mxu0 0
      %900 = vmatprep.subr.bf16.mxu0 0
      %901 = vmatpush1.bf16.msra.mxu0 0
      %902 = vmatprep.subr.bf16.mxu0 0
      %903 = vmatpush1.bf16.msra.mxu0 0
      %904 = vmatprep.subr.bf16.mxu0 0
      %905 = vmatpush1.bf16.msra.mxu0 0
      %906 = vmatprep.subr.bf16.mxu0 0
      %907 = vmatpush1.bf16.msra.mxu0 0
      %908 = vmatprep.subr.bf16.mxu0 0
      %909 = vmatpush1.bf16.msra.mxu0 0
      %910 = vmatprep.subr.bf16.mxu0 0
      %911 = vmatpush1.bf16.msra.mxu0 0
      %912 = vmatprep.subr.bf16.mxu0 0
      %913 = vmatpush1.bf16.msra.mxu0 0
      %914 = vmatprep.subr.bf16.mxu0 0
      %915 = vmatpush1.bf16.msra.mxu0 0
      %916 = vmatprep.subr.bf16.mxu0 0
      %917 = vmatpush1.bf16.msra.mxu0 0
      %918 = vmatprep.subr.bf16.mxu0 0
      %919 = vmatpush1.bf16.msra.mxu0 0
      %920 = vmatprep.subr.bf16.mxu0 0
      %921 = vmatpush1.bf16.msra.mxu0 0
      %922 = vmatprep.subr.bf16.mxu0 0
      %923 = vmatpush1.bf16.msra.mxu0 0
      %924 = vmatprep.subr.bf16.mxu0 0
      %925 = vmatpush1.bf16.msra.mxu0 0
      %926 = vmatprep.subr.bf16.mxu0 0
      %927 = vmatpush1.bf16.msra.mxu0 0
      %928 = vmatprep.mubr.bf16.mxu0 0
      %929 = vmatmul.mubr.bf16.gmra.mrb[0].mxu0 %v894
      %v930 = vpop.f32.mrb[0].mxu0
      %v931 = vadd.f32 %v890, %v930
      %v932 = vpop.f32.mrb[0].mxu0
      %v933 = vpop.f32.mrb[0].mxu0
      %v934 = vpop.f32.mrb[0].mxu0
      %935 = vdwg.mxu0
      %vm936 = vcmp.ge.f32.partialorder %v931, 0.0
      %v937 = vmul.f32 %v931, 0.1
      %v938 = vsel %vm936, %v931, %v937
      %939 = vst [vmem:[%s435] sm:$0xff] %v938
      %p940 = scmp.lt.s32.totalorder %s24, 1
      %s941 = scalar_select %p940, %s24, 1
      %s942 = smul.addr %s941, 8
      %s943 = scalar_lea.vmem %s13, %s942
      // Predicated region
      $region73: #{forward.10} parent=71 // pred_check
        %p944 = pneg %p320
      $region74: #{forward.10} parent=71 // pred_check_branch
        %946 = sbr.rel (%p944) target = $region76
      $region75: #{forward.10} parent=71 // pred_region
        _
      $region76: #{forward.10} parent=71 // pred_fallthru
        _
    $region72: #{forward.10} parent=5 // pred_fallthru
      _
    %p947 = scmp.le.s32.totalorder 2, %s19
    // Predicated region
    $region77: #{forward.10} parent=5 // pred_check
      %p948 = pneg %p947
    $region78: #{forward.10} parent=5 // pred_check_branch
      %950 = sbr.rel (%p948) target = $region80
    $region79: #{forward.10} parent=5 // pred_region
      %s951 = ssub.s32 %s19, 2
      // Predicated region
      $region81: #{forward.10} parent=79 // pred_check
        %p952 = pneg %p326
      $region82: #{forward.10} parent=79 // pred_check_branch
        %954 = sbr.rel (%p952) target = $region84
      $region83: #{forward.10} parent=79 // pred_region
        %p955 = scmp.lt.s32.totalorder %s25, 1
        %s956 = scalar_select %p955, %s25, 1
        %s957 = smul.addr %s956, 8
        %s958 = scalar_lea.vmem %s13, %s957
      $region84: #{forward.10} parent=79 // pred_fallthru
        _
    $region80: #{forward.10} parent=5 // pred_fallthru
      _
  $region6: #{forward.10} parent=0 // loop_footer
    %s23 = sadd.s32 1, %s19
  $region7: #{forward.10} parent=0 // loop_footer_branch
    %18 = sbr.rel target = $region3
  $region8: #{forward.10} parent=0 // loop_exit
    _

// kernel: forward.9
$region0: #{forward.9}
  #allocation0 [shape = 'u32[]', space=smem, size = 0x4, offset = 0x4, fixed_abs, tag = 'smem constant byte address 0x4 - core index']
  #allocation1 [shape = 'u32[144,128]{1,0:T(1,128)}', space=vmem, size = 0x12000, scoped, tag = 'internal scratch']
  %s0 = inlined_call_operand.vmem [shape: f32[2,16,128], index: 0, kind: input, shape index: {}]
  %s1 = inlined_call_operand.vmem [shape: f32[8,16], index: 1, kind: input, shape index: {}]
  %s2 = inlined_call_operand.vmem [shape: f32[8,1], index: 2, kind: input, shape index: {}]
  %s3 = inlined_call_operand.vmem [shape: f32[8,16], index: 3, kind: input, shape index: {}]
  %s4 = inlined_call_operand.vmem [shape: f32[2,8,8], index: 4, kind: input, shape index: {}]
  %s5 = inlined_call_operand.vmem [shape: f32[2,8,1], index: 5, kind: input, shape index: {}, may-alias: {5,7}]
  %s6 = inlined_call_operand.vmem [shape: f32[2,8,24], index: 6, kind: input, shape index: {}]
  %s7 = inlined_call_operand.vmem [shape: f32[2,8,1], index: 7, kind: input, shape index: {}, may-alias: {5,7}]
  %s8 = inlined_call_operand.vmem [shape: f32[8,8], index: 8, kind: input, shape index: {}]
  %s9 = inlined_call_operand.vmem [shape: f32[16,1], index: 9, kind: input, shape index: {}]
  %s10 = inlined_call_operand.vmem [shape: f32[16,1], index: 10, kind: input, shape index: {}]
  %s11 = inlined_call_operand.vmem [shape: f32[16,16], index: 11, kind: input, shape index: {}]
  %s12 = inlined_call_operand.vmem [shape: f32[16,1], index: 12, kind: input, shape index: {}]
  %s13 = inlined_call_operand.vmem [shape: f32[2,16,128], index: 13, kind: output, shape index: {}]
  %s14 = sld [smem:[#allocation0]]
  $region85: #{forward.9} parent=0
    _
  %s16 = ssub.s32 1, %s14
  %s17 = scalar_select 0, %s16, %s14
  loop: start=0, step=1, limit=4
  $region2: #{forward.9} parent=0 // loop_pre_header
    _
  $region3: #{forward.9} parent=0 // loop_header
    %s19 = sphi 0, %s23
    %p20 = scmp.ge.s32.totalorder %s19, 4
    %s29 = sphi 0, %s31
    %s32 = sphi 0, %s29
    %s33 = sphi 0, %s32
    %s49 = sphi 0, %s33
    %s53 = sphi 0, %s53
    %s55 = sphi 0, %s53
    %s56 = sphi 0, %s55
    %s70 = sphi 0, %s56
    %s74 = sphi 0, %s74
    %s76 = sphi 0, %s74
    %s77 = sphi 0, %s76
    %s91 = sphi 0, %s77
    %s95 = sphi 0, %s95
    %s97 = sphi 0, %s95
    %s98 = sphi 0, %s97
    %s112 = sphi 0, %s98
    %s116 = sphi 0, %s116
    %s118 = sphi 0, %s116
    %s119 = sphi 0, %s118
    %s133 = sphi 0, %s119
    %s137 = sphi 0, %s137
    %s139 = sphi 0, %s137
    %s140 = sphi 0, %s139
    %s154 = sphi 0, %s140
    %s158 = sphi 0, %s158
    %s160 = sphi 0, %s158
    %s161 = sphi 0, %s160
    %s175 = sphi 0, %s161
    %s179 = sphi 0, %s179
    %s181 = sphi 0, %s179
    %s182 = sphi 0, %s181
    %s196 = sphi 0, %s182
    %s200 = sphi 0, %s200
    %s202 = sphi 0, %s200
    %s203 = sphi 0, %s202
    %s217 = sphi 0, %s203
    %s221 = sphi 0, %s221
    %s223 = sphi 0, %s221
    %s224 = sphi 0, %s223
    %s238 = sphi 0, %s224
    %s242 = sphi 0, %s242
    %s244 = sphi 0, %s242
    %s245 = sphi 0, %s244
    %s259 = sphi 0, %s245
    %s263 = sphi 0, %s263
    %s265 = sphi 0, %s263
    %s266 = sphi 0, %s265
    %s280 = sphi 0, %s266
    %s284 = sphi 0, %s284
    %s286 = sphi 0, %s284
    %s287 = sphi 0, %s286
    %s301 = sphi 0, %s287
    %s307 = sphi 0, %s309
    %s310 = sphi 0, %s307
    %s311 = sphi 0, %s310
    %s327 = sphi 0, %s311
  $region4: #{forward.9} parent=0 // loop_header_branch
    %22 = sbr.rel (%p20) target = $region8
  $region5: #{forward.9} parent=0 // loop_body
    %s24 = ssub.s32 %s19, 1
    %s25 = ssub.s32 %s19, 2
    %s26 = sadd.s32 %s19, 1
    %s27 = ssub.s32 %s19, %s26
    %p28 = scmp.eq.s32.totalorder %s27, 0
    %s30 = sadd.s32 %s29, 1
    %s31 = scalar_select %p28, %s29, %s30
    %p34 = pneg %p28
    %p35 = scmp.eq.s32.totalorder %s19, 1
    %p36 = por %p34, %p35
    %p37 = scmp.ne.s32.totalorder %s29, %s32
    %p38 = scmp.eq.s32.totalorder %s19, 0
    %p39 = por %p37, %p38
    %p40 = scmp.ne.s32.totalorder %s29, %s32
    %p41 = scmp.eq.s32.totalorder %s24, 1
    %p42 = por %p40, %p41
    %p43 = scmp.ne.s32.totalorder %s32, %s33
    %p44 = scmp.eq.s32.totalorder %s24, 0
    %p45 = por %p43, %p44
    %p46 = scmp.ne.s32.totalorder %s32, %s33
    %p47 = scmp.eq.s32.totalorder %s25, 1
    %p48 = por %p46, %p47
    %p50 = scmp.ne.s32.totalorder %s33, %s49
    %p51 = scmp.eq.s32.totalorder %s25, 0
    %p52 = por %p50, %p51
    %s54 = sadd.s32 %s53, 1
    %p57 = scmp.eq.s32.totalorder %s19, 1
    %p58 = scmp.ne.s32.totalorder %s53, %s55
    %p59 = scmp.eq.s32.totalorder %s19, 0
    %p60 = por %p58, %p59
    %p61 = scmp.ne.s32.totalorder %s53, %s55
    %p62 = scmp.eq.s32.totalorder %s24, 1
    %p63 = por %p61, %p62
    %p64 = scmp.ne.s32.totalorder %s55, %s56
    %p65 = scmp.eq.s32.totalorder %s24, 0
    %p66 = por %p64, %p65
    %p67 = scmp.ne.s32.totalorder %s55, %s56
    %p68 = scmp.eq.s32.totalorder %s25, 1
    %p69 = por %p67, %p68
    %p71 = scmp.ne.s32.totalorder %s56, %s70
    %p72 = scmp.eq.s32.totalorder %s25, 0
    %p73 = por %p71, %p72
    %s75 = sadd.s32 %s74, 1
    %p78 = scmp.eq.s32.totalorder %s19, 1
    %p79 = scmp.ne.s32.totalorder %s74, %s76
    %p80 = scmp.eq.s32.totalorder %s19, 0
    %p81 = por %p79, %p80
    %p82 = scmp.ne.s32.totalorder %s74, %s76
    %p83 = scmp.eq.s32.totalorder %s24, 1
    %p84 = por %p82, %p83
    %p85 = scmp.ne.s32.totalorder %s76, %s77
    %p86 = scmp.eq.s32.totalorder %s24, 0
    %p87 = por %p85, %p86
    %p88 = scmp.ne.s32.totalorder %s76, %s77
    %p89 = scmp.eq.s32.totalorder %s25, 1
    %p90 = por %p88, %p89
    %p92 = scmp.ne.s32.totalorder %s77, %s91
    %p93 = scmp.eq.s32.totalorder %s25, 0
    %p94 = por %p92, %p93
    %s96 = sadd.s32 %s95, 1
    %p99 = scmp.eq.s32.totalorder %s19, 1
    %p100 = scmp.ne.s32.totalorder %s95, %s97
    %p101 = scmp.eq.s32.totalorder %s19, 0
    %p102 = por %p100, %p101
    %p103 = scmp.ne.s32.totalorder %s95, %s97
    %p104 = scmp.eq.s32.totalorder %s24, 1
    %p105 = por %p103, %p104
    %p106 = scmp.ne.s32.totalorder %s97, %s98
    %p107 = scmp.eq.s32.totalorder %s24, 0
    %p108 = por %p106, %p107
    %p109 = scmp.ne.s32.totalorder %s97, %s98
    %p110 = scmp.eq.s32.totalorder %s25, 1
    %p111 = por %p109, %p110
    %p113 = scmp.ne.s32.totalorder %s98, %s112
    %p114 = scmp.eq.s32.totalorder %s25, 0
    %p115 = por %p113, %p114
    %s117 = sadd.s32 %s116, 1
    %p120 = scmp.eq.s32.totalorder %s19, 1
    %p121 = scmp.ne.s32.totalorder %s116, %s118
    %p122 = scmp.eq.s32.totalorder %s19, 0
    %p123 = por %p121, %p122
    %p124 = scmp.ne.s32.totalorder %s116, %s118
    %p125 = scmp.eq.s32.totalorder %s24, 1
    %p126 = por %p124, %p125
    %p127 = scmp.ne.s32.totalorder %s118, %s119
    %p128 = scmp.eq.s32.totalorder %s24, 0
    %p129 = por %p127, %p128
    %p130 = scmp.ne.s32.totalorder %s118, %s119
    %p131 = scmp.eq.s32.totalorder %s25, 1
    %p132 = por %p130, %p131
    %p134 = scmp.ne.s32.totalorder %s119, %s133
    %p135 = scmp.eq.s32.totalorder %s25, 0
    %p136 = por %p134, %p135
    %s138 = sadd.s32 %s137, 1
    %p141 = scmp.eq.s32.totalorder %s19, 1
    %p142 = scmp.ne.s32.totalorder %s137, %s139
    %p143 = scmp.eq.s32.totalorder %s19, 0
    %p144 = por %p142, %p143
    %p145 = scmp.ne.s32.totalorder %s137, %s139
    %p146 = scmp.eq.s32.totalorder %s24, 1
    %p147 = por %p145, %p146
    %p148 = scmp.ne.s32.totalorder %s139, %s140
    %p149 = scmp.eq.s32.totalorder %s24, 0
    %p150 = por %p148, %p149
    %p151 = scmp.ne.s32.totalorder %s139, %s140
    %p152 = scmp.eq.s32.totalorder %s25, 1
    %p153 = por %p151, %p152
    %p155 = scmp.ne.s32.totalorder %s140, %s154
    %p156 = scmp.eq.s32.totalorder %s25, 0
    %p157 = por %p155, %p156
    %s159 = sadd.s32 %s158, 1
    %p162 = scmp.eq.s32.totalorder %s19, 1
    %p163 = scmp.ne.s32.totalorder %s158, %s160
    %p164 = scmp.eq.s32.totalorder %s19, 0
    %p165 = por %p163, %p164
    %p166 = scmp.ne.s32.totalorder %s158, %s160
    %p167 = scmp.eq.s32.totalorder %s24, 1
    %p168 = por %p166, %p167
    %p169 = scmp.ne.s32.totalorder %s160, %s161
    %p170 = scmp.eq.s32.totalorder %s24, 0
    %p171 = por %p169, %p170
    %p172 = scmp.ne.s32.totalorder %s160, %s161
    %p173 = scmp.eq.s32.totalorder %s25, 1
    %p174 = por %p172, %p173
    %p176 = scmp.ne.s32.totalorder %s161, %s175
    %p177 = scmp.eq.s32.totalorder %s25, 0
    %p178 = por %p176, %p177
    %s180 = sadd.s32 %s179, 1
    %p183 = scmp.eq.s32.totalorder %s19, 1
    %p184 = scmp.ne.s32.totalorder %s179, %s181
    %p185 = scmp.eq.s32.totalorder %s19, 0
    %p186 = por %p184, %p185
    %p187 = scmp.ne.s32.totalorder %s179, %s181
    %p188 = scmp.eq.s32.totalorder %s24, 1
    %p189 = por %p187, %p188
    %p190 = scmp.ne.s32.totalorder %s181, %s182
    %p191 = scmp.eq.s32.totalorder %s24, 0
    %p192 = por %p190, %p191
    %p193 = scmp.ne.s32.totalorder %s181, %s182
    %p194 = scmp.eq.s32.totalorder %s25, 1
    %p195 = por %p193, %p194
    %p197 = scmp.ne.s32.totalorder %s182, %s196
    %p198 = scmp.eq.s32.totalorder %s25, 0
    %p199 = por %p197, %p198
    %s201 = sadd.s32 %s200, 1
    %p204 = scmp.eq.s32.totalorder %s19, 1
    %p205 = scmp.ne.s32.totalorder %s200, %s202
    %p206 = scmp.eq.s32.totalorder %s19, 0
    %p207 = por %p205, %p206
    %p208 = scmp.ne.s32.totalorder %s200, %s202
    %p209 = scmp.eq.s32.totalorder %s24, 1
    %p210 = por %p208, %p209
    %p211 = scmp.ne.s32.totalorder %s202, %s203
    %p212 = scmp.eq.s32.totalorder %s24, 0
    %p213 = por %p211, %p212
    %p214 = scmp.ne.s32.totalorder %s202, %s203
    %p215 = scmp.eq.s32.totalorder %s25, 1
    %p216 = por %p214, %p215
    %p218 = scmp.ne.s32.totalorder %s203, %s217
    %p219 = scmp.eq.s32.totalorder %s25, 0
    %p220 = por %p218, %p219
    %s222 = sadd.s32 %s221, 1
    %p225 = scmp.eq.s32.totalorder %s19, 1
    %p226 = scmp.ne.s32.totalorder %s221, %s223
    %p227 = scmp.eq.s32.totalorder %s19, 0
    %p228 = por %p226, %p227
    %p229 = scmp.ne.s32.totalorder %s221, %s223
    %p230 = scmp.eq.s32.totalorder %s24, 1
    %p231 = por %p229, %p230
    %p232 = scmp.ne.s32.totalorder %s223, %s224
    %p233 = scmp.eq.s32.totalorder %s24, 0
    %p234 = por %p232, %p233
    %p235 = scmp.ne.s32.totalorder %s223, %s224
    %p236 = scmp.eq.s32.totalorder %s25, 1
    %p237 = por %p235, %p236
    %p239 = scmp.ne.s32.totalorder %s224, %s238
    %p240 = scmp.eq.s32.totalorder %s25, 0
    %p241 = por %p239, %p240
    %s243 = sadd.s32 %s242, 1
    %p246 = scmp.eq.s32.totalorder %s19, 1
    %p247 = scmp.ne.s32.totalorder %s242, %s244
    %p248 = scmp.eq.s32.totalorder %s19, 0
    %p249 = por %p247, %p248
    %p250 = scmp.ne.s32.totalorder %s242, %s244
    %p251 = scmp.eq.s32.totalorder %s24, 1
    %p252 = por %p250, %p251
    %p253 = scmp.ne.s32.totalorder %s244, %s245
    %p254 = scmp.eq.s32.totalorder %s24, 0
    %p255 = por %p253, %p254
    %p256 = scmp.ne.s32.totalorder %s244, %s245
    %p257 = scmp.eq.s32.totalorder %s25, 1
    %p258 = por %p256, %p257
    %p260 = scmp.ne.s32.totalorder %s245, %s259
    %p261 = scmp.eq.s32.totalorder %s25, 0
    %p262 = por %p260, %p261
    %s264 = sadd.s32 %s263, 1
    %p267 = scmp.eq.s32.totalorder %s19, 1
    %p268 = scmp.ne.s32.totalorder %s263, %s265
    %p269 = scmp.eq.s32.totalorder %s19, 0
    %p270 = por %p268, %p269
    %p271 = scmp.ne.s32.totalorder %s263, %s265
    %p272 = scmp.eq.s32.totalorder %s24, 1
    %p273 = por %p271, %p272
    %p274 = scmp.ne.s32.totalorder %s265, %s266
    %p275 = scmp.eq.s32.totalorder %s24, 0
    %p276 = por %p274, %p275
    %p277 = scmp.ne.s32.totalorder %s265, %s266
    %p278 = scmp.eq.s32.totalorder %s25, 1
    %p279 = por %p277, %p278
    %p281 = scmp.ne.s32.totalorder %s266, %s280
    %p282 = scmp.eq.s32.totalorder %s25, 0
    %p283 = por %p281, %p282
    %s285 = sadd.s32 %s284, 1
    %p288 = scmp.eq.s32.totalorder %s19, 1
    %p289 = scmp.ne.s32.totalorder %s284, %s286
    %p290 = scmp.eq.s32.totalorder %s19, 0
    %p291 = por %p289, %p290
    %p292 = scmp.ne.s32.totalorder %s284, %s286
    %p293 = scmp.eq.s32.totalorder %s24, 1
    %p294 = por %p292, %p293
    %p295 = scmp.ne.s32.totalorder %s286, %s287
    %p296 = scmp.eq.s32.totalorder %s24, 0
    %p297 = por %p295, %p296
    %p298 = scmp.ne.s32.totalorder %s286, %s287
    %p299 = scmp.eq.s32.totalorder %s25, 1
    %p300 = por %p298, %p299
    %p302 = scmp.ne.s32.totalorder %s287, %s301
    %p303 = scmp.eq.s32.totalorder %s25, 0
    %p304 = por %p302, %p303
    %s305 = ssub.s32 %s19, %s26
    %p306 = scmp.eq.s32.totalorder %s305, 0
    %s308 = sadd.s32 %s307, 1
    %s309 = scalar_select %p306, %s307, %s308
    %p312 = pneg %p306
    %p313 = scmp.eq.s32.totalorder %s19, 1
    %p314 = por %p312, %p313
    %p315 = scmp.ne.s32.totalorder %s307, %s310
    %p316 = scmp.eq.s32.totalorder %s19, 0
    %p317 = por %p315, %p316
    %p318 = scmp.ne.s32.totalorder %s307, %s310
    %p319 = scmp.eq.s32.totalorder %s24, 1
    %p320 = por %p318, %p319
    %p321 = scmp.ne.s32.totalorder %s310, %s311
    %p322 = scmp.eq.s32.totalorder %s24, 0
    %p323 = por %p321, %p322
    %p324 = scmp.ne.s32.totalorder %s310, %s311
    %p325 = scmp.eq.s32.totalorder %s25, 1
    %p326 = por %p324, %p325
    %p328 = scmp.ne.s32.totalorder %s311, %s327
    %p329 = scmp.eq.s32.totalorder %s25, 0
    %p330 = por %p328, %p329
    %p331 = scmp.le.s32.totalorder 1, %s19
    %p332 = scmp.lt.s32.totalorder %s19, 3
    %p333 = pnand %p331, %p332
    %p334 = pneg %p333
    // Predicated region
    $region9: #{forward.9} parent=5 // pred_check
      _
    $region10: #{forward.9} parent=5 // pred_check_branch
      %336 = sbr.rel (%p333) target = $region12
    $region11: #{forward.9} parent=5 // pred_region
      %s337 = ssub.s32 %s19, 1
      // Predicated region
      $region13: #{forward.9} parent=11 // pred_check
        %p338 = pneg %p66
      $region14: #{forward.9} parent=11 // pred_check_branch
        %340 = sbr.rel (%p338) target = $region16
      $region15: #{forward.9} parent=11 // pred_region
        _
      $region16: #{forward.9} parent=11 // pred_fallthru
        _
      // Predicated region
      $region17: #{forward.9} parent=11 // pred_check
        %p341 = pneg %p87
      $region18: #{forward.9} parent=11 // pred_check_branch
        %343 = sbr.rel (%p341) target = $region20
      $region19: #{forward.9} parent=11 // pred_region
        _
      $region20: #{forward.9} parent=11 // pred_fallthru
        _
      // Predicated region
      $region21: #{forward.9} parent=11 // pred_check
        %p344 = pneg %p108
      $region22: #{forward.9} parent=11 // pred_check_branch
        %346 = sbr.rel (%p344) target = $region24
      $region23: #{forward.9} parent=11 // pred_region
        _
      $region24: #{forward.9} parent=11 // pred_fallthru
        _
      // Predicated region
      $region25: #{forward.9} parent=11 // pred_check
        %p347 = pneg %p129
      $region26: #{forward.9} parent=11 // pred_check_branch
        %349 = sbr.rel (%p347) target = $region28
      $region27: #{forward.9} parent=11 // pred_region
        _
      $region28: #{forward.9} parent=11 // pred_fallthru
        _
      // Predicated region
      $region29: #{forward.9} parent=11 // pred_check
        %p350 = pneg %p150
      $region30: #{forward.9} parent=11 // pred_check_branch
        %352 = sbr.rel (%p350) target = $region32
      $region31: #{forward.9} parent=11 // pred_region
        _
      $region32: #{forward.9} parent=11 // pred_fallthru
        _
      // Predicated region
      $region33: #{forward.9} parent=11 // pred_check
        %p353 = pneg %p171
      $region34: #{forward.9} parent=11 // pred_check_branch
        %355 = sbr.rel (%p353) target = $region36
      $region35: #{forward.9} parent=11 // pred_region
        _
      $region36: #{forward.9} parent=11 // pred_fallthru
        _
      // Predicated region
      $region37: #{forward.9} parent=11 // pred_check
        %p356 = pneg %p192
      $region38: #{forward.9} parent=11 // pred_check_branch
        %358 = sbr.rel (%p356) target = $region40
      $region39: #{forward.9} parent=11 // pred_region
        _
      $region40: #{forward.9} parent=11 // pred_fallthru
        _
      // Predicated region
      $region41: #{forward.9} parent=11 // pred_check
        %p359 = pneg %p213
      $region42: #{forward.9} parent=11 // pred_check_branch
        %361 = sbr.rel (%p359) target = $region44
      $region43: #{forward.9} parent=11 // pred_region
        _
      $region44: #{forward.9} parent=11 // pred_fallthru
        _
      // Predicated region
      $region45: #{forward.9} parent=11 // pred_check
        %p362 = pneg %p234
      $region46: #{forward.9} parent=11 // pred_check_branch
        %364 = sbr.rel (%p362) target = $region48
      $region47: #{forward.9} parent=11 // pred_region
        _
      $region48: #{forward.9} parent=11 // pred_fallthru
        _
      // Predicated region
      $region49: #{forward.9} parent=11 // pred_check
        %p365 = pneg %p255
      $region50: #{forward.9} parent=11 // pred_check_branch
        %367 = sbr.rel (%p365) target = $region52
      $region51: #{forward.9} parent=11 // pred_region
        _
      $region52: #{forward.9} parent=11 // pred_fallthru
        _
      // Predicated region
      $region53: #{forward.9} parent=11 // pred_check
        %p368 = pneg %p276
      $region54: #{forward.9} parent=11 // pred_check_branch
        %370 = sbr.rel (%p368) target = $region56
      $region55: #{forward.9} parent=11 // pred_region
        _
      $region56: #{forward.9} parent=11 // pred_fallthru
        _
      // Predicated region
      $region57: #{forward.9} parent=11 // pred_check
        %p371 = pneg %p297
      $region58: #{forward.9} parent=11 // pred_check_branch
        %373 = sbr.rel (%p371) target = $region60
      $region59: #{forward.9} parent=11 // pred_region
        _
      $region60: #{forward.9} parent=11 // pred_fallthru
        _
    $region12: #{forward.9} parent=5 // pred_fallthru
      _
    %p374 = scmp.lt.s32.totalorder %s19, 2
    // Predicated region
    $region61: #{forward.9} parent=5 // pred_check
      %p375 = pneg %p374
    $region62: #{forward.9} parent=5 // pred_check_branch
      %377 = sbr.rel (%p375) target = $region64
    $region63: #{forward.9} parent=5 // pred_region
      // Predicated region
      $region65: #{forward.9} parent=63 // pred_check
        %p378 = pneg %p39
      $region66: #{forward.9} parent=63 // pred_check_branch
        %380 = sbr.rel (%p378) target = $region68
      $region67: #{forward.9} parent=63 // pred_region
        %p381 = scmp.lt.s32.totalorder %s19, 1
        %s382 = scalar_select %p381, %s19, 1
        %s383 = smul.addr %s382, 2
        %s384 = smul.addr %s383, 8
        %s385 = scalar_lea.vmem %s0, %s384
      $region68: #{forward.9} parent=63 // pred_fallthru
        _
    $region64: #{forward.9} parent=5 // pred_fallthru
      _
    %p386 = scmp.le.s32.totalorder 1, %s19
    %p387 = scmp.lt.s32.totalorder %s19, 3
    %p388 = pnand %p386, %p387
    %p389 = pneg %p388
    // Predicated region
    $region69: #{forward.9} parent=5 // pred_check
      _
    $region70: #{forward.9} parent=5 // pred_check_branch
      %391 = sbr.rel (%p388) target = $region72
    $region71: #{forward.9} parent=5 // pred_region
      %s392 = ssub.s32 %s19, 1
      %p393 = scmp.lt.s32.totalorder %s24, 1
      %s394 = scalar_select %p393, %s24, 1
      %s395 = smul.addr %s394, 2
      %s396 = smul.addr %s395, 8
      %s397 = scalar_lea.vmem %s0, %s396
      %p398 = pneg %p45
      %p399 = pneg %p42
      %p400 = pneg %p66
      %p401 = pneg %p63
      %p402 = pneg %p87
      %p403 = pneg %p84
      %p404 = pneg %p108
      %p405 = pneg %p105
      %p406 = pneg %p129
      %p407 = pneg %p126
      %p408 = pneg %p150
      %p409 = pneg %p147
      %p410 = pneg %p171
      %p411 = pneg %p168
      %p412 = pneg %p192
      %p413 = pneg %p189
      %p414 = pneg %p213
      %p415 = pneg %p210
      %p416 = pneg %p234
      %p417 = pneg %p231
      %p418 = pneg %p255
      %p419 = pneg %p252
      %p420 = pneg %p276
      %p421 = pneg %p273
      %p422 = pneg %p297
      %p423 = pneg %p294
      %p424 = pneg %p323
      %p425 = pneg %p320
      %p426 = scmp.lt.s32.totalorder %s24, 1
      %s427 = scalar_select %p426, %s24, 1
      %s428 = smul.addr %s427, 2
      %s429 = smul.addr %s428, 8
      %s430 = scalar_lea.vmem %s13, %s429
      %p431 = scmp.lt.s32.totalorder %s24, 1
      %s432 = scalar_select %p431, %s24, 1
      %s433 = smul.addr %s432, 2
      %s434 = smul.addr %s433, 8
      %s435 = scalar_lea.vmem %s0, %s434
      %p436 = scmp.lt.s32.totalorder %s24, 1
      %s437 = scalar_select %p436, %s24, 1
      %s438 = smul.addr %s437, 2
      %s439 = smul.addr %s438, 8
      %s440 = scalar_lea.vmem %s13, %s439
      %v442 = vld [vmem:[%s435] sm:$0xff]
      %v443 = vld [vmem:[%s435 + $0x8] sm:$0xff]
      %v444 = vld [vmem:[%s1] sm:$0xff]
      %v445 = vpack.c.bf16 %v444, %v444
      %v446 = vpack.c.bf16 %v443, %v442
      %v447 = vld [vmem:[%s2] sm:$0xff]
      %449 = vset.pattern.permute.xlu0 0
      %450 = vperm.xlu0 %449, %v447
      %v451 = vpop.permute.xlu0 %450
      %vm453 = vcmask 130048
      %v455 = vsel %vm453, %v445, 0
      %457 = vmatprep.subr.bf16.mxu0 0
      %458 = vmatpush1.bf16.msra.mxu0 %v446
      %459 = vmatprep.subr.bf16.mxu0 0
      %460 = vmatpush1.bf16.msra.mxu0 0
      %461 = vmatprep.subr.bf16.mxu0 0
      %462 = vmatpush1.bf16.msra.mxu0 0
      %463 = vmatprep.subr.bf16.mxu0 0
      %464 = vmatpush1.bf16.msra.mxu0 0
      %465 = vmatprep.subr.bf16.mxu0 0
      %466 = vmatpush1.bf16.msra.mxu0 0
      %467 = vmatprep.subr.bf16.mxu0 0
      %468 = vmatpush1.bf16.msra.mxu0 0
      %469 = vmatprep.subr.bf16.mxu0 0
      %470 = vmatpush1.bf16.msra.mxu0 0
      %471 = vmatprep.subr.bf16.mxu0 0
      %472 = vmatpush1.bf16.msra.mxu0 0
      %473 = vmatprep.subr.bf16.mxu0 0
      %474 = vmatpush1.bf16.msra.mxu0 0
      %475 = vmatprep.subr.bf16.mxu0 0
      %476 = vmatpush1.bf16.msra.mxu0 0
      %477 = vmatprep.subr.bf16.mxu0 0
      %478 = vmatpush1.bf16.msra.mxu0 0
      %479 = vmatprep.subr.bf16.mxu0 0
      %480 = vmatpush1.bf16.msra.mxu0 0
      %481 = vmatprep.subr.bf16.mxu0 0
      %482 = vmatpush1.bf16.msra.mxu0 0
      %483 = vmatprep.subr.bf16.mxu0 0
      %484 = vmatpush1.bf16.msra.mxu0 0
      %485 = vmatprep.subr.bf16.mxu0 0
      %486 = vmatpush1.bf16.msra.mxu0 0
      %487 = vmatprep.subr.bf16.mxu0 0
      %488 = vmatpush1.bf16.msra.mxu0 0
      %489 = vmatprep.mubr.bf16.mxu0 0
      %490 = vmatmul.mubr.bf16.gmra.mrb[0].mxu0 %v455
      %v491 = vpop.f32.mrb[0].mxu0
      %v492 = vadd.f32 %v451, %v491
      %v493 = vpop.f32.mrb[0].mxu0
      %v494 = vpop.f32.mrb[0].mxu0
      %v495 = vpop.f32.mrb[0].mxu0
      %496 = vdwg.mxu0
      %vm497 = vcmp.ge.f32.partialorder %v492, 0.0
      %v498 = vmul.f32 %v492, 0.1
      %v499 = vsel %vm497, %v492, %v498
      %v500 = vld [vmem:[%s3] sm:$0xff]
      %v501 = vpack.c.bf16 %v500, %v500
      %v503 = vsel %vm453, %v501, 0
      %505 = vmatprep.subr.bf16.mxu0 0
      %506 = vmatpush1.bf16.msra.mxu0 %v446
      %507 = vmatprep.subr.bf16.mxu0 0
      %508 = vmatpush1.bf16.msra.mxu0 0
      %509 = vmatprep.subr.bf16.mxu0 0
      %510 = vmatpush1.bf16.msra.mxu0 0
      %511 = vmatprep.subr.bf16.mxu0 0
      %512 = vmatpush1.bf16.msra.mxu0 0
      %513 = vmatprep.subr.bf16.mxu0 0
      %514 = vmatpush1.bf16.msra.mxu0 0
      %515 = vmatprep.subr.bf16.mxu0 0
      %516 = vmatpush1.bf16.msra.mxu0 0
      %517 = vmatprep.subr.bf16.mxu0 0
      %518 = vmatpush1.bf16.msra.mxu0 0
      %519 = vmatprep.subr.bf16.mxu0 0
      %520 = vmatpush1.bf16.msra.mxu0 0
      %521 = vmatprep.subr.bf16.mxu0 0
      %522 = vmatpush1.bf16.msra.mxu0 0
      %523 = vmatprep.subr.bf16.mxu0 0
      %524 = vmatpush1.bf16.msra.mxu0 0
      %525 = vmatprep.subr.bf16.mxu0 0
      %526 = vmatpush1.bf16.msra.mxu0 0
      %527 = vmatprep.subr.bf16.mxu0 0
      %528 = vmatpush1.bf16.msra.mxu0 0
      %529 = vmatprep.subr.bf16.mxu0 0
      %530 = vmatpush1.bf16.msra.mxu0 0
      %531 = vmatprep.subr.bf16.mxu0 0
      %532 = vmatpush1.bf16.msra.mxu0 0
      %533 = vmatprep.subr.bf16.mxu0 0
      %534 = vmatpush1.bf16.msra.mxu0 0
      %535 = vmatprep.subr.bf16.mxu0 0
      %536 = vmatpush1.bf16.msra.mxu0 0
      %537 = vmatprep.mubr.bf16.mxu0 0
      %538 = vmatmul.mubr.bf16.gmra.mrb[0].mxu0 %v503
      %v539 = vpop.f32.mrb[0].mxu0
      %v540 = vadd.f32 0.0, %v539
      %v541 = vpop.f32.mrb[0].mxu0
      %v542 = vpop.f32.mrb[0].mxu0
      %v543 = vpop.f32.mrb[0].mxu0
      %544 = vdwg.mxu0
      %v545 = vld [vmem:[%s4] sm:$0xff]
      %v546 = vpack.c.bf16 %v545, %v545
      %v547 = vpack.c.bf16 %v499, %v499
      %v548 = vld [vmem:[%s5] sm:$0xff]
      %550 = vset.pattern.permute.xlu0 0
      %551 = vperm.xlu0 %550, %v548
      %v552 = vpop.permute.xlu0 %551
      %vm554 = vcmask 64512
      %v556 = vsel %vm554, %v546, 0
      %vm558 = vcmask 1043456
      %v560 = vsel %vm558, %v547, 0
      %562 = vmatprep.subr.bf16.mxu0 0
      %563 = vmatpush1.bf16.msra.mxu0 %v560
      %564 = vmatprep.subr.bf16.mxu0 0
      %565 = vmatpush1.bf16.msra.mxu0 0
      %566 = vmatprep.subr.bf16.mxu0 0
      %567 = vmatpush1.bf16.msra.mxu0 0
      %568 = vmatprep.subr.bf16.mxu0 0
      %569 = vmatpush1.bf16.msra.mxu0 0
      %570 = vmatprep.subr.bf16.mxu0 0
      %571 = vmatpush1.bf16.msra.mxu0 0
      %572 = vmatprep.subr.bf16.mxu0 0
      %573 = vmatpush1.bf16.msra.mxu0 0
      %574 = vmatprep.subr.bf16.mxu0 0
      %575 = vmatpush1.bf16.msra.mxu0 0
      %576 = vmatprep.subr.bf16.mxu0 0
      %577 = vmatpush1.bf16.msra.mxu0 0
      %578 = vmatprep.subr.bf16.mxu0 0
      %579 = vmatpush1.bf16.msra.mxu0 0
      %580 = vmatprep.subr.bf16.mxu0 0
      %581 = vmatpush1.bf16.msra.mxu0 0
      %582 = vmatprep.subr.bf16.mxu0 0
      %583 = vmatpush1.bf16.msra.mxu0 0
      %584 = vmatprep.subr.bf16.mxu0 0
      %585 = vmatpush1.bf16.msra.mxu0 0
      %586 = vmatprep.subr.bf16.mxu0 0
      %587 = vmatpush1.bf16.msra.mxu0 0
      %588 = vmatprep.subr.bf16.mxu0 0
      %589 = vmatpush1.bf16.msra.mxu0 0
      %590 = vmatprep.subr.bf16.mxu0 0
      %591 = vmatpush1.bf16.msra.mxu0 0
      %592 = vmatprep.subr.bf16.mxu0 0
      %593 = vmatpush1.bf16.msra.mxu0 0
      %594 = vmatprep.mubr.bf16.mxu0 0
      %595 = vmatmul.mubr.bf16.gmra.mrb[0].mxu0 %v556
      %v596 = vpop.f32.mrb[0].mxu0
      %v597 = vadd.f32 %v552, %v596
      %v598 = vpop.f32.mrb[0].mxu0
      %v599 = vpop.f32.mrb[0].mxu0
      %v600 = vpop.f32.mrb[0].mxu0
      %601 = vdwg.mxu0
      %vm602 = vcmp.ge.f32.partialorder %v597, 0.0
      %v603 = vmul.f32 %v597, 0.1
      %v604 = vsel %vm602, %v597, %v603
      %605 = vrot.lane.b32.xlu0 %v604, 1
      %v606 = vpop.permute.xlu0 %605
      %v607 = vlaneseq
      %v608 = vand.u32 %v607, 127
      %vm609 = vcmp.ge.s32.totalorder %v608, 1
      %v610 = vsel %vm609, %v606, 0.0
      %611 = vrot.lane.b32.xlu0 %v604, 127
      %v612 = vpop.permute.xlu0 %611
      %vm613 = vcmp.lt.s32.totalorder %v608, 127
      %v614 = vsel %vm613, %v612, 0.0
      %v615 = vld [vmem:[%s6] sm:$0xff]
      %v616 = vpack.c.bf16 %v615, %v615
      %v617 = vpack.c.bf16 %v604, %v610
      %v618 = vpack.c.bf16 %v614, %v614
      %v619 = vld [vmem:[%s7] sm:$0xff]
      %621 = vset.pattern.permute.xlu0 0
      %622 = vperm.xlu0 %621, %v619
      %v623 = vpop.permute.xlu0 %622
      %vm625 = vcmask 195584
      %v627 = vsel %vm625, %v616, 0
      %v630 = vsel %vm558, %v618, 0
      %632 = vmatprep.subr.bf16.mxu0 0
      %633 = vmatpush1.bf16.msra.mxu0 %v617
      %634 = vmatprep.subr.bf16.mxu0 0
      %635 = vmatpush1.bf16.msra.mxu0 %v630
      %636 = vmatprep.subr.bf16.mxu0 0
      %637 = vmatpush1.bf16.msra.mxu0 0
      %638 = vmatprep.subr.bf16.mxu0 0
      %639 = vmatpush1.bf16.msra.mxu0 0
      %640 = vmatprep.subr.bf16.mxu0 0
      %641 = vmatpush1.bf16.msra.mxu0 0
      %642 = vmatprep.subr.bf16.mxu0 0
      %643 = vmatpush1.bf16.msra.mxu0 0
      %644 = vmatprep.subr.bf16.mxu0 0
      %645 = vmatpush1.bf16.msra.mxu0 0
      %646 = vmatprep.subr.bf16.mxu0 0
      %647 = vmatpush1.bf16.msra.mxu0 0
      %648 = vmatprep.subr.bf16.mxu0 0
      %649 = vmatpush1.bf16.msra.mxu0 0
      %650 = vmatprep.subr.bf16.mxu0 0
      %651 = vmatpush1.bf16.msra.mxu0 0
      %652 = vmatprep.subr.bf16.mxu0 0
      %653 = vmatpush1.bf16.msra.mxu0 0
      %654 = vmatprep.subr.bf16.mxu0 0
      %655 = vmatpush1.bf16.msra.mxu0 0
      %656 = vmatprep.subr.bf16.mxu0 0
      %657 = vmatpush1.bf16.msra.mxu0 0
      %658 = vmatprep.subr.bf16.mxu0 0
      %659 = vmatpush1.bf16.msra.mxu0 0
      %660 = vmatprep.subr.bf16.mxu0 0
      %661 = vmatpush1.bf16.msra.mxu0 0
      %662 = vmatprep.subr.bf16.mxu0 0
      %663 = vmatpush1.bf16.msra.mxu0 0
      %664 = vmatprep.mubr.bf16.mxu0 0
      %665 = vmatmul.mubr.bf16.gmra.mrb[0].mxu0 %v627
      %v666 = vpop.f32.mrb[0].mxu0
      %v667 = vadd.f32 %v623, %v666
      %v668 = vpop.f32.mrb[0].mxu0
      %v669 = vpop.f32.mrb[0].mxu0
      %v670 = vpop.f32.mrb[0].mxu0
      %671 = vdwg.mxu0
      %vm672 = vcmp.ge.f32.partialorder %v667, 0.0
      %v673 = vmul.f32 %v667, 0.1
      %v674 = vsel %vm672, %v667, %v673
      %v675 = vadd.f32 %v499, %v674
      %s676 = scalar_lea.vmem %s4, 8
      %v677 = vld [vmem:[%s676] sm:$0xff]
      %v678 = vpack.c.bf16 %v677, %v677
      %v679 = vpack.c.bf16 %v675, %v675
      %s680 = scalar_lea.vmem %s5, 8
      %v681 = vld [vmem:[%s680] sm:$0xff]
      %683 = vset.pattern.permute.xlu0 0
      %684 = vperm.xlu0 %683, %v681
      %v685 = vpop.permute.xlu0 %684
      %v688 = vsel %vm554, %v678, 0
      %v691 = vsel %vm558, %v679, 0
      %693 = vmatprep.subr.bf16.mxu0 0
      %694 = vmatpush1.bf16.msra.mxu0 %v691
      %695 = vmatprep.subr.bf16.mxu0 0
      %696 = vmatpush1.bf16.msra.mxu0 0
      %697 = vmatprep.subr.bf16.mxu0 0
      %698 = vmatpush1.bf16.msra.mxu0 0
      %699 = vmatprep.subr.bf16.mxu0 0
      %700 = vmatpush1.bf16.msra.mxu0 0
      %701 = vmatprep.subr.bf16.mxu0 0
      %702 = vmatpush1.bf16.msra.mxu0 0
      %703 = vmatprep.subr.bf16.mxu0 0
      %704 = vmatpush1.bf16.msra.mxu0 0
      %705 = vmatprep.subr.bf16.mxu0 0
      %706 = vmatpush1.bf16.msra.mxu0 0
      %707 = vmatprep.subr.bf16.mxu0 0
      %708 = vmatpush1.bf16.msra.mxu0 0
      %709 = vmatprep.subr.bf16.mxu0 0
      %710 = vmatpush1.bf16.msra.mxu0 0
      %711 = vmatprep.subr.bf16.mxu0 0
      %712 = vmatpush1.bf16.msra.mxu0 0
      %713 = vmatprep.subr.bf16.mxu0 0
      %714 = vmatpush1.bf16.msra.mxu0 0
      %715 = vmatprep.subr.bf16.mxu0 0
      %716 = vmatpush1.bf16.msra.mxu0 0
      %717 = vmatprep.subr.bf16.mxu0 0
      %718 = vmatpush1.bf16.msra.mxu0 0
      %719 = vmatprep.subr.bf16.mxu0 0
      %720 = vmatpush1.bf16.msra.mxu0 0
      %721 = vmatprep.subr.bf16.mxu0 0
      %722 = vmatpush1.bf16.msra.mxu0 0
      %723 = vmatprep.subr.bf16.mxu0 0
      %724 = vmatpush1.bf16.msra.mxu0 0
      %725 = vmatprep.mubr.bf16.mxu0 0
      %726 = vmatmul.mubr.bf16.gmra.mrb[0].mxu0 %v688
      %v727 = vpop.f32.mrb[0].mxu0
      %v728 = vadd.f32 %v685, %v727
      %v729 = vpop.f32.mrb[0].mxu0
      %v730 = vpop.f32.mrb[0].mxu0
      %v731 = vpop.f32.mrb[0].mxu0
      %732 = vdwg.mxu0
      %vm733 = vcmp.ge.f32.partialorder %v728, 0.0
      %v734 = vmul.f32 %v728, 0.1
      %v735 = vsel %vm733, %v728, %v734
      %736 = vrot.lane.b32.xlu0 %v735, 1
      %v737 = vpop.permute.xlu0 %736
      %v738 = vsel %vm609, %v737, 0.0
      %739 = vrot.lane.b32.xlu0 %v735, 127
      %v740 = vpop.permute.xlu0 %739
      %v741 = vsel %vm613, %v740, 0.0
      %s742 = scalar_lea.vmem %s6, 8
      %v743 = vld [vmem:[%s742] sm:$0xff]
      %v744 = vpack.c.bf16 %v743, %v743
      %v745 = vpack.c.bf16 %v735, %v738
      %v746 = vpack.c.bf16 %v741, %v741
      %s747 = scalar_lea.vmem %s7, 8
      %v748 = vld [vmem:[%s747] sm:$0xff]
      %750 = vset.pattern.permute.xlu0 0
      %751 = vperm.xlu0 %750, %v748
      %v752 = vpop.permute.xlu0 %751
      %v755 = vsel %vm625, %v744, 0
      %v758 = vsel %vm558, %v746, 0
      %760 = vmatprep.subr.bf16.mxu0 0
      %761 = vmatpush1.bf16.msra.mxu0 %v745
      %762 = vmatprep.subr.bf16.mxu0 0
      %763 = vmatpush1.bf16.msra.mxu0 %v758
      %764 = vmatprep.subr.bf16.mxu0 0
      %765 = vmatpush1.bf16.msra.mxu0 0
      %766 = vmatprep.subr.bf16.mxu0 0
      %767 = vmatpush1.bf16.msra.mxu0 0
      %768 = vmatprep.subr.bf16.mxu0 0
      %769 = vmatpush1.bf16.msra.mxu0 0
      %770 = vmatprep.subr.bf16.mxu0 0
      %771 = vmatpush1.bf16.msra.mxu0 0
      %772 = vmatprep.subr.bf16.mxu0 0
      %773 = vmatpush1.bf16.msra.mxu0 0
      %774 = vmatprep.subr.bf16.mxu0 0
      %775 = vmatpush1.bf16.msra.mxu0 0
      %776 = vmatprep.subr.bf16.mxu0 0
      %777 = vmatpush1.bf16.msra.mxu0 0
      %778 = vmatprep.subr.bf16.mxu0 0
      %779 = vmatpush1.bf16.msra.mxu0 0
      %780 = vmatprep.subr.bf16.mxu0 0
      %781 = vmatpush1.bf16.msra.mxu0 0
      %782 = vmatprep.subr.bf16.mxu0 0
      %783 = vmatpush1.bf16.msra.mxu0 0
      %784 = vmatprep.subr.bf16.mxu0 0
      %785 = vmatpush1.bf16.msra.mxu0 0
      %786 = vmatprep.subr.bf16.mxu0 0
      %787 = vmatpush1.bf16.msra.mxu0 0
      %788 = vmatprep.subr.bf16.mxu0 0
      %789 = vmatpush1.bf16.msra.mxu0 0
      %790 = vmatprep.subr.bf16.mxu0 0
      %791 = vmatpush1.bf16.msra.mxu0 0
      %792 = vmatprep.mubr.bf16.mxu0 0
      %793 = vmatmul.mubr.bf16.gmra.mrb[0].mxu0 %v755
      %v794 = vpop.f32.mrb[0].mxu0
      %v795 = vadd.f32 %v752, %v794
      %v796 = vpop.f32.mrb[0].mxu0
      %v797 = vpop.f32.mrb[0].mxu0
      %v798 = vpop.f32.mrb[0].mxu0
      %799 = vdwg.mxu0
      %vm800 = vcmp.ge.f32.partialorder %v795, 0.0
      %v801 = vmul.f32 %v795, 0.1
      %v802 = vsel %vm800, %v795, %v801
      %v803 = vadd.f32 %v675, %v802
      %v804 = vld [vmem:[%s8] sm:$0xff]
      %v805 = vpack.c.bf16 %v804, %v804
      %v806 = vpack.c.bf16 %v803, %v803
      %v808 = vsel %vm554, %v805, 0
      %v811 = vsel %vm558, %v806, 0
      %813 = vmatprep.subr.bf16.mxu0 0
      %814 = vmatpush1.bf16.msra.mxu0 %v811
      %815 = vmatprep.subr.bf16.mxu0 0
      %816 = vmatpush1.bf16.msra.mxu0 0
      %817 = vmatprep.subr.bf16.mxu0 0
      %818 = vmatpush1.bf16.msra.mxu0 0
      %819 = vmatprep.subr.bf16.mxu0 0
      %820 = vmatpush1.bf16.msra.mxu0 0
      %821 = vmatprep.subr.bf16.mxu0 0
      %822 = vmatpush1.bf16.msra.mxu0 0
      %823 = vmatprep.subr.bf16.mxu0 0
      %824 = vmatpush1.bf16.msra.mxu0 0
      %825 = vmatprep.subr.bf16.mxu0 0
      %826 = vmatpush1.bf16.msra.mxu0 0
      %827 = vmatprep.subr.bf16.mxu0 0
      %828 = vmatpush1.bf16.msra.mxu0 0
      %829 = vmatprep.subr.bf16.mxu0 0
      %830 = vmatpush1.bf16.msra.mxu0 0
      %831 = vmatprep.subr.bf16.mxu0 0
      %832 = vmatpush1.bf16.msra.mxu0 0
      %833 = vmatprep.subr.bf16.mxu0 0
      %834 = vmatpush1.bf16.msra.mxu0 0
      %835 = vmatprep.subr.bf16.mxu0 0
      %836 = vmatpush1.bf16.msra.mxu0 0
      %837 = vmatprep.subr.bf16.mxu0 0
      %838 = vmatpush1.bf16.msra.mxu0 0
      %839 = vmatprep.subr.bf16.mxu0 0
      %840 = vmatpush1.bf16.msra.mxu0 0
      %841 = vmatprep.subr.bf16.mxu0 0
      %842 = vmatpush1.bf16.msra.mxu0 0
      %843 = vmatprep.subr.bf16.mxu0 0
      %844 = vmatpush1.bf16.msra.mxu0 0
      %845 = vmatprep.mubr.bf16.mxu0 0
      %846 = vmatmul.mubr.bf16.gmra.mrb[0].mxu0 %v808
      %v847 = vpop.f32.mrb[0].mxu0
      %v848 = vadd.f32 0.0, %v847
      %v849 = vpop.f32.mrb[0].mxu0
      %v850 = vpop.f32.mrb[0].mxu0
      %v851 = vpop.f32.mrb[0].mxu0
      %852 = vdwg.mxu0
      %v853 = vld [vmem:[%s9] sm:$0xff]
      %v854 = vld [vmem:[%s9 + $0x8] sm:$0xff]
      %856 = vset.pattern.permute.xlu0 0
      %857 = vperm.xlu0 %856, %v853
      %v858 = vpop.permute.xlu0 %857
      %861 = vset.pattern.permute.xlu0 0
      %862 = vperm.xlu0 %861, %v854
      %v863 = vpop.permute.xlu0 %862
      %v865 = vmul.f32 %v848, %v858
      %v866 = vmul.f32 %v540, %v863
      %v867 = vld [vmem:[%s10] sm:$0xff]
      %v868 = vld [vmem:[%s10 + $0x8] sm:$0xff]
      %870 = vset.pattern.permute.xlu0 0
      %871 = vperm.xlu0 %870, %v867
      %v872 = vpop.permute.xlu0 %871
      %875 = vset.pattern.permute.xlu0 0
      %876 = vperm.xlu0 %875, %v868
      %v877 = vpop.permute.xlu0 %876
      %v879 = vadd.f32 %v865, %v872
      %v880 = vadd.f32 %v866, %v877
      %vm881 = vcmp.ge.f32.partialorder %v879, 0.0
      %vm882 = vcmp.ge.f32.partialorder %v880, 0.0
      %v883 = vmul.f32 %v879, 0.1
      %v884 = vmul.f32 %v880, 0.1
      %v885 = vsel %vm881, %v879, %v883
      %v886 = vsel %vm882, %v880, %v884
      %v887 = vld [vmem:[%s11] sm:$0xff]
      %v888 = vld [vmem:[%s11 + $0x8] sm:$0xff]
      %v889 = vpack.c.bf16 %v888, %v887
      %v890 = vpack.c.bf16 %v886, %v885
      %v891 = vld [vmem:[%s12] sm:$0xff]
      %v892 = vld [vmem:[%s12 + $0x8] sm:$0xff]
      %894 = vset.pattern.permute.xlu0 0
      %895 = vperm.xlu0 %894, %v891
      %v896 = vpop.permute.xlu0 %895
      %899 = vset.pattern.permute.xlu0 0
      %900 = vperm.xlu0 %899, %v892
      %v901 = vpop.permute.xlu0 %900
      %v904 = vsel %vm453, %v889, 0
      %906 = vmatprep.subr.bf16.mxu0 0
      %907 = vmatpush1.bf16.msra.mxu0 %v890
      %908 = vmatprep.subr.bf16.mxu0 0
      %909 = vmatpush1.bf16.msra.mxu0 0
      %910 = vmatprep.subr.bf16.mxu0 0
      %911 = vmatpush1.bf16.msra.mxu0 0
      %912 = vmatprep.subr.bf16.mxu0 0
      %913 = vmatpush1.bf16.msra.mxu0 0
      %914 = vmatprep.subr.bf16.mxu0 0
      %915 = vmatpush1.bf16.msra.mxu0 0
      %916 = vmatprep.subr.bf16.mxu0 0
      %917 = vmatpush1.bf16.msra.mxu0 0
      %918 = vmatprep.subr.bf16.mxu0 0
      %919 = vmatpush1.bf16.msra.mxu0 0
      %920 = vmatprep.subr.bf16.mxu0 0
      %921 = vmatpush1.bf16.msra.mxu0 0
      %922 = vmatprep.subr.bf16.mxu0 0
      %923 = vmatpush1.bf16.msra.mxu0 0
      %924 = vmatprep.subr.bf16.mxu0 0
      %925 = vmatpush1.bf16.msra.mxu0 0
      %926 = vmatprep.subr.bf16.mxu0 0
      %927 = vmatpush1.bf16.msra.mxu0 0
      %928 = vmatprep.subr.bf16.mxu0 0
      %929 = vmatpush1.bf16.msra.mxu0 0
      %930 = vmatprep.subr.bf16.mxu0 0
      %931 = vmatpush1.bf16.msra.mxu0 0
      %932 = vmatprep.subr.bf16.mxu0 0
      %933 = vmatpush1.bf16.msra.mxu0 0
      %934 = vmatprep.subr.bf16.mxu0 0
      %935 = vmatpush1.bf16.msra.mxu0 0
      %936 = vmatprep.subr.bf16.mxu0 0
      %937 = vmatpush1.bf16.msra.mxu0 0
      %938 = vmatprep.mubr.bf16.mxu0 0
      %939 = vmatmul.mubr.bf16.gmra.mrb[0].mxu0 %v904
      %v940 = vpop.f32.mrb[0].mxu0
      %v941 = vadd.f32 %v896, %v940
      %v942 = vpop.f32.mrb[0].mxu0
      %v943 = vpop.f32.mrb[0].mxu0
      %v944 = vadd.f32 %v901, %v943
      %v945 = vpop.f32.mrb[0].mxu0
      %946 = vdwg.mxu0
      %vm947 = vcmp.ge.f32.partialorder %v941, 0.0
      %vm948 = vcmp.ge.f32.partialorder %v944, 0.0
      %v949 = vmul.f32 %v941, 0.1
      %v950 = vmul.f32 %v944, 0.1
      %v951 = vsel %vm947, %v941, %v949
      %v952 = vsel %vm948, %v944, %v950
      %953 = vst [vmem:[%s440] sm:$0xff] %v951
      %954 = vst [vmem:[%s440 + $0x8] sm:$0xff] %v952
      %p955 = scmp.lt.s32.totalorder %s24, 1
      %s956 = scalar_select %p955, %s24, 1
      %s957 = smul.addr %s956, 2
      %s958 = smul.addr %s957, 8
      %s959 = scalar_lea.vmem %s13, %s958
      // Predicated region
      $region73: #{forward.9} parent=71 // pred_check
        %p960 = pneg %p320
      $region74: #{forward.9} parent=71 // pred_check_branch
        %962 = sbr.rel (%p960) target = $region76
      $region75: #{forward.9} parent=71 // pred_region
        _
      $region76: #{forward.9} parent=71 // pred_fallthru
        _
    $region72: #{forward.9} parent=5 // pred_fallthru
      _
    %p963 = scmp.le.s32.totalorder 2, %s19
    // Predicated region
    $region77: #{forward.9} parent=5 // pred_check
      %p964 = pneg %p963
    $region78: #{forward.9} parent=5 // pred_check_branch
      %966 = sbr.rel (%p964) target = $region80
    $region79: #{forward.9} parent=5 // pred_region
      %s967 = ssub.s32 %s19, 2
      // Predicated region
      $region81: #{forward.9} parent=79 // pred_check
        %p968 = pneg %p326
      $region82: #{forward.9} parent=79 // pred_check_branch
        %970 = sbr.rel (%p968) target = $region84
      $region83: #{forward.9} parent=79 // pred_region
        %p971 = scmp.lt.s32.totalorder %s25, 1
        %s972 = scalar_select %p971, %s25, 1
        %s973 = smul.addr %s972, 2
        %s974 = smul.addr %s973, 8
        %s975 = scalar_lea.vmem %s13, %s974
      $region84: #{forward.9} parent=79 // pred_fallthru
        _
    $region80: #{forward.9} parent=5 // pred_fallthru
      _
  $region6: #{forward.9} parent=0 // loop_footer
    %s23 = sadd.s32 1, %s19
  $region7: #{forward.9} parent=0 // loop_footer_branch
    %18 = sbr.rel target = $region3
  $region8: #{forward.9} parent=0 // loop_exit
    _

</llo_original>
